<compile_context>
chip_gen: v7x
topology: tpu7x:2x2x1
jax: 0.10.0
libtpu: 0.0.40
codegen_flags: <defaults>
</compile_context>

<pallas_src>
import jax
import jax.numpy as jnp
from jax.experimental import pallas as pl
from jax.experimental.pallas import tpu as pltpu


# ----------------------------- fused kernel --------------------------------

def _shift_rows_up(x, k):
    """Rows i <- rows i+k (zero fill at the bottom); k is a small static int.

    Only 'junk' rows (per-sample rows never read for real outputs) are
    affected by the zero fill, so this is exact for the rows we use.
    """
    if k == 0:
        return x
    pad = jnp.zeros((k, x.shape[1]), x.dtype)
    return jnp.concatenate([x[k:, :], pad], axis=0)


def _lenet_kernel(img_ref, w1_ref, b1_ref, w2_ref, b2_ref, w3_ref, b3_ref,
                  w4_ref, b4_ref, w5_ref, b5_ref, o_ref):
    f32, bf16 = jnp.float32, jnp.bfloat16
    rows = img_ref.shape[0]            # tb * 32 image rows in this block
    tb = rows // 32

    img = img_ref[...]                 # (tb*32, 128) bf16; lanes 0..27 = cols

    # ---- conv1: ONE K=640 matmul.  The 5 kernel row-offsets ti are stacked
    #      on lanes at 128*ti; W1 is banded and emits, per image row r,
    #      conv1(r, even cols) in lanes [0,128) and conv1(r, odd cols) in
    #      lanes [128,256), both with lane layout 8*x + channel (x = col/2).
    lhs1 = jnp.concatenate([_shift_rows_up(img, ti) for ti in range(5)],
                           axis=-1)                              # (tb*32, 640)
    out1 = jnp.dot(lhs1, w1_ref[...], preferred_element_type=f32)  # (tb*32,256)

    # 2x2 max-pool #1: columns via even/odd block max, rows via shift-by-1.
    cmax = jnp.maximum(out1[:, :128], out1[:, 128:])
    rmax = jnp.maximum(cmax, _shift_rows_up(cmax, 1))
    # bias + ReLU once, after pooling (exact).  Row 32*n + 2*y now holds
    # pool1[n, y, x, c] at lane 8*x + c; cast to bf16 once.
    p1 = jnp.maximum(rmax + b1_ref[...], 0.0).astype(bf16)       # (tb*32, 128)

    # ---- conv2: ONE K=640 matmul.  Kernel row-offsets di stacked on lanes
    #      at 128*di (p1 rows advance by 2*di since pool1 lives on the even
    #      image rows); W2 emits even-x2 / odd-x2 blocks, lane = 16*X + cout.
    lhs2 = jnp.concatenate([_shift_rows_up(p1, 2 * di) for di in range(5)],
                           axis=-1)                              # (tb*32, 640)
    out2 = jnp.dot(lhs2, w2_ref[...], preferred_element_type=f32)  # (tb*32,256)

    # 2x2 max-pool #2: columns via even/odd block max, rows via shift-by-2.
    cmax2 = jnp.maximum(out2[:, :128], out2[:, 128:])
    rmax2 = jnp.maximum(cmax2, _shift_rows_up(cmax2, 2))
    # Row 32*n + 4*Y holds pool2[n, Y, X, cout] at lane 16*X + cout.
    p2 = jnp.maximum(rmax2 + b2_ref[...], 0.0).astype(bf16)      # (tb*32, 128)

    # ---- fc1: gather the 4 pooled rows per sample onto vreg-aligned 128-lane
    #      slots and do ONE K=512 matmul; W3 bakes in PyTorch's channel-major
    #      view(-1, 256) ordering.
    p2v = p2.reshape(tb, 32, 128)
    lhs3 = jnp.concatenate([p2v[:, 4 * y, :] for y in range(4)], axis=-1)
    h1 = jnp.maximum(jnp.dot(lhs3, w3_ref[...], preferred_element_type=f32)
                     + b3_ref[...], 0.0)                         # (tb,128) 120 real

    # ---- fc2 + ReLU, fc3 ----
    h2 = jnp.maximum(jnp.dot(h1.astype(bf16), w4_ref[...],
                             preferred_element_type=f32) + b4_ref[...], 0.0)
    logits = (jnp.dot(h2.astype(bf16), w5_ref[...], preferred_element_type=f32)
              + b5_ref[...])                                     # (tb,128) 10 real

    # ---- log_softmax over the 10 real classes (padded lanes masked) ----
    lane = jax.lax.broadcasted_iota(jnp.int32, (tb, 128), 1)
    valid = lane < 10
    m = jnp.max(jnp.where(valid, logits, -1e30), axis=1, keepdims=True)
    e = jnp.where(valid, jnp.exp(logits - m), 0.0)
    lse = jnp.log(jnp.sum(e, axis=1, keepdims=True))
    o_ref[...] = logits - m - lse


# ----------------------------- weight prep (once) ---------------------------

def prepare_weights(params):
    """Build lane-packed, zero-padded bf16 matmul weights ONCE (host side)."""
    f32, bf16 = jnp.float32, jnp.bfloat16

    # conv1 -> W1 (640, 256): row 128*ti + s (image col s); even-output block
    # at lane 8*x + c (col 2x), odd block at lane 128 + 8*x + c (col 2x+1).
    w1 = params["conv1_w"].reshape(6, 5, 5)                     # (c, ti, tj)
    ti, xx, cc, tj = jnp.meshgrid(jnp.arange(5), jnp.arange(12),
                                  jnp.arange(6), jnp.arange(5), indexing="ij")
    v1 = w1[cc, ti, tj].ravel()
    W1 = jnp.zeros((640, 256), f32)
    W1 = W1.at[(128 * ti + 2 * xx + tj).ravel(), (8 * xx + cc).ravel()].set(v1)
    W1 = W1.at[(128 * ti + 2 * xx + 1 + tj).ravel(),
               (128 + 8 * xx + cc).ravel()].set(v1)
    xg, cg = jnp.meshgrid(jnp.arange(12), jnp.arange(6), indexing="ij")
    b1 = jnp.zeros((1, 128), f32).at[0, (8 * xg + cg).ravel()].set(
        params["conv1_b"][cg.ravel()])

    # conv2 -> W2 (640, 256): row 128*di + 8*x + c (p1 lane layout); even-x2
    # block at lane 16*X + cout, odd block at 128 + 16*X + cout.
    w2 = params["conv2_w"]                                      # (cout,c,di,dj)
    di, XX, dj, c2, co = jnp.meshgrid(jnp.arange(5), jnp.arange(4),
                                      jnp.arange(5), jnp.arange(6),
                                      jnp.arange(16), indexing="ij")
    v2 = w2[co, c2, di, dj].ravel()
    W2 = jnp.zeros((640, 256), f32)
    W2 = W2.at[(128 * di + 8 * (2 * XX + dj) + c2).ravel(),
               (16 * XX + co).ravel()].set(v2)
    W2 = W2.at[(128 * di + 8 * (2 * XX + 1 + dj) + c2).ravel(),
               (128 + 16 * XX + co).ravel()].set(v2)
    Xg, cog = jnp.meshgrid(jnp.arange(4), jnp.arange(16), indexing="ij")
    b2 = jnp.zeros((1, 128), f32).at[0, (16 * Xg + cog).ravel()].set(
        params["conv2_b"][cog.ravel()])

    # fc1 -> W3 (512, 128): lhs lane 128*Y + 16*X + cout maps to PyTorch flat
    # feature cout*16 + Y*4 + X.
    Yg, Xg2, cog2 = jnp.meshgrid(jnp.arange(4), jnp.arange(4), jnp.arange(16),
                                 indexing="ij")
    rows3 = (128 * Yg + 16 * Xg2 + cog2).ravel()
    in_idx = (cog2 * 16 + Yg * 4 + Xg2).ravel()
    W3core = jnp.zeros((512, 120), f32).at[rows3].set(params["fc1_w"][in_idx])
    W3 = jnp.zeros((512, 128), f32).at[:, :120].set(W3core)
    b3 = jnp.zeros((1, 128), f32).at[0, :120].set(params["fc1_b"])

    W4 = jnp.zeros((128, 128), f32).at[:120, :84].set(params["fc2_w"])
    b4 = jnp.zeros((1, 128), f32).at[0, :84].set(params["fc2_b"])
    W5 = jnp.zeros((128, 128), f32).at[:84, :10].set(params["fc3_w"])
    b5 = jnp.zeros((1, 128), f32).at[0, :10].set(params["fc3_b"])

    cast = lambda w: w.astype(bf16)
    return (cast(W1), b1, cast(W2), b2, cast(W3), b3, cast(W4), b4, cast(W5), b5)


# ----------------------------- wrapper / glue --------------------------------

def _pick_tb(n):
    if n <= 8:
        return 8
    # >=2 grid steps so the "parallel" axis can shard across v7x's 2 TCs;
    # cap at 64 so per-step VMEM (~0.2 MiB * tb) stays well under 32 MiB.
    half = -(-n // 2)
    return max(8, min(64, ((half + 7) // 8) * 8))


def lenet_forward(x_nchw, prepped, tb=None):
    n = x_nchw.shape[0]
    if tb is None:
        tb = _pick_tb(n)
    n_pad = -(-n // tb) * tb

    # Raw image zero-padded to (32 rows, 128 lanes) bf16: ~8 KiB/sample of HBM
    # traffic (vs ~48 KiB/sample of im2col patches previously).
    img = x_nchw.astype(jnp.bfloat16).reshape(n, 28, 28)
    img = jnp.pad(img, ((0, n_pad - n), (0, 4), (0, 100)))
    img = img.reshape(n_pad * 32, 128)

    weights = prepped

    in_specs = [pl.BlockSpec((tb * 32, 128), lambda b: (b, 0))]
    in_specs += [pl.BlockSpec(w.shape, lambda b: (0, 0)) for w in weights]

    out = pl.pallas_call(
        _lenet_kernel,
        out_shape=jax.ShapeDtypeStruct((n_pad, 128), jnp.float32),
        grid=(n_pad // tb,),
        in_specs=in_specs,
        out_specs=pl.BlockSpec((tb, 128), lambda b: (b, 0)),
        compiler_params=pltpu.CompilerParams(
            dimension_semantics=("parallel",),
            vmem_limit_bytes=32 * 1024 * 1024,
        ),
    )(img, *weights)
    return out[:n, :10]


# ----------------------------- reference / init ------------------------------

def lenet_reference(x_nchw, params):
    dn = ("NCHW", "OIHW", "NCHW")
    y = jax.lax.conv_general_dilated(x_nchw.astype(jnp.float32),
                                     params["conv1_w"], (1, 1), "VALID",
                                     dimension_numbers=dn)
    y = jax.nn.relu(y + params["conv1_b"][None, :, None, None])
    y = jax.lax.reduce_window(y, -jnp.inf, jax.lax.max,
                              (1, 1, 2, 2), (1, 1, 2, 2), "VALID")
    y = jax.lax.conv_general_dilated(y, params["conv2_w"], (1, 1), "VALID",
                                     dimension_numbers=dn)
    y = jax.nn.relu(y + params["conv2_b"][None, :, None, None])
    y = jax.lax.reduce_window(y, -jnp.inf, jax.lax.max,
                              (1, 1, 2, 2), (1, 1, 2, 2), "VALID")
    y = y.reshape(y.shape[0], 256)
    y = jax.nn.relu(y @ params["fc1_w"] + params["fc1_b"])
    y = jax.nn.relu(y @ params["fc2_w"] + params["fc2_b"])
    y = y @ params["fc3_w"] + params["fc3_b"]
    return jax.nn.log_softmax(y, axis=1)


def init_params(key):
    ks = jax.random.split(key, 10)
    s = 0.1
    return {
        # conv weights in PyTorch layout (out, in, kh, kw)
        "conv1_w": s * jax.random.normal(ks[0], (6, 1, 5, 5), jnp.float32),
        "conv1_b": s * jax.random.normal(ks[1], (6,), jnp.float32),
        "conv2_w": s * jax.random.normal(ks[2], (16, 6, 5, 5), jnp.float32),
        "conv2_b": s * jax.random.normal(ks[3], (16,), jnp.float32),
        # linear weights stored as (in, out), i.e. PyTorch weight transposed
        "fc1_w": s * jax.random.normal(ks[4], (256, 120), jnp.float32),
        "fc1_b": s * jax.random.normal(ks[5], (120,), jnp.float32),
        "fc2_w": s * jax.random.normal(ks[6], (120, 84), jnp.float32),
        "fc2_b": s * jax.random.normal(ks[7], (84,), jnp.float32),
        "fc3_w": s * jax.random.normal(ks[8], (84, 10), jnp.float32),
        "fc3_b": s * jax.random.normal(ks[9], (10,), jnp.float32),
    }


if __name__ == "__main__":
    key = jax.random.PRNGKey(0)
    pkey, xkey = jax.random.split(key)
    params = init_params(pkey)
    prepped = prepare_weights(params)   # hoisted out of the per-call path

    # LeNet's classifier needs 256 flat features => 28x28 single-channel input
    x = jax.random.normal(xkey, (2, 1, 28, 28), jnp.float32)

    fwd = jax.jit(lambda xb: lenet_forward(xb, prepped))
    out = jax.block_until_ready(fwd(x))
    assert out.shape == (2, 10), out.shape
    # log_softmax rows sum to 1 in probability space
    assert jnp.allclose(jnp.sum(jnp.exp(out), axis=1), 1.0, atol=1e-4)

    ref = jax.jit(lenet_reference)(x, params)
    err = float(jnp.max(jnp.abs(out - ref)))
    assert err < 2e-1, f"max |pallas - reference| = {err}"

    # also exercise a multi-step "parallel" grid (batch 32 -> tb=16, 2 steps)
    x2 = jax.random.normal(xkey, (32, 1, 28, 28), jnp.float32)
    out2 = jax.block_until_ready(jax.jit(lambda xb: lenet_forward(xb, prepped))(x2))
    ref2 = jax.jit(lenet_reference)(x2, params)
    err2 = float(jnp.max(jnp.abs(out2 - ref2)))
    assert out2.shape == (32, 10)
    assert err2 < 2e-1, f"max |pallas - reference| (batch 32) = {err2}"

    print("KERNEL_OK")
</pallas_src>

<mosaic_0001>
module attributes {stable_mosaic.version = 11 : i64} {
  func.func @_lenet_kernel(%arg0: i32, %arg1: memref<256x128xbf16, #tpu.memory_space<vmem>>, %arg2: memref<640x256xbf16, #tpu.memory_space<vmem>>, %arg3: memref<1x128xf32, #tpu.memory_space<vmem>>, %arg4: memref<640x256xbf16, #tpu.memory_space<vmem>>, %arg5: memref<1x128xf32, #tpu.memory_space<vmem>>, %arg6: memref<512x128xbf16, #tpu.memory_space<vmem>>, %arg7: memref<1x128xf32, #tpu.memory_space<vmem>>, %arg8: memref<128x128xbf16, #tpu.memory_space<vmem>>, %arg9: memref<1x128xf32, #tpu.memory_space<vmem>>, %arg10: memref<128x128xbf16, #tpu.memory_space<vmem>>, %arg11: memref<1x128xf32, #tpu.memory_space<vmem>>, %arg12: memref<8x128xf32, #tpu.memory_space<vmem>>) attributes {dimension_semantics = [#tpu.dimension_semantics<parallel>], iteration_bounds = array<i64: 1>, scalar_prefetch = 0 : i64, scratch_operands = 0 : i64, tpu.core_type = #tpu.core_type<tc>, window_params = [{transform_indices = @transform_0, window_bounds = array<i64: 256, 128>}, {pipeline_mode = #tpu.pipeline_mode<synchronous>, transform_indices = @transform_1, window_bounds = array<i64: 640, 256>}, {pipeline_mode = #tpu.pipeline_mode<synchronous>, transform_indices = @transform_2, window_bounds = array<i64: 1, 128>}, {pipeline_mode = #tpu.pipeline_mode<synchronous>, transform_indices = @transform_3, window_bounds = array<i64: 640, 256>}, {pipeline_mode = #tpu.pipeline_mode<synchronous>, transform_indices = @transform_4, window_bounds = array<i64: 1, 128>}, {pipeline_mode = #tpu.pipeline_mode<synchronous>, transform_indices = @transform_5, window_bounds = array<i64: 512, 128>}, {pipeline_mode = #tpu.pipeline_mode<synchronous>, transform_indices = @transform_6, window_bounds = array<i64: 1, 128>}, {pipeline_mode = #tpu.pipeline_mode<synchronous>, transform_indices = @transform_7, window_bounds = array<i64: 128, 128>}, {pipeline_mode = #tpu.pipeline_mode<synchronous>, transform_indices = @transform_8, window_bounds = array<i64: 1, 128>}, {pipeline_mode = #tpu.pipeline_mode<synchronous>, transform_indices = @transform_9, window_bounds = array<i64: 128, 128>}, {pipeline_mode = #tpu.pipeline_mode<synchronous>, transform_indices = @transform_10, window_bounds = array<i64: 1, 128>}, {transform_indices = @transform_11, window_bounds = array<i64: 8, 128>}]} {
    %c0 = arith.constant 0 : index
    %c0_0 = arith.constant 0 : index
    %0 = vector.load %arg1[%c0, %c0_0] : memref<256x128xbf16, #tpu.memory_space<vmem>>, vector<256x128xbf16>
    %cst = arith.constant 0.000000e+00 : bf16
    %1 = vector.broadcast %cst : bf16 to vector<1x128xbf16>
    %2 = vector.extract_strided_slice %0 {offsets = [1, 0], sizes = [255, 128], strides = [1, 1]} : vector<256x128xbf16> to vector<255x128xbf16>
    %3 = tpu.concatenate %2, %1 in 0 : vector<255x128xbf16>, vector<1x128xbf16> -> vector<256x128xbf16>
    %cst_1 = arith.constant 0.000000e+00 : bf16
    %4 = vector.broadcast %cst_1 : bf16 to vector<2x128xbf16>
    %5 = vector.extract_strided_slice %0 {offsets = [2, 0], sizes = [254, 128], strides = [1, 1]} : vector<256x128xbf16> to vector<254x128xbf16>
    %6 = tpu.concatenate %5, %4 in 0 : vector<254x128xbf16>, vector<2x128xbf16> -> vector<256x128xbf16>
    %cst_2 = arith.constant 0.000000e+00 : bf16
    %7 = vector.broadcast %cst_2 : bf16 to vector<3x128xbf16>
    %8 = vector.extract_strided_slice %0 {offsets = [3, 0], sizes = [253, 128], strides = [1, 1]} : vector<256x128xbf16> to vector<253x128xbf16>
    %9 = tpu.concatenate %8, %7 in 0 : vector<253x128xbf16>, vector<3x128xbf16> -> vector<256x128xbf16>
    %cst_3 = arith.constant 0.000000e+00 : bf16
    %10 = vector.broadcast %cst_3 : bf16 to vector<4x128xbf16>
    %11 = vector.extract_strided_slice %0 {offsets = [4, 0], sizes = [252, 128], strides = [1, 1]} : vector<256x128xbf16> to vector<252x128xbf16>
    %12 = tpu.concatenate %11, %10 in 0 : vector<252x128xbf16>, vector<4x128xbf16> -> vector<256x128xbf16>
    %13 = tpu.concatenate %0, %3, %6, %9, %12 in 1 : vector<256x128xbf16>, vector<256x128xbf16>, vector<256x128xbf16>, vector<256x128xbf16>, vector<256x128xbf16> -> vector<256x640xbf16>
    %c0_4 = arith.constant 0 : index
    %c0_5 = arith.constant 0 : index
    %14 = vector.load %arg2[%c0_4, %c0_5] : memref<640x256xbf16, #tpu.memory_space<vmem>>, vector<640x256xbf16>
    %cst_6 = arith.constant dense<0.000000e+00> : vector<256x256xf32>
    %15 = tpu.matmul %13, %14, %cst_6 {dimension_numbers = #tpu.dot_dimension_numbers<[1], [0], [0], [1], [0, 0, 1, 1], [], []>} : vector<256x640xbf16>, vector<640x256xbf16>, vector<256x256xf32> -> vector<256x256xf32>
    %16 = vector.extract_strided_slice %15 {offsets = [0, 0], sizes = [256, 128], strides = [1, 1]} : vector<256x256xf32> to vector<256x128xf32>
    %17 = vector.extract_strided_slice %15 {offsets = [0, 128], sizes = [256, 128], strides = [1, 1]} : vector<256x256xf32> to vector<256x128xf32>
    %18 = arith.maximumf %16, %17 : vector<256x128xf32>
    %cst_7 = arith.constant 0.000000e+00 : f32
    %19 = vector.broadcast %cst_7 : f32 to vector<1x128xf32>
    %20 = vector.extract_strided_slice %18 {offsets = [1, 0], sizes = [255, 128], strides = [1, 1]} : vector<256x128xf32> to vector<255x128xf32>
    %21 = tpu.concatenate %20, %19 in 0 : vector<255x128xf32>, vector<1x128xf32> -> vector<256x128xf32>
    %22 = arith.maximumf %18, %21 : vector<256x128xf32>
    %c0_8 = arith.constant 0 : index
    %c0_9 = arith.constant 0 : index
    %23 = vector.load %arg3[%c0_8, %c0_9] : memref<1x128xf32, #tpu.memory_space<vmem>>, vector<1x128xf32>
    %24 = vector.broadcast %23 : vector<1x128xf32> to vector<256x128xf32>
    %25 = arith.addf %22, %24 : vector<256x128xf32>
    %cst_10 = arith.constant 0.000000e+00 : f32
    %26 = vector.broadcast %cst_10 : f32 to vector<256x128xf32>
    %27 = arith.maximumf %25, %26 : vector<256x128xf32>
    %28 = arith.truncf %27 : vector<256x128xf32> to vector<256x128xbf16>
    %cst_11 = arith.constant 0.000000e+00 : bf16
    %29 = vector.broadcast %cst_11 : bf16 to vector<2x128xbf16>
    %30 = vector.extract_strided_slice %28 {offsets = [2, 0], sizes = [254, 128], strides = [1, 1]} : vector<256x128xbf16> to vector<254x128xbf16>
    %31 = tpu.concatenate %30, %29 in 0 : vector<254x128xbf16>, vector<2x128xbf16> -> vector<256x128xbf16>
    %cst_12 = arith.constant 0.000000e+00 : bf16
    %32 = vector.broadcast %cst_12 : bf16 to vector<4x128xbf16>
    %33 = vector.extract_strided_slice %28 {offsets = [4, 0], sizes = [252, 128], strides = [1, 1]} : vector<256x128xbf16> to vector<252x128xbf16>
    %34 = tpu.concatenate %33, %32 in 0 : vector<252x128xbf16>, vector<4x128xbf16> -> vector<256x128xbf16>
    %cst_13 = arith.constant 0.000000e+00 : bf16
    %35 = vector.broadcast %cst_13 : bf16 to vector<6x128xbf16>
    %36 = vector.extract_strided_slice %28 {offsets = [6, 0], sizes = [250, 128], strides = [1, 1]} : vector<256x128xbf16> to vector<250x128xbf16>
    %37 = tpu.concatenate %36, %35 in 0 : vector<250x128xbf16>, vector<6x128xbf16> -> vector<256x128xbf16>
    %cst_14 = arith.constant 0.000000e+00 : bf16
    %38 = vector.broadcast %cst_14 : bf16 to vector<8x128xbf16>
    %39 = vector.extract_strided_slice %28 {offsets = [8, 0], sizes = [248, 128], strides = [1, 1]} : vector<256x128xbf16> to vector<248x128xbf16>
    %40 = tpu.concatenate %39, %38 in 0 : vector<248x128xbf16>, vector<8x128xbf16> -> vector<256x128xbf16>
    %41 = tpu.concatenate %28, %31, %34, %37, %40 in 1 : vector<256x128xbf16>, vector<256x128xbf16>, vector<256x128xbf16>, vector<256x128xbf16>, vector<256x128xbf16> -> vector<256x640xbf16>
    %c0_15 = arith.constant 0 : index
    %c0_16 = arith.constant 0 : index
    %42 = vector.load %arg4[%c0_15, %c0_16] : memref<640x256xbf16, #tpu.memory_space<vmem>>, vector<640x256xbf16>
    %cst_17 = arith.constant dense<0.000000e+00> : vector<256x256xf32>
    %43 = tpu.matmul %41, %42, %cst_17 {dimension_numbers = #tpu.dot_dimension_numbers<[1], [0], [0], [1], [0, 0, 1, 1], [], []>} : vector<256x640xbf16>, vector<640x256xbf16>, vector<256x256xf32> -> vector<256x256xf32>
    %44 = vector.extract_strided_slice %43 {offsets = [0, 0], sizes = [256, 128], strides = [1, 1]} : vector<256x256xf32> to vector<256x128xf32>
    %45 = vector.extract_strided_slice %43 {offsets = [0, 128], sizes = [256, 128], strides = [1, 1]} : vector<256x256xf32> to vector<256x128xf32>
    %46 = arith.maximumf %44, %45 : vector<256x128xf32>
    %cst_18 = arith.constant 0.000000e+00 : f32
    %47 = vector.broadcast %cst_18 : f32 to vector<2x128xf32>
    %48 = vector.extract_strided_slice %46 {offsets = [2, 0], sizes = [254, 128], strides = [1, 1]} : vector<256x128xf32> to vector<254x128xf32>
    %49 = tpu.concatenate %48, %47 in 0 : vector<254x128xf32>, vector<2x128xf32> -> vector<256x128xf32>
    %50 = arith.maximumf %46, %49 : vector<256x128xf32>
    %c0_19 = arith.constant 0 : index
    %c0_20 = arith.constant 0 : index
    %51 = vector.load %arg5[%c0_19, %c0_20] : memref<1x128xf32, #tpu.memory_space<vmem>>, vector<1x128xf32>
    %52 = vector.broadcast %51 : vector<1x128xf32> to vector<256x128xf32>
    %53 = arith.addf %50, %52 : vector<256x128xf32>
    %cst_21 = arith.constant 0.000000e+00 : f32
    %54 = vector.broadcast %cst_21 : f32 to vector<256x128xf32>
    %55 = arith.maximumf %53, %54 : vector<256x128xf32>
    %56 = arith.truncf %55 : vector<256x128xf32> to vector<256x128xbf16>
    %57 = vector.shape_cast %56 : vector<256x128xbf16> to vector<8x32x128xbf16>
    %58 = vector.extract_strided_slice %57 {offsets = [0, 0, 0], sizes = [8, 1, 128], strides = [1, 1, 1]} : vector<8x32x128xbf16> to vector<8x1x128xbf16>
    %59 = vector.shape_cast %58 : vector<8x1x128xbf16> to vector<8x128xbf16>
    %60 = vector.extract_strided_slice %57 {offsets = [0, 4, 0], sizes = [8, 1, 128], strides = [1, 1, 1]} : vector<8x32x128xbf16> to vector<8x1x128xbf16>
    %61 = vector.shape_cast %60 : vector<8x1x128xbf16> to vector<8x128xbf16>
    %62 = vector.extract_strided_slice %57 {offsets = [0, 8, 0], sizes = [8, 1, 128], strides = [1, 1, 1]} : vector<8x32x128xbf16> to vector<8x1x128xbf16>
    %63 = vector.shape_cast %62 : vector<8x1x128xbf16> to vector<8x128xbf16>
    %64 = vector.extract_strided_slice %57 {offsets = [0, 12, 0], sizes = [8, 1, 128], strides = [1, 1, 1]} : vector<8x32x128xbf16> to vector<8x1x128xbf16>
    %65 = vector.shape_cast %64 : vector<8x1x128xbf16> to vector<8x128xbf16>
    %66 = tpu.concatenate %59, %61, %63, %65 in 1 : vector<8x128xbf16>, vector<8x128xbf16>, vector<8x128xbf16>, vector<8x128xbf16> -> vector<8x512xbf16>
    %c0_22 = arith.constant 0 : index
    %c0_23 = arith.constant 0 : index
    %67 = vector.load %arg6[%c0_22, %c0_23] : memref<512x128xbf16, #tpu.memory_space<vmem>>, vector<512x128xbf16>
    %cst_24 = arith.constant dense<0.000000e+00> : vector<8x128xf32>
    %68 = tpu.matmul %66, %67, %cst_24 {dimension_numbers = #tpu.dot_dimension_numbers<[1], [0], [0], [1], [0, 0, 1, 1], [], []>} : vector<8x512xbf16>, vector<512x128xbf16>, vector<8x128xf32> -> vector<8x128xf32>
    %c0_25 = arith.constant 0 : index
    %c0_26 = arith.constant 0 : index
    %69 = vector.load %arg7[%c0_25, %c0_26] : memref<1x128xf32, #tpu.memory_space<vmem>>, vector<1x128xf32>
    %70 = vector.broadcast %69 : vector<1x128xf32> to vector<8x128xf32>
    %71 = arith.addf %68, %70 : vector<8x128xf32>
    %cst_27 = arith.constant 0.000000e+00 : f32
    %72 = vector.broadcast %cst_27 : f32 to vector<8x128xf32>
    %73 = arith.maximumf %71, %72 : vector<8x128xf32>
    %74 = arith.truncf %73 : vector<8x128xf32> to vector<8x128xbf16>
    %c0_28 = arith.constant 0 : index
    %c0_29 = arith.constant 0 : index
    %75 = vector.load %arg8[%c0_28, %c0_29] : memref<128x128xbf16, #tpu.memory_space<vmem>>, vector<128x128xbf16>
    %cst_30 = arith.constant dense<0.000000e+00> : vector<8x128xf32>
    %76 = tpu.matmul %74, %75, %cst_30 {dimension_numbers = #tpu.dot_dimension_numbers<[1], [0], [0], [1], [0, 0, 1, 1], [], []>} : vector<8x128xbf16>, vector<128x128xbf16>, vector<8x128xf32> -> vector<8x128xf32>
    %c0_31 = arith.constant 0 : index
    %c0_32 = arith.constant 0 : index
    %77 = vector.load %arg9[%c0_31, %c0_32] : memref<1x128xf32, #tpu.memory_space<vmem>>, vector<1x128xf32>
    %78 = vector.broadcast %77 : vector<1x128xf32> to vector<8x128xf32>
    %79 = arith.addf %76, %78 : vector<8x128xf32>
    %cst_33 = arith.constant 0.000000e+00 : f32
    %80 = vector.broadcast %cst_33 : f32 to vector<8x128xf32>
    %81 = arith.maximumf %79, %80 : vector<8x128xf32>
    %82 = arith.truncf %81 : vector<8x128xf32> to vector<8x128xbf16>
    %c0_34 = arith.constant 0 : index
    %c0_35 = arith.constant 0 : index
    %83 = vector.load %arg10[%c0_34, %c0_35] : memref<128x128xbf16, #tpu.memory_space<vmem>>, vector<128x128xbf16>
    %cst_36 = arith.constant dense<0.000000e+00> : vector<8x128xf32>
    %84 = tpu.matmul %82, %83, %cst_36 {dimension_numbers = #tpu.dot_dimension_numbers<[1], [0], [0], [1], [0, 0, 1, 1], [], []>} : vector<8x128xbf16>, vector<128x128xbf16>, vector<8x128xf32> -> vector<8x128xf32>
    %c0_37 = arith.constant 0 : index
    %c0_38 = arith.constant 0 : index
    %85 = vector.load %arg11[%c0_37, %c0_38] : memref<1x128xf32, #tpu.memory_space<vmem>>, vector<1x128xf32>
    %86 = vector.broadcast %85 : vector<1x128xf32> to vector<8x128xf32>
    %87 = arith.addf %84, %86 : vector<8x128xf32>
    %88 = tpu.iota {dimensions = array<i32: 1>} : vector<8x128xi32>
    %c10_i32 = arith.constant 10 : i32
    %89 = vector.broadcast %c10_i32 : i32 to vector<8x128xi32>
    %90 = arith.cmpi slt, %88, %89 : vector<8x128xi32>
    %cst_39 = arith.constant -1.000000e+30 : f32
    %91 = vector.broadcast %cst_39 : f32 to vector<8x128xf32>
    %92 = arith.select %90, %87, %91 : vector<8x128xi1>, vector<8x128xf32>
    %cst_40 = arith.constant dense<0xFF800000> : vector<8xf32>
    %93 = vector.multi_reduction <maximumf>, %92, %cst_40 [1] : vector<8x128xf32> to vector<8xf32>
    %94 = vector.shape_cast %93 : vector<8xf32> to vector<8x1xf32>
    %95 = vector.broadcast %94 : vector<8x1xf32> to vector<8x128xf32>
    %96 = arith.subf %87, %95 : vector<8x128xf32>
    %97 = math.exp %96 : vector<8x128xf32>
    %cst_41 = arith.constant 0.000000e+00 : f32
    %98 = vector.broadcast %cst_41 : f32 to vector<8x128xf32>
    %99 = arith.select %90, %97, %98 : vector<8x128xi1>, vector<8x128xf32>
    %cst_42 = arith.constant dense<0.000000e+00> : vector<8xf32>
    %100 = vector.multi_reduction <add>, %99, %cst_42 [1] : vector<8x128xf32> to vector<8xf32>
    %101 = vector.shape_cast %100 : vector<8xf32> to vector<8x1xf32>
    %102 = math.log %101 : vector<8x1xf32>
    %103 = vector.broadcast %94 : vector<8x1xf32> to vector<8x128xf32>
    %104 = arith.subf %87, %103 : vector<8x128xf32>
    %105 = vector.broadcast %102 : vector<8x1xf32> to vector<8x128xf32>
    %106 = arith.subf %104, %105 : vector<8x128xf32>
    %c0_43 = arith.constant 0 : index
    %c0_44 = arith.constant 0 : index
    %107 = vector.load %arg12[%c0_43, %c0_44] : memref<8x128xf32, #tpu.memory_space<vmem>>, vector<8x128xf32>
    tpu.vector_store %arg12[%c0_43, %c0_44], %106 {strides = array<i32>} : memref<8x128xf32, #tpu.memory_space<vmem>>, vector<8x128xf32>,
    return
  }
  func.func @transform_0(%arg0: i32) -> (i32, i32) {
    %c0_i32 = arith.constant 0 : i32
    %c0_i32_0 = arith.constant 0 : i32
    return %arg0, %c0_i32 : i32, i32
  }
  func.func @transform_1(%arg0: i32) -> (i32, i32) {
    %c0_i32 = arith.constant 0 : i32
    %c0_i32_0 = arith.constant 0 : i32
    %c0_i32_1 = arith.constant 0 : i32
    return %c0_i32, %c0_i32_0 : i32, i32
  }
  func.func @transform_2(%arg0: i32) -> (i32, i32) {
    %c0_i32 = arith.constant 0 : i32
    %c0_i32_0 = arith.constant 0 : i32
    %c0_i32_1 = arith.constant 0 : i32
    return %c0_i32, %c0_i32_0 : i32, i32
  }
  func.func @transform_3(%arg0: i32) -> (i32, i32) {
    %c0_i32 = arith.constant 0 : i32
    %c0_i32_0 = arith.constant 0 : i32
    %c0_i32_1 = arith.constant 0 : i32
    return %c0_i32, %c0_i32_0 : i32, i32
  }
  func.func @transform_4(%arg0: i32) -> (i32, i32) {
    %c0_i32 = arith.constant 0 : i32
    %c0_i32_0 = arith.constant 0 : i32
    %c0_i32_1 = arith.constant 0 : i32
    return %c0_i32, %c0_i32_0 : i32, i32
  }
  func.func @transform_5(%arg0: i32) -> (i32, i32) {
    %c0_i32 = arith.constant 0 : i32
    %c0_i32_0 = arith.constant 0 : i32
    %c0_i32_1 = arith.constant 0 : i32
    return %c0_i32, %c0_i32_0 : i32, i32
  }
  func.func @transform_6(%arg0: i32) -> (i32, i32) {
    %c0_i32 = arith.constant 0 : i32
    %c0_i32_0 = arith.constant 0 : i32
    %c0_i32_1 = arith.constant 0 : i32
    return %c0_i32, %c0_i32_0 : i32, i32
  }
  func.func @transform_7(%arg0: i32) -> (i32, i32) {
    %c0_i32 = arith.constant 0 : i32
    %c0_i32_0 = arith.constant 0 : i32
    %c0_i32_1 = arith.constant 0 : i32
    return %c0_i32, %c0_i32_0 : i32, i32
  }
  func.func @transform_8(%arg0: i32) -> (i32, i32) {
    %c0_i32 = arith.constant 0 : i32
    %c0_i32_0 = arith.constant 0 : i32
    %c0_i32_1 = arith.constant 0 : i32
    return %c0_i32, %c0_i32_0 : i32, i32
  }
  func.func @transform_9(%arg0: i32) -> (i32, i32) {
    %c0_i32 = arith.constant 0 : i32
    %c0_i32_0 = arith.constant 0 : i32
    %c0_i32_1 = arith.constant 0 : i32
    return %c0_i32, %c0_i32_0 : i32, i32
  }
  func.func @transform_10(%arg0: i32) -> (i32, i32) {
    %c0_i32 = arith.constant 0 : i32
    %c0_i32_0 = arith.constant 0 : i32
    %c0_i32_1 = arith.constant 0 : i32
    return %c0_i32, %c0_i32_0 : i32, i32
  }
  func.func @transform_11(%arg0: i32) -> (i32, i32) {
    %c0_i32 = arith.constant 0 : i32
    %c0_i32_0 = arith.constant 0 : i32
    return %arg0, %c0_i32 : i32, i32
  }
}

</mosaic_0001>

<llo_original>
// kernel: _lambda_.1
$region0: #{_lambda_.1}
  #allocation0 [shape = 'u32[]', space=smem, size = 0x4, offset = 0x4, fixed_abs, tag = 'smem constant byte address 0x4 - core index']
  #allocation1 [shape = 'u32[144,128]{1,0:T(1,128)}', space=vmem, size = 0x12000, scoped, tag = 'internal scratch']
  %s0 = inlined_call_operand.vmem [shape: bf16[256,128], index: 0, kind: input, shape index: {}]
  %s1 = inlined_call_operand.vmem [shape: bf16[640,256], index: 1, kind: input, shape index: {}]
  %s2 = inlined_call_operand.vmem [shape: f32[1,128], index: 2, kind: input, shape index: {}]
  %s3 = inlined_call_operand.vmem [shape: bf16[640,256], index: 3, kind: input, shape index: {}]
  %s4 = inlined_call_operand.vmem [shape: f32[1,128], index: 4, kind: input, shape index: {}]
  %s5 = inlined_call_operand.vmem [shape: bf16[512,128], index: 5, kind: input, shape index: {}]
  %s6 = inlined_call_operand.vmem [shape: f32[1,128], index: 6, kind: input, shape index: {}]
  %s7 = inlined_call_operand.vmem [shape: bf16[128,128], index: 7, kind: input, shape index: {}]
  %s8 = inlined_call_operand.vmem [shape: f32[1,128], index: 8, kind: input, shape index: {}]
  %s9 = inlined_call_operand.vmem [shape: bf16[128,128], index: 9, kind: input, shape index: {}]
  %s10 = inlined_call_operand.vmem [shape: f32[1,128], index: 10, kind: input, shape index: {}]
  %s11 = inlined_call_operand.vmem [shape: f32[8,128], index: 11, kind: output, shape index: {}]
  %s12 = sld [smem:[#allocation0]]
  $region54: #{_lambda_.1} parent=0
    _
  %s14 = ssub.s32 1, %s12
  %s15 = scalar_select 0, %s14, %s12
  // Predicated region
  $region2: #{_lambda_.1} parent=0 // pred_check
    _
  $region3: #{_lambda_.1} parent=0 // pred_check_branch
    %17 = sbr.rel (0) target = $region5
  $region4: #{_lambda_.1} parent=0 // pred_region
    _
  $region5: #{_lambda_.1} parent=0 // pred_fallthru
    _
  // Predicated region
  $region6: #{_lambda_.1} parent=0 // pred_check
    _
  $region7: #{_lambda_.1} parent=0 // pred_check_branch
    %19 = sbr.rel (0) target = $region9
  $region8: #{_lambda_.1} parent=0 // pred_region
    _
  $region9: #{_lambda_.1} parent=0 // pred_fallthru
    _
  // Predicated region
  $region10: #{_lambda_.1} parent=0 // pred_check
    _
  $region11: #{_lambda_.1} parent=0 // pred_check_branch
    %21 = sbr.rel (0) target = $region13
  $region12: #{_lambda_.1} parent=0 // pred_region
    _
  $region13: #{_lambda_.1} parent=0 // pred_fallthru
    _
  // Predicated region
  $region14: #{_lambda_.1} parent=0 // pred_check
    _
  $region15: #{_lambda_.1} parent=0 // pred_check_branch
    %23 = sbr.rel (0) target = $region17
  $region16: #{_lambda_.1} parent=0 // pred_region
    _
  $region17: #{_lambda_.1} parent=0 // pred_fallthru
    _
  // Predicated region
  $region18: #{_lambda_.1} parent=0 // pred_check
    _
  $region19: #{_lambda_.1} parent=0 // pred_check_branch
    %25 = sbr.rel (0) target = $region21
  $region20: #{_lambda_.1} parent=0 // pred_region
    _
  $region21: #{_lambda_.1} parent=0 // pred_fallthru
    _
  // Predicated region
  $region22: #{_lambda_.1} parent=0 // pred_check
    _
  $region23: #{_lambda_.1} parent=0 // pred_check_branch
    %27 = sbr.rel (0) target = $region25
  $region24: #{_lambda_.1} parent=0 // pred_region
    _
  $region25: #{_lambda_.1} parent=0 // pred_fallthru
    _
  // Predicated region
  $region26: #{_lambda_.1} parent=0 // pred_check
    _
  $region27: #{_lambda_.1} parent=0 // pred_check_branch
    %29 = sbr.rel (0) target = $region29
  $region28: #{_lambda_.1} parent=0 // pred_region
    _
  $region29: #{_lambda_.1} parent=0 // pred_fallthru
    _
  // Predicated region
  $region30: #{_lambda_.1} parent=0 // pred_check
    _
  $region31: #{_lambda_.1} parent=0 // pred_check_branch
    %31 = sbr.rel (0) target = $region33
  $region32: #{_lambda_.1} parent=0 // pred_region
    _
  $region33: #{_lambda_.1} parent=0 // pred_fallthru
    _
  // Predicated region
  $region34: #{_lambda_.1} parent=0 // pred_check
    _
  $region35: #{_lambda_.1} parent=0 // pred_check_branch
    %33 = sbr.rel (0) target = $region37
  $region36: #{_lambda_.1} parent=0 // pred_region
    _
  $region37: #{_lambda_.1} parent=0 // pred_fallthru
    _
  // Predicated region
  $region38: #{_lambda_.1} parent=0 // pred_check
    _
  $region39: #{_lambda_.1} parent=0 // pred_check_branch
    %35 = sbr.rel (0) target = $region41
  $region40: #{_lambda_.1} parent=0 // pred_region
    _
  $region41: #{_lambda_.1} parent=0 // pred_fallthru
    _
  // Predicated region
  $region42: #{_lambda_.1} parent=0 // pred_check
    _
  $region43: #{_lambda_.1} parent=0 // pred_check_branch
    %37 = sbr.rel (0) target = $region45
  $region44: #{_lambda_.1} parent=0 // pred_region
    _
  $region45: #{_lambda_.1} parent=0 // pred_fallthru
    _
  %v39 = vld [vmem:[%s0] sm:$0xf]
  %v40 = vld [vmem:[%s0 + $0x4] sm:$0xf]
  %v41 = vld [vmem:[%s0 + $0x8] sm:$0xf]
  %v42 = vld [vmem:[%s0 + $0xc] sm:$0xf]
  %v43 = vld [vmem:[%s0 + $0x10] sm:$0xf]
  %v44 = vld [vmem:[%s0 + $0x14] sm:$0xf]
  %v45 = vld [vmem:[%s0 + $0x18] sm:$0xf]
  %v46 = vld [vmem:[%s0 + $0x1c] sm:$0xf]
  %v47 = vld [vmem:[%s0 + $0x20] sm:$0xf]
  %v48 = vld [vmem:[%s0 + $0x24] sm:$0xf]
  %v49 = vld [vmem:[%s0 + $0x28] sm:$0xf]
  %v50 = vld [vmem:[%s0 + $0x2c] sm:$0xf]
  %v51 = vld [vmem:[%s0 + $0x30] sm:$0xf]
  %v52 = vld [vmem:[%s0 + $0x34] sm:$0xf]
  %v53 = vld [vmem:[%s0 + $0x38] sm:$0xf]
  %v54 = vld [vmem:[%s0 + $0x3c] sm:$0xf]
  %v55 = vld [vmem:[%s0 + $0x40] sm:$0xf]
  %v56 = vld [vmem:[%s0 + $0x44] sm:$0xf]
  %v57 = vld [vmem:[%s0 + $0x48] sm:$0xf]
  %v58 = vld [vmem:[%s0 + $0x4c] sm:$0xf]
  %v59 = vld [vmem:[%s0 + $0x50] sm:$0xf]
  %v60 = vld [vmem:[%s0 + $0x54] sm:$0xf]
  %v61 = vld [vmem:[%s0 + $0x58] sm:$0xf]
  %v62 = vld [vmem:[%s0 + $0x5c] sm:$0xf]
  %v63 = vld [vmem:[%s0 + $0x60] sm:$0xf]
  %v64 = vld [vmem:[%s0 + $0x64] sm:$0xf]
  %v65 = vld [vmem:[%s0 + $0x68] sm:$0xf]
  %v66 = vld [vmem:[%s0 + $0x6c] sm:$0xf]
  %v67 = vld [vmem:[%s0 + $0x70] sm:$0xf]
  %v68 = vld [vmem:[%s0 + $0x74] sm:$0xf]
  %v69 = vld [vmem:[%s0 + $0x78] sm:$0xf]
  %v70 = vld [vmem:[%s0 + $0x7c] sm:$0xf]
  %v103 = vunpack.c.l.b16 %v39
  %v104 = vunpack.c.l.b16 %v40
  %v105 = vunpack.c.l.b16 %v41
  %v106 = vunpack.c.l.b16 %v42
  %v107 = vunpack.c.l.b16 %v43
  %v108 = vunpack.c.l.b16 %v44
  %v109 = vunpack.c.l.b16 %v45
  %v110 = vunpack.c.l.b16 %v46
  %v111 = vunpack.c.l.b16 %v47
  %v112 = vunpack.c.l.b16 %v48
  %v113 = vunpack.c.l.b16 %v49
  %v114 = vunpack.c.l.b16 %v50
  %v115 = vunpack.c.l.b16 %v51
  %v116 = vunpack.c.l.b16 %v52
  %v117 = vunpack.c.l.b16 %v53
  %v118 = vunpack.c.l.b16 %v54
  %v119 = vunpack.c.l.b16 %v55
  %v120 = vunpack.c.l.b16 %v56
  %v121 = vunpack.c.l.b16 %v57
  %v122 = vunpack.c.l.b16 %v58
  %v123 = vunpack.c.l.b16 %v59
  %v124 = vunpack.c.l.b16 %v60
  %v125 = vunpack.c.l.b16 %v61
  %v126 = vunpack.c.l.b16 %v62
  %v127 = vunpack.c.l.b16 %v63
  %v128 = vunpack.c.l.b16 %v64
  %v129 = vunpack.c.l.b16 %v65
  %v130 = vunpack.c.l.b16 %v66
  %v131 = vunpack.c.l.b16 %v67
  %v132 = vunpack.c.l.b16 %v68
  %v133 = vunpack.c.l.b16 %v69
  %v134 = vunpack.c.l.b16 %v70
  %v135 = vpack.c.b16 %v104, %v103
  %v136 = vpack.c.b16 %v106, %v105
  %v137 = vpack.c.b16 %v108, %v107
  %v138 = vpack.c.b16 %v110, %v109
  %v139 = vpack.c.b16 %v112, %v111
  %v140 = vpack.c.b16 %v114, %v113
  %v141 = vpack.c.b16 %v116, %v115
  %v142 = vpack.c.b16 %v118, %v117
  %v143 = vpack.c.b16 %v120, %v119
  %v144 = vpack.c.b16 %v122, %v121
  %v145 = vpack.c.b16 %v124, %v123
  %v146 = vpack.c.b16 %v126, %v125
  %v147 = vpack.c.b16 %v128, %v127
  %v148 = vpack.c.b16 %v130, %v129
  %v149 = vpack.c.b16 %v132, %v131
  %v150 = vpack.c.b16 %v134, %v133
  %vm151 = vsmask.f32 7424
  %v153 = vshrl.u32 %v135, 16
  %v155 = vshll.u32 %v135, 16
  %v157 = vrot.slane %v155, 1
  %v158 = vor.u32 %v153, %v157
  %v160 = vshll.u32 %v136, 16
  %v162 = vrot.slane %v160, 1
  %v163 = vsel %vm151, %v158, %v162
  %v164 = vshrl.u32 %v136, 16
  %v166 = vor.u32 %v164, %v162
  %v168 = vshll.u32 %v137, 16
  %v170 = vrot.slane %v168, 1
  %v171 = vsel %vm151, %v166, %v170
  %v172 = vshrl.u32 %v137, 16
  %v174 = vor.u32 %v172, %v170
  %v176 = vshll.u32 %v138, 16
  %v178 = vrot.slane %v176, 1
  %v179 = vsel %vm151, %v174, %v178
  %v180 = vshrl.u32 %v138, 16
  %v182 = vor.u32 %v180, %v178
  %v184 = vshll.u32 %v139, 16
  %v186 = vrot.slane %v184, 1
  %v187 = vsel %vm151, %v182, %v186
  %v188 = vshrl.u32 %v139, 16
  %v190 = vor.u32 %v188, %v186
  %v192 = vshll.u32 %v140, 16
  %v194 = vrot.slane %v192, 1
  %v195 = vsel %vm151, %v190, %v194
  %v196 = vshrl.u32 %v140, 16
  %v198 = vor.u32 %v196, %v194
  %v200 = vshll.u32 %v141, 16
  %v202 = vrot.slane %v200, 1
  %v203 = vsel %vm151, %v198, %v202
  %v204 = vshrl.u32 %v141, 16
  %v206 = vor.u32 %v204, %v202
  %v208 = vshll.u32 %v142, 16
  %v210 = vrot.slane %v208, 1
  %v211 = vsel %vm151, %v206, %v210
  %v212 = vshrl.u32 %v142, 16
  %v214 = vor.u32 %v212, %v210
  %v216 = vshll.u32 %v143, 16
  %v218 = vrot.slane %v216, 1
  %v219 = vsel %vm151, %v214, %v218
  %v220 = vshrl.u32 %v143, 16
  %v222 = vor.u32 %v220, %v218
  %v224 = vshll.u32 %v144, 16
  %v226 = vrot.slane %v224, 1
  %v227 = vsel %vm151, %v222, %v226
  %v228 = vshrl.u32 %v144, 16
  %v230 = vor.u32 %v228, %v226
  %v232 = vshll.u32 %v145, 16
  %v234 = vrot.slane %v232, 1
  %v235 = vsel %vm151, %v230, %v234
  %v236 = vshrl.u32 %v145, 16
  %v238 = vor.u32 %v236, %v234
  %v240 = vshll.u32 %v146, 16
  %v242 = vrot.slane %v240, 1
  %v243 = vsel %vm151, %v238, %v242
  %v244 = vshrl.u32 %v146, 16
  %v246 = vor.u32 %v244, %v242
  %v248 = vshll.u32 %v147, 16
  %v250 = vrot.slane %v248, 1
  %v251 = vsel %vm151, %v246, %v250
  %v252 = vshrl.u32 %v147, 16
  %v254 = vor.u32 %v252, %v250
  %v256 = vshll.u32 %v148, 16
  %v258 = vrot.slane %v256, 1
  %v259 = vsel %vm151, %v254, %v258
  %v260 = vshrl.u32 %v148, 16
  %v262 = vor.u32 %v260, %v258
  %v264 = vshll.u32 %v149, 16
  %v266 = vrot.slane %v264, 1
  %v267 = vsel %vm151, %v262, %v266
  %v268 = vshrl.u32 %v149, 16
  %v270 = vor.u32 %v268, %v266
  %v272 = vshll.u32 %v150, 16
  %v274 = vrot.slane %v272, 1
  %v275 = vsel %vm151, %v270, %v274
  %v276 = vshrl.u32 %v150, 16
  %v278 = vor.u32 %v276, %v274
  %vm295 = vcmask 1047552
  %vm296 = vmand %vm295, %vm151
  %v297 = vsel %vm296, %v278, 0
  %vm298 = vcmask 1046528
  %v299 = vrot.slane %v135, 1
  %v300 = vrot.slane %v136, 1
  %v301 = vsel %vm298, %v299, %v300
  %v302 = vrot.slane %v137, 1
  %v303 = vsel %vm298, %v300, %v302
  %v304 = vrot.slane %v138, 1
  %v305 = vsel %vm298, %v302, %v304
  %v306 = vrot.slane %v139, 1
  %v307 = vsel %vm298, %v304, %v306
  %v308 = vrot.slane %v140, 1
  %v309 = vsel %vm298, %v306, %v308
  %v310 = vrot.slane %v141, 1
  %v311 = vsel %vm298, %v308, %v310
  %v312 = vrot.slane %v142, 1
  %v313 = vsel %vm298, %v310, %v312
  %v314 = vrot.slane %v143, 1
  %v315 = vsel %vm298, %v312, %v314
  %v316 = vrot.slane %v144, 1
  %v317 = vsel %vm298, %v314, %v316
  %v318 = vrot.slane %v145, 1
  %v319 = vsel %vm298, %v316, %v318
  %v320 = vrot.slane %v146, 1
  %v321 = vsel %vm298, %v318, %v320
  %v322 = vrot.slane %v147, 1
  %v323 = vsel %vm298, %v320, %v322
  %v324 = vrot.slane %v148, 1
  %v325 = vsel %vm298, %v322, %v324
  %v326 = vrot.slane %v149, 1
  %v327 = vsel %vm298, %v324, %v326
  %v328 = vrot.slane %v150, 1
  %v329 = vsel %vm298, %v326, %v328
  %vm345 = vcmask 1046528
  %v348 = vsel %vm345, %v328, 0
  %vm350 = vsmask.f32 6400
  %v351 = vrot.slane %v153, 1
  %v352 = vrot.slane %v155, 2
  %v353 = vor.u32 %v351, %v352
  %v354 = vrot.slane %v164, 1
  %v355 = vrot.slane %v160, 2
  %v356 = vor.u32 %v354, %v355
  %v357 = vsel %vm350, %v353, %v356
  %v358 = vrot.slane %v172, 1
  %v359 = vrot.slane %v168, 2
  %v360 = vor.u32 %v358, %v359
  %v361 = vsel %vm350, %v356, %v360
  %v362 = vrot.slane %v180, 1
  %v363 = vrot.slane %v176, 2
  %v364 = vor.u32 %v362, %v363
  %v365 = vsel %vm350, %v360, %v364
  %v366 = vrot.slane %v188, 1
  %v367 = vrot.slane %v184, 2
  %v368 = vor.u32 %v366, %v367
  %v369 = vsel %vm350, %v364, %v368
  %v370 = vrot.slane %v196, 1
  %v371 = vrot.slane %v192, 2
  %v372 = vor.u32 %v370, %v371
  %v373 = vsel %vm350, %v368, %v372
  %v374 = vrot.slane %v204, 1
  %v375 = vrot.slane %v200, 2
  %v376 = vor.u32 %v374, %v375
  %v377 = vsel %vm350, %v372, %v376
  %v378 = vrot.slane %v212, 1
  %v379 = vrot.slane %v208, 2
  %v380 = vor.u32 %v378, %v379
  %v381 = vsel %vm350, %v376, %v380
  %v382 = vrot.slane %v220, 1
  %v383 = vrot.slane %v216, 2
  %v384 = vor.u32 %v382, %v383
  %v385 = vsel %vm350, %v380, %v384
  %v386 = vrot.slane %v228, 1
  %v387 = vrot.slane %v224, 2
  %v388 = vor.u32 %v386, %v387
  %v389 = vsel %vm350, %v384, %v388
  %v390 = vrot.slane %v236, 1
  %v391 = vrot.slane %v232, 2
  %v392 = vor.u32 %v390, %v391
  %v393 = vsel %vm350, %v388, %v392
  %v394 = vrot.slane %v244, 1
  %v395 = vrot.slane %v240, 2
  %v396 = vor.u32 %v394, %v395
  %v397 = vsel %vm350, %v392, %v396
  %v398 = vrot.slane %v252, 1
  %v399 = vrot.slane %v248, 2
  %v400 = vor.u32 %v398, %v399
  %v401 = vsel %vm350, %v396, %v400
  %v402 = vrot.slane %v260, 1
  %v403 = vrot.slane %v256, 2
  %v404 = vor.u32 %v402, %v403
  %v405 = vsel %vm350, %v400, %v404
  %v406 = vrot.slane %v268, 1
  %v407 = vrot.slane %v264, 2
  %v408 = vor.u32 %v406, %v407
  %v409 = vsel %vm350, %v404, %v408
  %v410 = vrot.slane %v276, 1
  %v411 = vrot.slane %v272, 2
  %v412 = vor.u32 %v410, %v411
  %v413 = vsel %vm350, %v408, %v412
  %vm430 = vmand %vm298, %vm350
  %v431 = vsel %vm430, %v412, 0
  %vm432 = vcmask 1045504
  %v433 = vrot.slane %v135, 2
  %v434 = vrot.slane %v136, 2
  %v435 = vsel %vm432, %v433, %v434
  %v436 = vrot.slane %v137, 2
  %v437 = vsel %vm432, %v434, %v436
  %v438 = vrot.slane %v138, 2
  %v439 = vsel %vm432, %v436, %v438
  %v440 = vrot.slane %v139, 2
  %v441 = vsel %vm432, %v438, %v440
  %v442 = vrot.slane %v140, 2
  %v443 = vsel %vm432, %v440, %v442
  %v444 = vrot.slane %v141, 2
  %v445 = vsel %vm432, %v442, %v444
  %v446 = vrot.slane %v142, 2
  %v447 = vsel %vm432, %v444, %v446
  %v448 = vrot.slane %v143, 2
  %v449 = vsel %vm432, %v446, %v448
  %v450 = vrot.slane %v144, 2
  %v451 = vsel %vm432, %v448, %v450
  %v452 = vrot.slane %v145, 2
  %v453 = vsel %vm432, %v450, %v452
  %v454 = vrot.slane %v146, 2
  %v455 = vsel %vm432, %v452, %v454
  %v456 = vrot.slane %v147, 2
  %v457 = vsel %vm432, %v454, %v456
  %v458 = vrot.slane %v148, 2
  %v459 = vsel %vm432, %v456, %v458
  %v460 = vrot.slane %v149, 2
  %v461 = vsel %vm432, %v458, %v460
  %v462 = vrot.slane %v150, 2
  %v463 = vsel %vm432, %v460, %v462
  %vm479 = vcmask 1045504
  %v481 = vsel %vm479, %v462, 0
  %v499 = vld [vmem:[%s1] sm:$0xff]
  %v500 = vld [vmem:[%s1 + $0x8] sm:$0xff]
  %v501 = vld [vmem:[%s1 + $0x10] sm:$0xff]
  %v502 = vld [vmem:[%s1 + $0x18] sm:$0xff]
  %v503 = vld [vmem:[%s1 + $0x20] sm:$0xff]
  %v504 = vld [vmem:[%s1 + $0x28] sm:$0xff]
  %v505 = vld [vmem:[%s1 + $0x30] sm:$0xff]
  %v506 = vld [vmem:[%s1 + $0x38] sm:$0xff]
  %v507 = vld [vmem:[%s1 + $0x40] sm:$0xff]
  %v508 = vld [vmem:[%s1 + $0x48] sm:$0xff]
  %v509 = vld [vmem:[%s1 + $0x50] sm:$0xff]
  %v510 = vld [vmem:[%s1 + $0x58] sm:$0xff]
  %v511 = vld [vmem:[%s1 + $0x60] sm:$0xff]
  %v512 = vld [vmem:[%s1 + $0x68] sm:$0xff]
  %v513 = vld [vmem:[%s1 + $0x70] sm:$0xff]
  %v514 = vld [vmem:[%s1 + $0x78] sm:$0xff]
  %v515 = vld [vmem:[%s1 + $0x80] sm:$0xff]
  %v516 = vld [vmem:[%s1 + $0x88] sm:$0xff]
  %v517 = vld [vmem:[%s1 + $0x90] sm:$0xff]
  %v518 = vld [vmem:[%s1 + $0x98] sm:$0xff]
  %v519 = vld [vmem:[%s1 + $0xa0] sm:$0xff]
  %v520 = vld [vmem:[%s1 + $0xa8] sm:$0xff]
  %v521 = vld [vmem:[%s1 + $0xb0] sm:$0xff]
  %v522 = vld [vmem:[%s1 + $0xb8] sm:$0xff]
  %v523 = vld [vmem:[%s1 + $0xc0] sm:$0xff]
  %v524 = vld [vmem:[%s1 + $0xc8] sm:$0xff]
  %v525 = vld [vmem:[%s1 + $0xd0] sm:$0xff]
  %v526 = vld [vmem:[%s1 + $0xd8] sm:$0xff]
  %v527 = vld [vmem:[%s1 + $0xe0] sm:$0xff]
  %v528 = vld [vmem:[%s1 + $0xe8] sm:$0xff]
  %v529 = vld [vmem:[%s1 + $0xf0] sm:$0xff]
  %v530 = vld [vmem:[%s1 + $0xf8] sm:$0xff]
  %v531 = vld [vmem:[%s1 + $0x100] sm:$0xff]
  %v532 = vld [vmem:[%s1 + $0x108] sm:$0xff]
  %v533 = vld [vmem:[%s1 + $0x110] sm:$0xff]
  %v534 = vld [vmem:[%s1 + $0x118] sm:$0xff]
  %v535 = vld [vmem:[%s1 + $0x120] sm:$0xff]
  %v536 = vld [vmem:[%s1 + $0x128] sm:$0xff]
  %v537 = vld [vmem:[%s1 + $0x130] sm:$0xff]
  %v538 = vld [vmem:[%s1 + $0x138] sm:$0xff]
  %v539 = vld [vmem:[%s1 + $0x140] sm:$0xff]
  %v540 = vld [vmem:[%s1 + $0x148] sm:$0xff]
  %v541 = vld [vmem:[%s1 + $0x150] sm:$0xff]
  %v542 = vld [vmem:[%s1 + $0x158] sm:$0xff]
  %v543 = vld [vmem:[%s1 + $0x160] sm:$0xff]
  %v544 = vld [vmem:[%s1 + $0x168] sm:$0xff]
  %v545 = vld [vmem:[%s1 + $0x170] sm:$0xff]
  %v546 = vld [vmem:[%s1 + $0x178] sm:$0xff]
  %v547 = vld [vmem:[%s1 + $0x180] sm:$0xff]
  %v548 = vld [vmem:[%s1 + $0x188] sm:$0xff]
  %v549 = vld [vmem:[%s1 + $0x190] sm:$0xff]
  %v550 = vld [vmem:[%s1 + $0x198] sm:$0xff]
  %v551 = vld [vmem:[%s1 + $0x1a0] sm:$0xff]
  %v552 = vld [vmem:[%s1 + $0x1a8] sm:$0xff]
  %v553 = vld [vmem:[%s1 + $0x1b0] sm:$0xff]
  %v554 = vld [vmem:[%s1 + $0x1b8] sm:$0xff]
  %v555 = vld [vmem:[%s1 + $0x1c0] sm:$0xff]
  %v556 = vld [vmem:[%s1 + $0x1c8] sm:$0xff]
  %v557 = vld [vmem:[%s1 + $0x1d0] sm:$0xff]
  %v558 = vld [vmem:[%s1 + $0x1d8] sm:$0xff]
  %v559 = vld [vmem:[%s1 + $0x1e0] sm:$0xff]
  %v560 = vld [vmem:[%s1 + $0x1e8] sm:$0xff]
  %v561 = vld [vmem:[%s1 + $0x1f0] sm:$0xff]
  %v562 = vld [vmem:[%s1 + $0x1f8] sm:$0xff]
  %v563 = vld [vmem:[%s1 + $0x200] sm:$0xff]
  %v564 = vld [vmem:[%s1 + $0x208] sm:$0xff]
  %v565 = vld [vmem:[%s1 + $0x210] sm:$0xff]
  %v566 = vld [vmem:[%s1 + $0x218] sm:$0xff]
  %v567 = vld [vmem:[%s1 + $0x220] sm:$0xff]
  %v568 = vld [vmem:[%s1 + $0x228] sm:$0xff]
  %v569 = vld [vmem:[%s1 + $0x230] sm:$0xff]
  %v570 = vld [vmem:[%s1 + $0x238] sm:$0xff]
  %v571 = vld [vmem:[%s1 + $0x240] sm:$0xff]
  %v572 = vld [vmem:[%s1 + $0x248] sm:$0xff]
  %v573 = vld [vmem:[%s1 + $0x250] sm:$0xff]
  %v574 = vld [vmem:[%s1 + $0x258] sm:$0xff]
  %v575 = vld [vmem:[%s1 + $0x260] sm:$0xff]
  %v576 = vld [vmem:[%s1 + $0x268] sm:$0xff]
  %v577 = vld [vmem:[%s1 + $0x270] sm:$0xff]
  %v578 = vld [vmem:[%s1 + $0x278] sm:$0xff]
  %v659 = vunpack.c.l.b16 %v499
  %v660 = vunpack.c.h.b16 %v499
  %v661 = vunpack.c.l.b16 %v500
  %v662 = vunpack.c.h.b16 %v500
  %v663 = vunpack.c.l.b16 %v501
  %v664 = vunpack.c.h.b16 %v501
  %v665 = vunpack.c.l.b16 %v502
  %v666 = vunpack.c.h.b16 %v502
  %v667 = vunpack.c.l.b16 %v503
  %v668 = vunpack.c.h.b16 %v503
  %v669 = vunpack.c.l.b16 %v504
  %v670 = vunpack.c.h.b16 %v504
  %v671 = vunpack.c.l.b16 %v505
  %v672 = vunpack.c.h.b16 %v505
  %v673 = vunpack.c.l.b16 %v506
  %v674 = vunpack.c.h.b16 %v506
  %v675 = vunpack.c.l.b16 %v507
  %v676 = vunpack.c.h.b16 %v507
  %v677 = vunpack.c.l.b16 %v508
  %v678 = vunpack.c.h.b16 %v508
  %v679 = vunpack.c.l.b16 %v509
  %v680 = vunpack.c.h.b16 %v509
  %v681 = vunpack.c.l.b16 %v510
  %v682 = vunpack.c.h.b16 %v510
  %v683 = vunpack.c.l.b16 %v511
  %v684 = vunpack.c.h.b16 %v511
  %v685 = vunpack.c.l.b16 %v512
  %v686 = vunpack.c.h.b16 %v512
  %v687 = vunpack.c.l.b16 %v513
  %v688 = vunpack.c.h.b16 %v513
  %v689 = vunpack.c.l.b16 %v514
  %v690 = vunpack.c.h.b16 %v514
  %v691 = vunpack.c.l.b16 %v515
  %v692 = vunpack.c.h.b16 %v515
  %v693 = vunpack.c.l.b16 %v516
  %v694 = vunpack.c.h.b16 %v516
  %v695 = vunpack.c.l.b16 %v517
  %v696 = vunpack.c.h.b16 %v517
  %v697 = vunpack.c.l.b16 %v518
  %v698 = vunpack.c.h.b16 %v518
  %v699 = vunpack.c.l.b16 %v519
  %v700 = vunpack.c.h.b16 %v519
  %v701 = vunpack.c.l.b16 %v520
  %v702 = vunpack.c.h.b16 %v520
  %v703 = vunpack.c.l.b16 %v521
  %v704 = vunpack.c.h.b16 %v521
  %v705 = vunpack.c.l.b16 %v522
  %v706 = vunpack.c.h.b16 %v522
  %v707 = vunpack.c.l.b16 %v523
  %v708 = vunpack.c.h.b16 %v523
  %v709 = vunpack.c.l.b16 %v524
  %v710 = vunpack.c.h.b16 %v524
  %v711 = vunpack.c.l.b16 %v525
  %v712 = vunpack.c.h.b16 %v525
  %v713 = vunpack.c.l.b16 %v526
  %v714 = vunpack.c.h.b16 %v526
  %v715 = vunpack.c.l.b16 %v527
  %v716 = vunpack.c.h.b16 %v527
  %v717 = vunpack.c.l.b16 %v528
  %v718 = vunpack.c.h.b16 %v528
  %v719 = vunpack.c.l.b16 %v529
  %v720 = vunpack.c.h.b16 %v529
  %v721 = vunpack.c.l.b16 %v530
  %v722 = vunpack.c.h.b16 %v530
  %v723 = vunpack.c.l.b16 %v531
  %v724 = vunpack.c.h.b16 %v531
  %v725 = vunpack.c.l.b16 %v532
  %v726 = vunpack.c.h.b16 %v532
  %v727 = vunpack.c.l.b16 %v533
  %v728 = vunpack.c.h.b16 %v533
  %v729 = vunpack.c.l.b16 %v534
  %v730 = vunpack.c.h.b16 %v534
  %v731 = vunpack.c.l.b16 %v535
  %v732 = vunpack.c.h.b16 %v535
  %v733 = vunpack.c.l.b16 %v536
  %v734 = vunpack.c.h.b16 %v536
  %v735 = vunpack.c.l.b16 %v537
  %v736 = vunpack.c.h.b16 %v537
  %v737 = vunpack.c.l.b16 %v538
  %v738 = vunpack.c.h.b16 %v538
  %v739 = vunpack.c.l.b16 %v539
  %v740 = vunpack.c.h.b16 %v539
  %v741 = vunpack.c.l.b16 %v540
  %v742 = vunpack.c.h.b16 %v540
  %v743 = vunpack.c.l.b16 %v541
  %v744 = vunpack.c.h.b16 %v541
  %v745 = vunpack.c.l.b16 %v542
  %v746 = vunpack.c.h.b16 %v542
  %v747 = vunpack.c.l.b16 %v543
  %v748 = vunpack.c.h.b16 %v543
  %v749 = vunpack.c.l.b16 %v544
  %v750 = vunpack.c.h.b16 %v544
  %v751 = vunpack.c.l.b16 %v545
  %v752 = vunpack.c.h.b16 %v545
  %v753 = vunpack.c.l.b16 %v546
  %v754 = vunpack.c.h.b16 %v546
  %v755 = vunpack.c.l.b16 %v547
  %v756 = vunpack.c.h.b16 %v547
  %v757 = vunpack.c.l.b16 %v548
  %v758 = vunpack.c.h.b16 %v548
  %v759 = vunpack.c.l.b16 %v549
  %v760 = vunpack.c.h.b16 %v549
  %v761 = vunpack.c.l.b16 %v550
  %v762 = vunpack.c.h.b16 %v550
  %v763 = vunpack.c.l.b16 %v551
  %v764 = vunpack.c.h.b16 %v551
  %v765 = vunpack.c.l.b16 %v552
  %v766 = vunpack.c.h.b16 %v552
  %v767 = vunpack.c.l.b16 %v553
  %v768 = vunpack.c.h.b16 %v553
  %v769 = vunpack.c.l.b16 %v554
  %v770 = vunpack.c.h.b16 %v554
  %v771 = vunpack.c.l.b16 %v555
  %v772 = vunpack.c.h.b16 %v555
  %v773 = vunpack.c.l.b16 %v556
  %v774 = vunpack.c.h.b16 %v556
  %v775 = vunpack.c.l.b16 %v557
  %v776 = vunpack.c.h.b16 %v557
  %v777 = vunpack.c.l.b16 %v558
  %v778 = vunpack.c.h.b16 %v558
  %v779 = vunpack.c.l.b16 %v559
  %v780 = vunpack.c.h.b16 %v559
  %v781 = vunpack.c.l.b16 %v560
  %v782 = vunpack.c.h.b16 %v560
  %v783 = vunpack.c.l.b16 %v561
  %v784 = vunpack.c.h.b16 %v561
  %v785 = vunpack.c.l.b16 %v562
  %v786 = vunpack.c.h.b16 %v562
  %v787 = vunpack.c.l.b16 %v563
  %v788 = vunpack.c.h.b16 %v563
  %v789 = vunpack.c.l.b16 %v564
  %v790 = vunpack.c.h.b16 %v564
  %v791 = vunpack.c.l.b16 %v565
  %v792 = vunpack.c.h.b16 %v565
  %v793 = vunpack.c.l.b16 %v566
  %v794 = vunpack.c.h.b16 %v566
  %v795 = vunpack.c.l.b16 %v567
  %v796 = vunpack.c.h.b16 %v567
  %v797 = vunpack.c.l.b16 %v568
  %v798 = vunpack.c.h.b16 %v568
  %v799 = vunpack.c.l.b16 %v569
  %v800 = vunpack.c.h.b16 %v569
  %v801 = vunpack.c.l.b16 %v570
  %v802 = vunpack.c.h.b16 %v570
  %v803 = vunpack.c.l.b16 %v571
  %v804 = vunpack.c.h.b16 %v571
  %v805 = vunpack.c.l.b16 %v572
  %v806 = vunpack.c.h.b16 %v572
  %v807 = vunpack.c.l.b16 %v573
  %v808 = vunpack.c.h.b16 %v573
  %v809 = vunpack.c.l.b16 %v574
  %v810 = vunpack.c.h.b16 %v574
  %v811 = vunpack.c.l.b16 %v575
  %v812 = vunpack.c.h.b16 %v575
  %v813 = vunpack.c.l.b16 %v576
  %v814 = vunpack.c.h.b16 %v576
  %v815 = vunpack.c.l.b16 %v577
  %v816 = vunpack.c.h.b16 %v577
  %v817 = vunpack.c.l.b16 %v578
  %v818 = vunpack.c.h.b16 %v578
  %v819 = vpack.c.b16 %v661, %v659
  %v820 = vpack.c.b16 %v662, %v660
  %v821 = vpack.c.b16 %v665, %v663
  %v822 = vpack.c.b16 %v666, %v664
  %v823 = vpack.c.b16 %v669, %v667
  %v824 = vpack.c.b16 %v670, %v668
  %v825 = vpack.c.b16 %v673, %v671
  %v826 = vpack.c.b16 %v674, %v672
  %v827 = vpack.c.b16 %v677, %v675
  %v828 = vpack.c.b16 %v678, %v676
  %v829 = vpack.c.b16 %v681, %v679
  %v830 = vpack.c.b16 %v682, %v680
  %v831 = vpack.c.b16 %v685, %v683
  %v832 = vpack.c.b16 %v686, %v684
  %v833 = vpack.c.b16 %v689, %v687
  %v834 = vpack.c.b16 %v690, %v688
  %v835 = vpack.c.b16 %v693, %v691
  %v836 = vpack.c.b16 %v694, %v692
  %v837 = vpack.c.b16 %v697, %v695
  %v838 = vpack.c.b16 %v698, %v696
  %v839 = vpack.c.b16 %v701, %v699
  %v840 = vpack.c.b16 %v702, %v700
  %v841 = vpack.c.b16 %v705, %v703
  %v842 = vpack.c.b16 %v706, %v704
  %v843 = vpack.c.b16 %v709, %v707
  %v844 = vpack.c.b16 %v710, %v708
  %v845 = vpack.c.b16 %v713, %v711
  %v846 = vpack.c.b16 %v714, %v712
  %v847 = vpack.c.b16 %v717, %v715
  %v848 = vpack.c.b16 %v718, %v716
  %v849 = vpack.c.b16 %v721, %v719
  %v850 = vpack.c.b16 %v722, %v720
  %v851 = vpack.c.b16 %v725, %v723
  %v852 = vpack.c.b16 %v726, %v724
  %v853 = vpack.c.b16 %v729, %v727
  %v854 = vpack.c.b16 %v730, %v728
  %v855 = vpack.c.b16 %v733, %v731
  %v856 = vpack.c.b16 %v734, %v732
  %v857 = vpack.c.b16 %v737, %v735
  %v858 = vpack.c.b16 %v738, %v736
  %v859 = vpack.c.b16 %v741, %v739
  %v860 = vpack.c.b16 %v742, %v740
  %v861 = vpack.c.b16 %v745, %v743
  %v862 = vpack.c.b16 %v746, %v744
  %v863 = vpack.c.b16 %v749, %v747
  %v864 = vpack.c.b16 %v750, %v748
  %v865 = vpack.c.b16 %v753, %v751
  %v866 = vpack.c.b16 %v754, %v752
  %v867 = vpack.c.b16 %v757, %v755
  %v868 = vpack.c.b16 %v758, %v756
  %v869 = vpack.c.b16 %v761, %v759
  %v870 = vpack.c.b16 %v762, %v760
  %v871 = vpack.c.b16 %v765, %v763
  %v872 = vpack.c.b16 %v766, %v764
  %v873 = vpack.c.b16 %v769, %v767
  %v874 = vpack.c.b16 %v770, %v768
  %v875 = vpack.c.b16 %v773, %v771
  %v876 = vpack.c.b16 %v774, %v772
  %v877 = vpack.c.b16 %v777, %v775
  %v878 = vpack.c.b16 %v778, %v776
  %v879 = vpack.c.b16 %v781, %v779
  %v880 = vpack.c.b16 %v782, %v780
  %v881 = vpack.c.b16 %v785, %v783
  %v882 = vpack.c.b16 %v786, %v784
  %v883 = vpack.c.b16 %v789, %v787
  %v884 = vpack.c.b16 %v790, %v788
  %v885 = vpack.c.b16 %v793, %v791
  %v886 = vpack.c.b16 %v794, %v792
  %v887 = vpack.c.b16 %v797, %v795
  %v888 = vpack.c.b16 %v798, %v796
  %v889 = vpack.c.b16 %v801, %v799
  %v890 = vpack.c.b16 %v802, %v800
  %v891 = vpack.c.b16 %v805, %v803
  %v892 = vpack.c.b16 %v806, %v804
  %v893 = vpack.c.b16 %v809, %v807
  %v894 = vpack.c.b16 %v810, %v808
  %v895 = vpack.c.b16 %v813, %v811
  %v896 = vpack.c.b16 %v814, %v812
  %v897 = vpack.c.b16 %v817, %v815
  %v898 = vpack.c.b16 %v818, %v816
  %979 = vmatprep.subr.bf16.mxu0 %v820
  %980 = vmatpush1.bf16.msra.mxu0 %v819
  %981 = vmatprep.subr.bf16.mxu0 %v822
  %982 = vmatpush1.bf16.msra.mxu0 %v821
  %983 = vmatprep.subr.bf16.mxu0 %v824
  %984 = vmatpush1.bf16.msra.mxu0 %v823
  %985 = vmatprep.subr.bf16.mxu0 %v826
  %986 = vmatpush1.bf16.msra.mxu0 %v825
  %987 = vmatprep.subr.bf16.mxu0 %v828
  %988 = vmatpush1.bf16.msra.mxu0 %v827
  %989 = vmatprep.subr.bf16.mxu0 %v830
  %990 = vmatpush1.bf16.msra.mxu0 %v829
  %991 = vmatprep.subr.bf16.mxu0 %v832
  %992 = vmatpush1.bf16.msra.mxu0 %v831
  %993 = vmatprep.subr.bf16.mxu0 %v834
  %994 = vmatpush1.bf16.msra.mxu0 %v833
  %995 = vmatprep.subr.bf16.mxu0 %v836
  %996 = vmatpush1.bf16.msra.mxu0 %v835
  %997 = vmatprep.subr.bf16.mxu0 %v838
  %998 = vmatpush1.bf16.msra.mxu0 %v837
  %999 = vmatprep.subr.bf16.mxu0 %v840
  %1000 = vmatpush1.bf16.msra.mxu0 %v839
  %1001 = vmatprep.subr.bf16.mxu0 %v842
  %1002 = vmatpush1.bf16.msra.mxu0 %v841
  %1003 = vmatprep.subr.bf16.mxu0 %v844
  %1004 = vmatpush1.bf16.msra.mxu0 %v843
  %1005 = vmatprep.subr.bf16.mxu0 %v846
  %1006 = vmatpush1.bf16.msra.mxu0 %v845
  %1007 = vmatprep.subr.bf16.mxu0 %v848
  %1008 = vmatpush1.bf16.msra.mxu0 %v847
  %1009 = vmatprep.subr.bf16.mxu0 %v850
  %1010 = vmatpush1.bf16.msra.mxu0 %v849
  %1011 = vmatprep.mubr.bf16.mxu0 %v163
  %1012 = vmatmul.mubr.bf16.gmra.mrb[0].mxu0 %v135
  %v1013 = vpop.f32.mrb[0].mxu0
  %v1014 = vadd.f32 0.0, %v1013
  %v1015 = vpop.f32.mrb[0].mxu0
  %v1016 = vadd.f32 0.0, %v1015
  %v1017 = vpop.f32.mrb[0].mxu0
  %v1018 = vadd.f32 0.0, %v1017
  %v1019 = vpop.f32.mrb[0].mxu0
  %v1020 = vadd.f32 0.0, %v1019
  %1021 = vmatprep.mubr.bf16.mxu0 %v171
  %1022 = vmatmul.mubr.bf16.gmra.mrb[0].mxu0 %v136
  %v1023 = vpop.f32.mrb[0].mxu0
  %v1024 = vadd.f32 0.0, %v1023
  %v1025 = vpop.f32.mrb[0].mxu0
  %v1026 = vadd.f32 0.0, %v1025
  %v1027 = vpop.f32.mrb[0].mxu0
  %v1028 = vadd.f32 0.0, %v1027
  %v1029 = vpop.f32.mrb[0].mxu0
  %v1030 = vadd.f32 0.0, %v1029
  %1031 = vmatprep.mubr.bf16.mxu0 %v179
  %1032 = vmatmul.mubr.bf16.gmra.mrb[0].mxu0 %v137
  %v1033 = vpop.f32.mrb[0].mxu0
  %v1034 = vadd.f32 0.0, %v1033
  %v1035 = vpop.f32.mrb[0].mxu0
  %v1036 = vadd.f32 0.0, %v1035
  %v1037 = vpop.f32.mrb[0].mxu0
  %v1038 = vadd.f32 0.0, %v1037
  %v1039 = vpop.f32.mrb[0].mxu0
  %v1040 = vadd.f32 0.0, %v1039
  %1041 = vmatprep.mubr.bf16.mxu0 %v187
  %1042 = vmatmul.mubr.bf16.gmra.mrb[0].mxu0 %v138
  %v1043 = vpop.f32.mrb[0].mxu0
  %v1044 = vadd.f32 0.0, %v1043
  %v1045 = vpop.f32.mrb[0].mxu0
  %v1046 = vadd.f32 0.0, %v1045
  %v1047 = vpop.f32.mrb[0].mxu0
  %v1048 = vadd.f32 0.0, %v1047
  %v1049 = vpop.f32.mrb[0].mxu0
  %v1050 = vadd.f32 0.0, %v1049
  %1051 = vmatprep.mubr.bf16.mxu0 %v195
  %1052 = vmatmul.mubr.bf16.gmra.mrb[0].mxu0 %v139
  %v1053 = vpop.f32.mrb[0].mxu0
  %v1054 = vadd.f32 0.0, %v1053
  %v1055 = vpop.f32.mrb[0].mxu0
  %v1056 = vadd.f32 0.0, %v1055
  %v1057 = vpop.f32.mrb[0].mxu0
  %v1058 = vadd.f32 0.0, %v1057
  %v1059 = vpop.f32.mrb[0].mxu0
  %v1060 = vadd.f32 0.0, %v1059
  %1061 = vmatprep.mubr.bf16.mxu0 %v203
  %1062 = vmatmul.mubr.bf16.gmra.mrb[0].mxu0 %v140
  %v1063 = vpop.f32.mrb[0].mxu0
  %v1064 = vadd.f32 0.0, %v1063
  %v1065 = vpop.f32.mrb[0].mxu0
  %v1066 = vadd.f32 0.0, %v1065
  %v1067 = vpop.f32.mrb[0].mxu0
  %v1068 = vadd.f32 0.0, %v1067
  %v1069 = vpop.f32.mrb[0].mxu0
  %v1070 = vadd.f32 0.0, %v1069
  %1071 = vmatprep.mubr.bf16.mxu0 %v211
  %1072 = vmatmul.mubr.bf16.gmra.mrb[0].mxu0 %v141
  %v1073 = vpop.f32.mrb[0].mxu0
  %v1074 = vadd.f32 0.0, %v1073
  %v1075 = vpop.f32.mrb[0].mxu0
  %v1076 = vadd.f32 0.0, %v1075
  %v1077 = vpop.f32.mrb[0].mxu0
  %v1078 = vadd.f32 0.0, %v1077
  %v1079 = vpop.f32.mrb[0].mxu0
  %v1080 = vadd.f32 0.0, %v1079
  %1081 = vmatprep.mubr.bf16.mxu0 %v219
  %1082 = vmatmul.mubr.bf16.gmra.mrb[0].mxu0 %v142
  %v1083 = vpop.f32.mrb[0].mxu0
  %v1084 = vadd.f32 0.0, %v1083
  %v1085 = vpop.f32.mrb[0].mxu0
  %v1086 = vadd.f32 0.0, %v1085
  %v1087 = vpop.f32.mrb[0].mxu0
  %v1088 = vadd.f32 0.0, %v1087
  %v1089 = vpop.f32.mrb[0].mxu0
  %v1090 = vadd.f32 0.0, %v1089
  %1091 = vmatprep.mubr.bf16.mxu0 %v227
  %1092 = vmatmul.mubr.bf16.gmra.mrb[0].mxu0 %v143
  %v1093 = vpop.f32.mrb[0].mxu0
  %v1094 = vadd.f32 0.0, %v1093
  %v1095 = vpop.f32.mrb[0].mxu0
  %v1096 = vadd.f32 0.0, %v1095
  %v1097 = vpop.f32.mrb[0].mxu0
  %v1098 = vadd.f32 0.0, %v1097
  %v1099 = vpop.f32.mrb[0].mxu0
  %v1100 = vadd.f32 0.0, %v1099
  %1101 = vmatprep.mubr.bf16.mxu0 %v235
  %1102 = vmatmul.mubr.bf16.gmra.mrb[0].mxu0 %v144
  %v1103 = vpop.f32.mrb[0].mxu0
  %v1104 = vadd.f32 0.0, %v1103
  %v1105 = vpop.f32.mrb[0].mxu0
  %v1106 = vadd.f32 0.0, %v1105
  %v1107 = vpop.f32.mrb[0].mxu0
  %v1108 = vadd.f32 0.0, %v1107
  %v1109 = vpop.f32.mrb[0].mxu0
  %v1110 = vadd.f32 0.0, %v1109
  %1111 = vmatprep.mubr.bf16.mxu0 %v243
  %1112 = vmatmul.mubr.bf16.gmra.mrb[0].mxu0 %v145
  %v1113 = vpop.f32.mrb[0].mxu0
  %v1114 = vadd.f32 0.0, %v1113
  %v1115 = vpop.f32.mrb[0].mxu0
  %v1116 = vadd.f32 0.0, %v1115
  %v1117 = vpop.f32.mrb[0].mxu0
  %v1118 = vadd.f32 0.0, %v1117
  %v1119 = vpop.f32.mrb[0].mxu0
  %v1120 = vadd.f32 0.0, %v1119
  %1121 = vmatprep.mubr.bf16.mxu0 %v251
  %1122 = vmatmul.mubr.bf16.gmra.mrb[0].mxu0 %v146
  %v1123 = vpop.f32.mrb[0].mxu0
  %v1124 = vadd.f32 0.0, %v1123
  %v1125 = vpop.f32.mrb[0].mxu0
  %v1126 = vadd.f32 0.0, %v1125
  %v1127 = vpop.f32.mrb[0].mxu0
  %v1128 = vadd.f32 0.0, %v1127
  %v1129 = vpop.f32.mrb[0].mxu0
  %v1130 = vadd.f32 0.0, %v1129
  %1131 = vmatprep.mubr.bf16.mxu0 %v259
  %1132 = vmatmul.mubr.bf16.gmra.mrb[0].mxu0 %v147
  %v1133 = vpop.f32.mrb[0].mxu0
  %v1134 = vadd.f32 0.0, %v1133
  %v1135 = vpop.f32.mrb[0].mxu0
  %v1136 = vadd.f32 0.0, %v1135
  %v1137 = vpop.f32.mrb[0].mxu0
  %v1138 = vadd.f32 0.0, %v1137
  %v1139 = vpop.f32.mrb[0].mxu0
  %v1140 = vadd.f32 0.0, %v1139
  %1141 = vmatprep.mubr.bf16.mxu0 %v267
  %1142 = vmatmul.mubr.bf16.gmra.mrb[0].mxu0 %v148
  %v1143 = vpop.f32.mrb[0].mxu0
  %v1144 = vadd.f32 0.0, %v1143
  %v1145 = vpop.f32.mrb[0].mxu0
  %v1146 = vadd.f32 0.0, %v1145
  %v1147 = vpop.f32.mrb[0].mxu0
  %v1148 = vadd.f32 0.0, %v1147
  %v1149 = vpop.f32.mrb[0].mxu0
  %v1150 = vadd.f32 0.0, %v1149
  %1151 = vmatprep.mubr.bf16.mxu0 %v275
  %1152 = vmatmul.mubr.bf16.gmra.mrb[0].mxu0 %v149
  %v1153 = vpop.f32.mrb[0].mxu0
  %v1154 = vadd.f32 0.0, %v1153
  %v1155 = vpop.f32.mrb[0].mxu0
  %v1156 = vadd.f32 0.0, %v1155
  %v1157 = vpop.f32.mrb[0].mxu0
  %v1158 = vadd.f32 0.0, %v1157
  %v1159 = vpop.f32.mrb[0].mxu0
  %v1160 = vadd.f32 0.0, %v1159
  %1161 = vmatprep.mubr.bf16.mxu0 %v297
  %1162 = vmatmul.mubr.bf16.gmra.mrb[0].mxu0 %v150
  %v1163 = vpop.f32.mrb[0].mxu0
  %v1164 = vadd.f32 0.0, %v1163
  %v1165 = vpop.f32.mrb[0].mxu0
  %v1166 = vadd.f32 0.0, %v1165
  %v1167 = vpop.f32.mrb[0].mxu0
  %v1168 = vadd.f32 0.0, %v1167
  %v1169 = vpop.f32.mrb[0].mxu0
  %v1170 = vadd.f32 0.0, %v1169
  %1171 = vdwg.mxu0
  %1172 = vmatprep.subr.bf16.mxu0 %v852
  %1173 = vmatpush1.bf16.msra.mxu0 %v851
  %1174 = vmatprep.subr.bf16.mxu0 %v854
  %1175 = vmatpush1.bf16.msra.mxu0 %v853
  %1176 = vmatprep.subr.bf16.mxu0 %v856
  %1177 = vmatpush1.bf16.msra.mxu0 %v855
  %1178 = vmatprep.subr.bf16.mxu0 %v858
  %1179 = vmatpush1.bf16.msra.mxu0 %v857
  %1180 = vmatprep.subr.bf16.mxu0 %v860
  %1181 = vmatpush1.bf16.msra.mxu0 %v859
  %1182 = vmatprep.subr.bf16.mxu0 %v862
  %1183 = vmatpush1.bf16.msra.mxu0 %v861
  %1184 = vmatprep.subr.bf16.mxu0 %v864
  %1185 = vmatpush1.bf16.msra.mxu0 %v863
  %1186 = vmatprep.subr.bf16.mxu0 %v866
  %1187 = vmatpush1.bf16.msra.mxu0 %v865
  %1188 = vmatprep.subr.bf16.mxu0 %v868
  %1189 = vmatpush1.bf16.msra.mxu0 %v867
  %1190 = vmatprep.subr.bf16.mxu0 %v870
  %1191 = vmatpush1.bf16.msra.mxu0 %v869
  %1192 = vmatprep.subr.bf16.mxu0 %v872
  %1193 = vmatpush1.bf16.msra.mxu0 %v871
  %1194 = vmatprep.subr.bf16.mxu0 %v874
  %1195 = vmatpush1.bf16.msra.mxu0 %v873
  %1196 = vmatprep.subr.bf16.mxu0 %v876
  %1197 = vmatpush1.bf16.msra.mxu0 %v875
  %1198 = vmatprep.subr.bf16.mxu0 %v878
  %1199 = vmatpush1.bf16.msra.mxu0 %v877
  %1200 = vmatprep.subr.bf16.mxu0 %v880
  %1201 = vmatpush1.bf16.msra.mxu0 %v879
  %1202 = vmatprep.subr.bf16.mxu0 %v882
  %1203 = vmatpush1.bf16.msra.mxu0 %v881
  %1204 = vmatprep.mubr.bf16.mxu0 %v357
  %1205 = vmatmul.mubr.bf16.gmra.mrb[0].mxu0 %v301
  %v1206 = vpop.f32.mrb[0].mxu0
  %v1207 = vadd.f32 %v1014, %v1206
  %v1208 = vpop.f32.mrb[0].mxu0
  %v1209 = vadd.f32 %v1016, %v1208
  %v1210 = vpop.f32.mrb[0].mxu0
  %v1211 = vadd.f32 %v1018, %v1210
  %v1212 = vpop.f32.mrb[0].mxu0
  %v1213 = vadd.f32 %v1020, %v1212
  %1214 = vmatprep.mubr.bf16.mxu0 %v361
  %1215 = vmatmul.mubr.bf16.gmra.mrb[0].mxu0 %v303
  %v1216 = vpop.f32.mrb[0].mxu0
  %v1217 = vadd.f32 %v1024, %v1216
  %v1218 = vpop.f32.mrb[0].mxu0
  %v1219 = vadd.f32 %v1026, %v1218
  %v1220 = vpop.f32.mrb[0].mxu0
  %v1221 = vadd.f32 %v1028, %v1220
  %v1222 = vpop.f32.mrb[0].mxu0
  %v1223 = vadd.f32 %v1030, %v1222
  %1224 = vmatprep.mubr.bf16.mxu0 %v365
  %1225 = vmatmul.mubr.bf16.gmra.mrb[0].mxu0 %v305
  %v1226 = vpop.f32.mrb[0].mxu0
  %v1227 = vadd.f32 %v1034, %v1226
  %v1228 = vpop.f32.mrb[0].mxu0
  %v1229 = vadd.f32 %v1036, %v1228
  %v1230 = vpop.f32.mrb[0].mxu0
  %v1231 = vadd.f32 %v1038, %v1230
  %v1232 = vpop.f32.mrb[0].mxu0
  %v1233 = vadd.f32 %v1040, %v1232
  %1234 = vmatprep.mubr.bf16.mxu0 %v369
  %1235 = vmatmul.mubr.bf16.gmra.mrb[0].mxu0 %v307
  %v1236 = vpop.f32.mrb[0].mxu0
  %v1237 = vadd.f32 %v1044, %v1236
  %v1238 = vpop.f32.mrb[0].mxu0
  %v1239 = vadd.f32 %v1046, %v1238
  %v1240 = vpop.f32.mrb[0].mxu0
  %v1241 = vadd.f32 %v1048, %v1240
  %v1242 = vpop.f32.mrb[0].mxu0
  %v1243 = vadd.f32 %v1050, %v1242
  %1244 = vmatprep.mubr.bf16.mxu0 %v373
  %1245 = vmatmul.mubr.bf16.gmra.mrb[0].mxu0 %v309
  %v1246 = vpop.f32.mrb[0].mxu0
  %v1247 = vadd.f32 %v1054, %v1246
  %v1248 = vpop.f32.mrb[0].mxu0
  %v1249 = vadd.f32 %v1056, %v1248
  %v1250 = vpop.f32.mrb[0].mxu0
  %v1251 = vadd.f32 %v1058, %v1250
  %v1252 = vpop.f32.mrb[0].mxu0
  %v1253 = vadd.f32 %v1060, %v1252
  %1254 = vmatprep.mubr.bf16.mxu0 %v377
  %1255 = vmatmul.mubr.bf16.gmra.mrb[0].mxu0 %v311
  %v1256 = vpop.f32.mrb[0].mxu0
  %v1257 = vadd.f32 %v1064, %v1256
  %v1258 = vpop.f32.mrb[0].mxu0
  %v1259 = vadd.f32 %v1066, %v1258
  %v1260 = vpop.f32.mrb[0].mxu0
  %v1261 = vadd.f32 %v1068, %v1260
  %v1262 = vpop.f32.mrb[0].mxu0
  %v1263 = vadd.f32 %v1070, %v1262
  %1264 = vmatprep.mubr.bf16.mxu0 %v381
  %1265 = vmatmul.mubr.bf16.gmra.mrb[0].mxu0 %v313
  %v1266 = vpop.f32.mrb[0].mxu0
  %v1267 = vadd.f32 %v1074, %v1266
  %v1268 = vpop.f32.mrb[0].mxu0
  %v1269 = vadd.f32 %v1076, %v1268
  %v1270 = vpop.f32.mrb[0].mxu0
  %v1271 = vadd.f32 %v1078, %v1270
  %v1272 = vpop.f32.mrb[0].mxu0
  %v1273 = vadd.f32 %v1080, %v1272
  %1274 = vmatprep.mubr.bf16.mxu0 %v385
  %1275 = vmatmul.mubr.bf16.gmra.mrb[0].mxu0 %v315
  %v1276 = vpop.f32.mrb[0].mxu0
  %v1277 = vadd.f32 %v1084, %v1276
  %v1278 = vpop.f32.mrb[0].mxu0
  %v1279 = vadd.f32 %v1086, %v1278
  %v1280 = vpop.f32.mrb[0].mxu0
  %v1281 = vadd.f32 %v1088, %v1280
  %v1282 = vpop.f32.mrb[0].mxu0
  %v1283 = vadd.f32 %v1090, %v1282
  %1284 = vmatprep.mubr.bf16.mxu0 %v389
  %1285 = vmatmul.mubr.bf16.gmra.mrb[0].mxu0 %v317
  %v1286 = vpop.f32.mrb[0].mxu0
  %v1287 = vadd.f32 %v1094, %v1286
  %v1288 = vpop.f32.mrb[0].mxu0
  %v1289 = vadd.f32 %v1096, %v1288
  %v1290 = vpop.f32.mrb[0].mxu0
  %v1291 = vadd.f32 %v1098, %v1290
  %v1292 = vpop.f32.mrb[0].mxu0
  %v1293 = vadd.f32 %v1100, %v1292
  %1294 = vmatprep.mubr.bf16.mxu0 %v393
  %1295 = vmatmul.mubr.bf16.gmra.mrb[0].mxu0 %v319
  %v1296 = vpop.f32.mrb[0].mxu0
  %v1297 = vadd.f32 %v1104, %v1296
  %v1298 = vpop.f32.mrb[0].mxu0
  %v1299 = vadd.f32 %v1106, %v1298
  %v1300 = vpop.f32.mrb[0].mxu0
  %v1301 = vadd.f32 %v1108, %v1300
  %v1302 = vpop.f32.mrb[0].mxu0
  %v1303 = vadd.f32 %v1110, %v1302
  %1304 = vmatprep.mubr.bf16.mxu0 %v397
  %1305 = vmatmul.mubr.bf16.gmra.mrb[0].mxu0 %v321
  %v1306 = vpop.f32.mrb[0].mxu0
  %v1307 = vadd.f32 %v1114, %v1306
  %v1308 = vpop.f32.mrb[0].mxu0
  %v1309 = vadd.f32 %v1116, %v1308
  %v1310 = vpop.f32.mrb[0].mxu0
  %v1311 = vadd.f32 %v1118, %v1310
  %v1312 = vpop.f32.mrb[0].mxu0
  %v1313 = vadd.f32 %v1120, %v1312
  %1314 = vmatprep.mubr.bf16.mxu0 %v401
  %1315 = vmatmul.mubr.bf16.gmra.mrb[0].mxu0 %v323
  %v1316 = vpop.f32.mrb[0].mxu0
  %v1317 = vadd.f32 %v1124, %v1316
  %v1318 = vpop.f32.mrb[0].mxu0
  %v1319 = vadd.f32 %v1126, %v1318
  %v1320 = vpop.f32.mrb[0].mxu0
  %v1321 = vadd.f32 %v1128, %v1320
  %v1322 = vpop.f32.mrb[0].mxu0
  %v1323 = vadd.f32 %v1130, %v1322
  %1324 = vmatprep.mubr.bf16.mxu0 %v405
  %1325 = vmatmul.mubr.bf16.gmra.mrb[0].mxu0 %v325
  %v1326 = vpop.f32.mrb[0].mxu0
  %v1327 = vadd.f32 %v1134, %v1326
  %v1328 = vpop.f32.mrb[0].mxu0
  %v1329 = vadd.f32 %v1136, %v1328
  %v1330 = vpop.f32.mrb[0].mxu0
  %v1331 = vadd.f32 %v1138, %v1330
  %v1332 = vpop.f32.mrb[0].mxu0
  %v1333 = vadd.f32 %v1140, %v1332
  %1334 = vmatprep.mubr.bf16.mxu0 %v409
  %1335 = vmatmul.mubr.bf16.gmra.mrb[0].mxu0 %v327
  %v1336 = vpop.f32.mrb[0].mxu0
  %v1337 = vadd.f32 %v1144, %v1336
  %v1338 = vpop.f32.mrb[0].mxu0
  %v1339 = vadd.f32 %v1146, %v1338
  %v1340 = vpop.f32.mrb[0].mxu0
  %v1341 = vadd.f32 %v1148, %v1340
  %v1342 = vpop.f32.mrb[0].mxu0
  %v1343 = vadd.f32 %v1150, %v1342
  %1344 = vmatprep.mubr.bf16.mxu0 %v413
  %1345 = vmatmul.mubr.bf16.gmra.mrb[0].mxu0 %v329
  %v1346 = vpop.f32.mrb[0].mxu0
  %v1347 = vadd.f32 %v1154, %v1346
  %v1348 = vpop.f32.mrb[0].mxu0
  %v1349 = vadd.f32 %v1156, %v1348
  %v1350 = vpop.f32.mrb[0].mxu0
  %v1351 = vadd.f32 %v1158, %v1350
  %v1352 = vpop.f32.mrb[0].mxu0
  %v1353 = vadd.f32 %v1160, %v1352
  %1354 = vmatprep.mubr.bf16.mxu0 %v431
  %1355 = vmatmul.mubr.bf16.gmra.mrb[0].mxu0 %v348
  %v1356 = vpop.f32.mrb[0].mxu0
  %v1357 = vadd.f32 %v1164, %v1356
  %v1358 = vpop.f32.mrb[0].mxu0
  %v1359 = vadd.f32 %v1166, %v1358
  %v1360 = vpop.f32.mrb[0].mxu0
  %v1361 = vadd.f32 %v1168, %v1360
  %v1362 = vpop.f32.mrb[0].mxu0
  %v1363 = vadd.f32 %v1170, %v1362
  %1364 = vdwg.mxu0
  %1365 = vmatprep.subr.bf16.mxu0 %v884
  %1366 = vmatpush1.bf16.msra.mxu0 %v883
  %1367 = vmatprep.subr.bf16.mxu0 %v886
  %1368 = vmatpush1.bf16.msra.mxu0 %v885
  %1369 = vmatprep.subr.bf16.mxu0 %v888
  %1370 = vmatpush1.bf16.msra.mxu0 %v887
  %1371 = vmatprep.subr.bf16.mxu0 %v890
  %1372 = vmatpush1.bf16.msra.mxu0 %v889
  %1373 = vmatprep.subr.bf16.mxu0 %v892
  %1374 = vmatpush1.bf16.msra.mxu0 %v891
  %1375 = vmatprep.subr.bf16.mxu0 %v894
  %1376 = vmatpush1.bf16.msra.mxu0 %v893
  %1377 = vmatprep.subr.bf16.mxu0 %v896
  %1378 = vmatpush1.bf16.msra.mxu0 %v895
  %1379 = vmatprep.subr.bf16.mxu0 %v898
  %1380 = vmatpush1.bf16.msra.mxu0 %v897
  %1381 = vmatprep.subr.bf16.mxu0 0
  %1382 = vmatpush1.bf16.msra.mxu0 0
  %1383 = vmatprep.subr.bf16.mxu0 0
  %1384 = vmatpush1.bf16.msra.mxu0 0
  %1385 = vmatprep.subr.bf16.mxu0 0
  %1386 = vmatpush1.bf16.msra.mxu0 0
  %1387 = vmatprep.subr.bf16.mxu0 0
  %1388 = vmatpush1.bf16.msra.mxu0 0
  %1389 = vmatprep.subr.bf16.mxu0 0
  %1390 = vmatpush1.bf16.msra.mxu0 0
  %1391 = vmatprep.subr.bf16.mxu0 0
  %1392 = vmatpush1.bf16.msra.mxu0 0
  %1393 = vmatprep.subr.bf16.mxu0 0
  %1394 = vmatpush1.bf16.msra.mxu0 0
  %1395 = vmatprep.subr.bf16.mxu0 0
  %1396 = vmatpush1.bf16.msra.mxu0 0
  %1397 = vmatprep.mubr.bf16.mxu0 0
  %1398 = vmatmul.mubr.bf16.gmra.mrb[0].mxu0 %v435
  %v1399 = vpop.f32.mrb[0].mxu0
  %v1400 = vadd.f32 %v1207, %v1399
  %v1401 = vpop.f32.mrb[0].mxu0
  %v1402 = vadd.f32 %v1209, %v1401
  %v1403 = vpop.f32.mrb[0].mxu0
  %v1404 = vadd.f32 %v1211, %v1403
  %v1405 = vpop.f32.mrb[0].mxu0
  %v1406 = vadd.f32 %v1213, %v1405
  %1407 = vmatprep.mubr.bf16.mxu0 0
  %1408 = vmatmul.mubr.bf16.gmra.mrb[0].mxu0 %v437
  %v1409 = vpop.f32.mrb[0].mxu0
  %v1410 = vadd.f32 %v1217, %v1409
  %v1411 = vpop.f32.mrb[0].mxu0
  %v1412 = vadd.f32 %v1219, %v1411
  %v1413 = vpop.f32.mrb[0].mxu0
  %v1414 = vadd.f32 %v1221, %v1413
  %v1415 = vpop.f32.mrb[0].mxu0
  %v1416 = vadd.f32 %v1223, %v1415
  %1417 = vmatprep.mubr.bf16.mxu0 0
  %1418 = vmatmul.mubr.bf16.gmra.mrb[0].mxu0 %v439
  %v1419 = vpop.f32.mrb[0].mxu0
  %v1420 = vadd.f32 %v1227, %v1419
  %v1421 = vpop.f32.mrb[0].mxu0
  %v1422 = vadd.f32 %v1229, %v1421
  %v1423 = vpop.f32.mrb[0].mxu0
  %v1424 = vadd.f32 %v1231, %v1423
  %v1425 = vpop.f32.mrb[0].mxu0
  %v1426 = vadd.f32 %v1233, %v1425
  %1427 = vmatprep.mubr.bf16.mxu0 0
  %1428 = vmatmul.mubr.bf16.gmra.mrb[0].mxu0 %v441
  %v1429 = vpop.f32.mrb[0].mxu0
  %v1430 = vadd.f32 %v1237, %v1429
  %v1431 = vpop.f32.mrb[0].mxu0
  %v1432 = vadd.f32 %v1239, %v1431
  %v1433 = vpop.f32.mrb[0].mxu0
  %v1434 = vadd.f32 %v1241, %v1433
  %v1435 = vpop.f32.mrb[0].mxu0
  %v1436 = vadd.f32 %v1243, %v1435
  %1437 = vmatprep.mubr.bf16.mxu0 0
  %1438 = vmatmul.mubr.bf16.gmra.mrb[0].mxu0 %v443
  %v1439 = vpop.f32.mrb[0].mxu0
  %v1440 = vadd.f32 %v1247, %v1439
  %v1441 = vpop.f32.mrb[0].mxu0
  %v1442 = vadd.f32 %v1249, %v1441
  %v1443 = vpop.f32.mrb[0].mxu0
  %v1444 = vadd.f32 %v1251, %v1443
  %v1445 = vpop.f32.mrb[0].mxu0
  %v1446 = vadd.f32 %v1253, %v1445
  %1447 = vmatprep.mubr.bf16.mxu0 0
  %1448 = vmatmul.mubr.bf16.gmra.mrb[0].mxu0 %v445
  %v1449 = vpop.f32.mrb[0].mxu0
  %v1450 = vadd.f32 %v1257, %v1449
  %v1451 = vpop.f32.mrb[0].mxu0
  %v1452 = vadd.f32 %v1259, %v1451
  %v1453 = vpop.f32.mrb[0].mxu0
  %v1454 = vadd.f32 %v1261, %v1453
  %v1455 = vpop.f32.mrb[0].mxu0
  %v1456 = vadd.f32 %v1263, %v1455
  %1457 = vmatprep.mubr.bf16.mxu0 0
  %1458 = vmatmul.mubr.bf16.gmra.mrb[0].mxu0 %v447
  %v1459 = vpop.f32.mrb[0].mxu0
  %v1460 = vadd.f32 %v1267, %v1459
  %v1461 = vpop.f32.mrb[0].mxu0
  %v1462 = vadd.f32 %v1269, %v1461
  %v1463 = vpop.f32.mrb[0].mxu0
  %v1464 = vadd.f32 %v1271, %v1463
  %v1465 = vpop.f32.mrb[0].mxu0
  %v1466 = vadd.f32 %v1273, %v1465
  %1467 = vmatprep.mubr.bf16.mxu0 0
  %1468 = vmatmul.mubr.bf16.gmra.mrb[0].mxu0 %v449
  %v1469 = vpop.f32.mrb[0].mxu0
  %v1470 = vadd.f32 %v1277, %v1469
  %v1471 = vpop.f32.mrb[0].mxu0
  %v1472 = vadd.f32 %v1279, %v1471
  %v1473 = vpop.f32.mrb[0].mxu0
  %v1474 = vadd.f32 %v1281, %v1473
  %v1475 = vpop.f32.mrb[0].mxu0
  %v1476 = vadd.f32 %v1283, %v1475
  %1477 = vmatprep.mubr.bf16.mxu0 0
  %1478 = vmatmul.mubr.bf16.gmra.mrb[0].mxu0 %v451
  %v1479 = vpop.f32.mrb[0].mxu0
  %v1480 = vadd.f32 %v1287, %v1479
  %v1481 = vpop.f32.mrb[0].mxu0
  %v1482 = vadd.f32 %v1289, %v1481
  %v1483 = vpop.f32.mrb[0].mxu0
  %v1484 = vadd.f32 %v1291, %v1483
  %v1485 = vpop.f32.mrb[0].mxu0
  %v1486 = vadd.f32 %v1293, %v1485
  %1487 = vmatprep.mubr.bf16.mxu0 0
  %1488 = vmatmul.mubr.bf16.gmra.mrb[0].mxu0 %v453
  %v1489 = vpop.f32.mrb[0].mxu0
  %v1490 = vadd.f32 %v1297, %v1489
  %v1491 = vpop.f32.mrb[0].mxu0
  %v1492 = vadd.f32 %v1299, %v1491
  %v1493 = vpop.f32.mrb[0].mxu0
  %v1494 = vadd.f32 %v1301, %v1493
  %v1495 = vpop.f32.mrb[0].mxu0
  %v1496 = vadd.f32 %v1303, %v1495
  %1497 = vmatprep.mubr.bf16.mxu0 0
  %1498 = vmatmul.mubr.bf16.gmra.mrb[0].mxu0 %v455
  %v1499 = vpop.f32.mrb[0].mxu0
  %v1500 = vadd.f32 %v1307, %v1499
  %v1501 = vpop.f32.mrb[0].mxu0
  %v1502 = vadd.f32 %v1309, %v1501
  %v1503 = vpop.f32.mrb[0].mxu0
  %v1504 = vadd.f32 %v1311, %v1503
  %v1505 = vpop.f32.mrb[0].mxu0
  %v1506 = vadd.f32 %v1313, %v1505
  %1507 = vmatprep.mubr.bf16.mxu0 0
  %1508 = vmatmul.mubr.bf16.gmra.mrb[0].mxu0 %v457
  %v1509 = vpop.f32.mrb[0].mxu0
  %v1510 = vadd.f32 %v1317, %v1509
  %v1511 = vpop.f32.mrb[0].mxu0
  %v1512 = vadd.f32 %v1319, %v1511
  %v1513 = vpop.f32.mrb[0].mxu0
  %v1514 = vadd.f32 %v1321, %v1513
  %v1515 = vpop.f32.mrb[0].mxu0
  %v1516 = vadd.f32 %v1323, %v1515
  %1517 = vmatprep.mubr.bf16.mxu0 0
  %1518 = vmatmul.mubr.bf16.gmra.mrb[0].mxu0 %v459
  %v1519 = vpop.f32.mrb[0].mxu0
  %v1520 = vadd.f32 %v1327, %v1519
  %v1521 = vpop.f32.mrb[0].mxu0
  %v1522 = vadd.f32 %v1329, %v1521
  %v1523 = vpop.f32.mrb[0].mxu0
  %v1524 = vadd.f32 %v1331, %v1523
  %v1525 = vpop.f32.mrb[0].mxu0
  %v1526 = vadd.f32 %v1333, %v1525
  %1527 = vmatprep.mubr.bf16.mxu0 0
  %1528 = vmatmul.mubr.bf16.gmra.mrb[0].mxu0 %v461
  %v1529 = vpop.f32.mrb[0].mxu0
  %v1530 = vadd.f32 %v1337, %v1529
  %v1531 = vpop.f32.mrb[0].mxu0
  %v1532 = vadd.f32 %v1339, %v1531
  %v1533 = vpop.f32.mrb[0].mxu0
  %v1534 = vadd.f32 %v1341, %v1533
  %v1535 = vpop.f32.mrb[0].mxu0
  %v1536 = vadd.f32 %v1343, %v1535
  %1537 = vmatprep.mubr.bf16.mxu0 0
  %1538 = vmatmul.mubr.bf16.gmra.mrb[0].mxu0 %v463
  %v1539 = vpop.f32.mrb[0].mxu0
  %v1540 = vadd.f32 %v1347, %v1539
  %v1541 = vpop.f32.mrb[0].mxu0
  %v1542 = vadd.f32 %v1349, %v1541
  %v1543 = vpop.f32.mrb[0].mxu0
  %v1544 = vadd.f32 %v1351, %v1543
  %v1545 = vpop.f32.mrb[0].mxu0
  %v1546 = vadd.f32 %v1353, %v1545
  %1547 = vmatprep.mubr.bf16.mxu0 0
  %1548 = vmatmul.mubr.bf16.gmra.mrb[0].mxu0 %v481
  %v1549 = vpop.f32.mrb[0].mxu0
  %v1550 = vadd.f32 %v1357, %v1549
  %v1551 = vpop.f32.mrb[0].mxu0
  %v1552 = vadd.f32 %v1359, %v1551
  %v1553 = vpop.f32.mrb[0].mxu0
  %v1554 = vadd.f32 %v1361, %v1553
  %v1555 = vpop.f32.mrb[0].mxu0
  %v1556 = vadd.f32 %v1363, %v1555
  %1557 = vdwg.mxu0
  %v1558 = vmax.f32 %v1400, %v1402
  %v1559 = vmax.f32 %v1404, %v1406
  %v1560 = vmax.f32 %v1410, %v1412
  %v1561 = vmax.f32 %v1414, %v1416
  %v1562 = vmax.f32 %v1420, %v1422
  %v1563 = vmax.f32 %v1424, %v1426
  %v1564 = vmax.f32 %v1430, %v1432
  %v1565 = vmax.f32 %v1434, %v1436
  %v1566 = vmax.f32 %v1440, %v1442
  %v1567 = vmax.f32 %v1444, %v1446
  %v1568 = vmax.f32 %v1450, %v1452
  %v1569 = vmax.f32 %v1454, %v1456
  %v1570 = vmax.f32 %v1460, %v1462
  %v1571 = vmax.f32 %v1464, %v1466
  %v1572 = vmax.f32 %v1470, %v1472
  %v1573 = vmax.f32 %v1474, %v1476
  %v1574 = vmax.f32 %v1480, %v1482
  %v1575 = vmax.f32 %v1484, %v1486
  %v1576 = vmax.f32 %v1490, %v1492
  %v1577 = vmax.f32 %v1494, %v1496
  %v1578 = vmax.f32 %v1500, %v1502
  %v1579 = vmax.f32 %v1504, %v1506
  %v1580 = vmax.f32 %v1510, %v1512
  %v1581 = vmax.f32 %v1514, %v1516
  %v1582 = vmax.f32 %v1520, %v1522
  %v1583 = vmax.f32 %v1524, %v1526
  %v1584 = vmax.f32 %v1530, %v1532
  %v1585 = vmax.f32 %v1534, %v1536
  %v1586 = vmax.f32 %v1540, %v1542
  %v1587 = vmax.f32 %v1544, %v1546
  %v1588 = vmax.f32 %v1550, %v1552
  %v1589 = vmax.f32 %v1554, %v1556
  %v1622 = vrot.slane %v1558, 1
  %v1623 = vrot.slane %v1559, 1
  %v1624 = vsel %vm345, %v1622, %v1623
  %v1625 = vrot.slane %v1560, 1
  %v1626 = vsel %vm345, %v1623, %v1625
  %v1627 = vrot.slane %v1561, 1
  %v1628 = vsel %vm345, %v1625, %v1627
  %v1629 = vrot.slane %v1562, 1
  %v1630 = vsel %vm345, %v1627, %v1629
  %v1631 = vrot.slane %v1563, 1
  %v1632 = vsel %vm345, %v1629, %v1631
  %v1633 = vrot.slane %v1564, 1
  %v1634 = vsel %vm345, %v1631, %v1633
  %v1635 = vrot.slane %v1565, 1
  %v1636 = vsel %vm345, %v1633, %v1635
  %v1637 = vrot.slane %v1566, 1
  %v1638 = vsel %vm345, %v1635, %v1637
  %v1639 = vrot.slane %v1567, 1
  %v1640 = vsel %vm345, %v1637, %v1639
  %v1641 = vrot.slane %v1568, 1
  %v1642 = vsel %vm345, %v1639, %v1641
  %v1643 = vrot.slane %v1569, 1
  %v1644 = vsel %vm345, %v1641, %v1643
  %v1645 = vrot.slane %v1570, 1
  %v1646 = vsel %vm345, %v1643, %v1645
  %v1647 = vrot.slane %v1571, 1
  %v1648 = vsel %vm345, %v1645, %v1647
  %v1649 = vrot.slane %v1572, 1
  %v1650 = vsel %vm345, %v1647, %v1649
  %v1651 = vrot.slane %v1573, 1
  %v1652 = vsel %vm345, %v1649, %v1651
  %v1653 = vrot.slane %v1574, 1
  %v1654 = vsel %vm345, %v1651, %v1653
  %v1655 = vrot.slane %v1575, 1
  %v1656 = vsel %vm345, %v1653, %v1655
  %v1657 = vrot.slane %v1576, 1
  %v1658 = vsel %vm345, %v1655, %v1657
  %v1659 = vrot.slane %v1577, 1
  %v1660 = vsel %vm345, %v1657, %v1659
  %v1661 = vrot.slane %v1578, 1
  %v1662 = vsel %vm345, %v1659, %v1661
  %v1663 = vrot.slane %v1579, 1
  %v1664 = vsel %vm345, %v1661, %v1663
  %v1665 = vrot.slane %v1580, 1
  %v1666 = vsel %vm345, %v1663, %v1665
  %v1667 = vrot.slane %v1581, 1
  %v1668 = vsel %vm345, %v1665, %v1667
  %v1669 = vrot.slane %v1582, 1
  %v1670 = vsel %vm345, %v1667, %v1669
  %v1671 = vrot.slane %v1583, 1
  %v1672 = vsel %vm345, %v1669, %v1671
  %v1673 = vrot.slane %v1584, 1
  %v1674 = vsel %vm345, %v1671, %v1673
  %v1675 = vrot.slane %v1585, 1
  %v1676 = vsel %vm345, %v1673, %v1675
  %v1677 = vrot.slane %v1586, 1
  %v1678 = vsel %vm345, %v1675, %v1677
  %v1679 = vrot.slane %v1587, 1
  %v1680 = vsel %vm345, %v1677, %v1679
  %v1681 = vrot.slane %v1588, 1
  %v1682 = vsel %vm345, %v1679, %v1681
  %v1683 = vrot.slane %v1589, 1
  %v1684 = vsel %vm345, %v1681, %v1683
  %v1717 = vsel %vm345, %v1683, 0.0
  %v1718 = vmax.f32 %v1558, %v1624
  %v1719 = vmax.f32 %v1559, %v1626
  %v1720 = vmax.f32 %v1560, %v1628
  %v1721 = vmax.f32 %v1561, %v1630
  %v1722 = vmax.f32 %v1562, %v1632
  %v1723 = vmax.f32 %v1563, %v1634
  %v1724 = vmax.f32 %v1564, %v1636
  %v1725 = vmax.f32 %v1565, %v1638
  %v1726 = vmax.f32 %v1566, %v1640
  %v1727 = vmax.f32 %v1567, %v1642
  %v1728 = vmax.f32 %v1568, %v1644
  %v1729 = vmax.f32 %v1569, %v1646
  %v1730 = vmax.f32 %v1570, %v1648
  %v1731 = vmax.f32 %v1571, %v1650
  %v1732 = vmax.f32 %v1572, %v1652
  %v1733 = vmax.f32 %v1573, %v1654
  %v1734 = vmax.f32 %v1574, %v1656
  %v1735 = vmax.f32 %v1575, %v1658
  %v1736 = vmax.f32 %v1576, %v1660
  %v1737 = vmax.f32 %v1577, %v1662
  %v1738 = vmax.f32 %v1578, %v1664
  %v1739 = vmax.f32 %v1579, %v1666
  %v1740 = vmax.f32 %v1580, %v1668
  %v1741 = vmax.f32 %v1581, %v1670
  %v1742 = vmax.f32 %v1582, %v1672
  %v1743 = vmax.f32 %v1583, %v1674
  %v1744 = vmax.f32 %v1584, %v1676
  %v1745 = vmax.f32 %v1585, %v1678
  %v1746 = vmax.f32 %v1586, %v1680
  %v1747 = vmax.f32 %v1587, %v1682
  %v1748 = vmax.f32 %v1588, %v1684
  %v1749 = vmax.f32 %v1589, %v1717
  %v1750 = vld [vmem:[%s2] sm:$0x1]
  %v1752 = vlaneseq
  %v1753 = vshrl.u32 %v1752, 7
  %v1754 = vsub.s32 0, %v1753
  %v1755 = vrot.slane %v1750, %v1754
  %v1757 = vadd.f32 %v1718, %v1755
  %v1758 = vadd.f32 %v1719, %v1755
  %v1759 = vadd.f32 %v1720, %v1755
  %v1760 = vadd.f32 %v1721, %v1755
  %v1761 = vadd.f32 %v1722, %v1755
  %v1762 = vadd.f32 %v1723, %v1755
  %v1763 = vadd.f32 %v1724, %v1755
  %v1764 = vadd.f32 %v1725, %v1755
  %v1765 = vadd.f32 %v1726, %v1755
  %v1766 = vadd.f32 %v1727, %v1755
  %v1767 = vadd.f32 %v1728, %v1755
  %v1768 = vadd.f32 %v1729, %v1755
  %v1769 = vadd.f32 %v1730, %v1755
  %v1770 = vadd.f32 %v1731, %v1755
  %v1771 = vadd.f32 %v1732, %v1755
  %v1772 = vadd.f32 %v1733, %v1755
  %v1773 = vadd.f32 %v1734, %v1755
  %v1774 = vadd.f32 %v1735, %v1755
  %v1775 = vadd.f32 %v1736, %v1755
  %v1776 = vadd.f32 %v1737, %v1755
  %v1777 = vadd.f32 %v1738, %v1755
  %v1778 = vadd.f32 %v1739, %v1755
  %v1779 = vadd.f32 %v1740, %v1755
  %v1780 = vadd.f32 %v1741, %v1755
  %v1781 = vadd.f32 %v1742, %v1755
  %v1782 = vadd.f32 %v1743, %v1755
  %v1783 = vadd.f32 %v1744, %v1755
  %v1784 = vadd.f32 %v1745, %v1755
  %v1785 = vadd.f32 %v1746, %v1755
  %v1786 = vadd.f32 %v1747, %v1755
  %v1787 = vadd.f32 %v1748, %v1755
  %v1788 = vadd.f32 %v1749, %v1755
  %v1789 = vmax.f32 %v1757, 0.0
  %v1790 = vmax.f32 %v1758, 0.0
  %v1791 = vmax.f32 %v1759, 0.0
  %v1792 = vmax.f32 %v1760, 0.0
  %v1793 = vmax.f32 %v1761, 0.0
  %v1794 = vmax.f32 %v1762, 0.0
  %v1795 = vmax.f32 %v1763, 0.0
  %v1796 = vmax.f32 %v1764, 0.0
  %v1797 = vmax.f32 %v1765, 0.0
  %v1798 = vmax.f32 %v1766, 0.0
  %v1799 = vmax.f32 %v1767, 0.0
  %v1800 = vmax.f32 %v1768, 0.0
  %v1801 = vmax.f32 %v1769, 0.0
  %v1802 = vmax.f32 %v1770, 0.0
  %v1803 = vmax.f32 %v1771, 0.0
  %v1804 = vmax.f32 %v1772, 0.0
  %v1805 = vmax.f32 %v1773, 0.0
  %v1806 = vmax.f32 %v1774, 0.0
  %v1807 = vmax.f32 %v1775, 0.0
  %v1808 = vmax.f32 %v1776, 0.0
  %v1809 = vmax.f32 %v1777, 0.0
  %v1810 = vmax.f32 %v1778, 0.0
  %v1811 = vmax.f32 %v1779, 0.0
  %v1812 = vmax.f32 %v1780, 0.0
  %v1813 = vmax.f32 %v1781, 0.0
  %v1814 = vmax.f32 %v1782, 0.0
  %v1815 = vmax.f32 %v1783, 0.0
  %v1816 = vmax.f32 %v1784, 0.0
  %v1817 = vmax.f32 %v1785, 0.0
  %v1818 = vmax.f32 %v1786, 0.0
  %v1819 = vmax.f32 %v1787, 0.0
  %v1820 = vmax.f32 %v1788, 0.0
  %v1821 = vpack.c.bf16 %v1790, %v1789
  %v1822 = vpack.c.bf16 %v1792, %v1791
  %v1823 = vpack.c.bf16 %v1794, %v1793
  %v1824 = vpack.c.bf16 %v1796, %v1795
  %v1825 = vpack.c.bf16 %v1798, %v1797
  %v1826 = vpack.c.bf16 %v1800, %v1799
  %v1827 = vpack.c.bf16 %v1802, %v1801
  %v1828 = vpack.c.bf16 %v1804, %v1803
  %v1829 = vpack.c.bf16 %v1806, %v1805
  %v1830 = vpack.c.bf16 %v1808, %v1807
  %v1831 = vpack.c.bf16 %v1810, %v1809
  %v1832 = vpack.c.bf16 %v1812, %v1811
  %v1833 = vpack.c.bf16 %v1814, %v1813
  %v1834 = vpack.c.bf16 %v1816, %v1815
  %v1835 = vpack.c.bf16 %v1818, %v1817
  %v1836 = vpack.c.bf16 %v1820, %v1819
  %v1853 = vrot.slane %v1821, 1
  %v1854 = vrot.slane %v1822, 1
  %v1855 = vsel %vm298, %v1853, %v1854
  %v1856 = vrot.slane %v1823, 1
  %v1857 = vsel %vm298, %v1854, %v1856
  %v1858 = vrot.slane %v1824, 1
  %v1859 = vsel %vm298, %v1856, %v1858
  %v1860 = vrot.slane %v1825, 1
  %v1861 = vsel %vm298, %v1858, %v1860
  %v1862 = vrot.slane %v1826, 1
  %v1863 = vsel %vm298, %v1860, %v1862
  %v1864 = vrot.slane %v1827, 1
  %v1865 = vsel %vm298, %v1862, %v1864
  %v1866 = vrot.slane %v1828, 1
  %v1867 = vsel %vm298, %v1864, %v1866
  %v1868 = vrot.slane %v1829, 1
  %v1869 = vsel %vm298, %v1866, %v1868
  %v1870 = vrot.slane %v1830, 1
  %v1871 = vsel %vm298, %v1868, %v1870
  %v1872 = vrot.slane %v1831, 1
  %v1873 = vsel %vm298, %v1870, %v1872
  %v1874 = vrot.slane %v1832, 1
  %v1875 = vsel %vm298, %v1872, %v1874
  %v1876 = vrot.slane %v1833, 1
  %v1877 = vsel %vm298, %v1874, %v1876
  %v1878 = vrot.slane %v1834, 1
  %v1879 = vsel %vm298, %v1876, %v1878
  %v1880 = vrot.slane %v1835, 1
  %v1881 = vsel %vm298, %v1878, %v1880
  %v1882 = vrot.slane %v1836, 1
  %v1883 = vsel %vm298, %v1880, %v1882
  %v1900 = vsel %vm345, %v1882, 0
  %v1902 = vrot.slane %v1821, 2
  %v1903 = vrot.slane %v1822, 2
  %v1904 = vsel %vm432, %v1902, %v1903
  %v1905 = vrot.slane %v1823, 2
  %v1906 = vsel %vm432, %v1903, %v1905
  %v1907 = vrot.slane %v1824, 2
  %v1908 = vsel %vm432, %v1905, %v1907
  %v1909 = vrot.slane %v1825, 2
  %v1910 = vsel %vm432, %v1907, %v1909
  %v1911 = vrot.slane %v1826, 2
  %v1912 = vsel %vm432, %v1909, %v1911
  %v1913 = vrot.slane %v1827, 2
  %v1914 = vsel %vm432, %v1911, %v1913
  %v1915 = vrot.slane %v1828, 2
  %v1916 = vsel %vm432, %v1913, %v1915
  %v1917 = vrot.slane %v1829, 2
  %v1918 = vsel %vm432, %v1915, %v1917
  %v1919 = vrot.slane %v1830, 2
  %v1920 = vsel %vm432, %v1917, %v1919
  %v1921 = vrot.slane %v1831, 2
  %v1922 = vsel %vm432, %v1919, %v1921
  %v1923 = vrot.slane %v1832, 2
  %v1924 = vsel %vm432, %v1921, %v1923
  %v1925 = vrot.slane %v1833, 2
  %v1926 = vsel %vm432, %v1923, %v1925
  %v1927 = vrot.slane %v1834, 2
  %v1928 = vsel %vm432, %v1925, %v1927
  %v1929 = vrot.slane %v1835, 2
  %v1930 = vsel %vm432, %v1927, %v1929
  %v1931 = vrot.slane %v1836, 2
  %v1932 = vsel %vm432, %v1929, %v1931
  %v1949 = vsel %vm479, %v1931, 0
  %vm1951 = vcmask 1044480
  %v1952 = vrot.slane %v1821, 3
  %v1953 = vrot.slane %v1822, 3
  %v1954 = vsel %vm1951, %v1952, %v1953
  %v1955 = vrot.slane %v1823, 3
  %v1956 = vsel %vm1951, %v1953, %v1955
  %v1957 = vrot.slane %v1824, 3
  %v1958 = vsel %vm1951, %v1955, %v1957
  %v1959 = vrot.slane %v1825, 3
  %v1960 = vsel %vm1951, %v1957, %v1959
  %v1961 = vrot.slane %v1826, 3
  %v1962 = vsel %vm1951, %v1959, %v1961
  %v1963 = vrot.slane %v1827, 3
  %v1964 = vsel %vm1951, %v1961, %v1963
  %v1965 = vrot.slane %v1828, 3
  %v1966 = vsel %vm1951, %v1963, %v1965
  %v1967 = vrot.slane %v1829, 3
  %v1968 = vsel %vm1951, %v1965, %v1967
  %v1969 = vrot.slane %v1830, 3
  %v1970 = vsel %vm1951, %v1967, %v1969
  %v1971 = vrot.slane %v1831, 3
  %v1972 = vsel %vm1951, %v1969, %v1971
  %v1973 = vrot.slane %v1832, 3
  %v1974 = vsel %vm1951, %v1971, %v1973
  %v1975 = vrot.slane %v1833, 3
  %v1976 = vsel %vm1951, %v1973, %v1975
  %v1977 = vrot.slane %v1834, 3
  %v1978 = vsel %vm1951, %v1975, %v1977
  %v1979 = vrot.slane %v1835, 3
  %v1980 = vsel %vm1951, %v1977, %v1979
  %v1981 = vrot.slane %v1836, 3
  %v1982 = vsel %vm1951, %v1979, %v1981
  %vm1998 = vcmask 1044480
  %v2000 = vsel %vm1998, %v1981, 0
  %vm2002 = vcmask 1043456
  %v2003 = vrot.slane %v1821, 4
  %v2004 = vrot.slane %v1822, 4
  %v2005 = vsel %vm2002, %v2003, %v2004
  %v2006 = vrot.slane %v1823, 4
  %v2007 = vsel %vm2002, %v2004, %v2006
  %v2008 = vrot.slane %v1824, 4
  %v2009 = vsel %vm2002, %v2006, %v2008
  %v2010 = vrot.slane %v1825, 4
  %v2011 = vsel %vm2002, %v2008, %v2010
  %v2012 = vrot.slane %v1826, 4
  %v2013 = vsel %vm2002, %v2010, %v2012
  %v2014 = vrot.slane %v1827, 4
  %v2015 = vsel %vm2002, %v2012, %v2014
  %v2016 = vrot.slane %v1828, 4
  %v2017 = vsel %vm2002, %v2014, %v2016
  %v2018 = vrot.slane %v1829, 4
  %v2019 = vsel %vm2002, %v2016, %v2018
  %v2020 = vrot.slane %v1830, 4
  %v2021 = vsel %vm2002, %v2018, %v2020
  %v2022 = vrot.slane %v1831, 4
  %v2023 = vsel %vm2002, %v2020, %v2022
  %v2024 = vrot.slane %v1832, 4
  %v2025 = vsel %vm2002, %v2022, %v2024
  %v2026 = vrot.slane %v1833, 4
  %v2027 = vsel %vm2002, %v2024, %v2026
  %v2028 = vrot.slane %v1834, 4
  %v2029 = vsel %vm2002, %v2026, %v2028
  %v2030 = vrot.slane %v1835, 4
  %v2031 = vsel %vm2002, %v2028, %v2030
  %v2032 = vrot.slane %v1836, 4
  %v2033 = vsel %vm2002, %v2030, %v2032
  %vm2049 = vcmask 1043456
  %v2051 = vsel %vm2049, %v2032, 0
  %v2053 = vld [vmem:[%s3] sm:$0xff]
  %v2054 = vld [vmem:[%s3 + $0x8] sm:$0xff]
  %v2055 = vld [vmem:[%s3 + $0x10] sm:$0xff]
  %v2056 = vld [vmem:[%s3 + $0x18] sm:$0xff]
  %v2057 = vld [vmem:[%s3 + $0x20] sm:$0xff]
  %v2058 = vld [vmem:[%s3 + $0x28] sm:$0xff]
  %v2059 = vld [vmem:[%s3 + $0x30] sm:$0xff]
  %v2060 = vld [vmem:[%s3 + $0x38] sm:$0xff]
  %v2061 = vld [vmem:[%s3 + $0x40] sm:$0xff]
  %v2062 = vld [vmem:[%s3 + $0x48] sm:$0xff]
  %v2063 = vld [vmem:[%s3 + $0x50] sm:$0xff]
  %v2064 = vld [vmem:[%s3 + $0x58] sm:$0xff]
  %v2065 = vld [vmem:[%s3 + $0x60] sm:$0xff]
  %v2066 = vld [vmem:[%s3 + $0x68] sm:$0xff]
  %v2067 = vld [vmem:[%s3 + $0x70] sm:$0xff]
  %v2068 = vld [vmem:[%s3 + $0x78] sm:$0xff]
  %v2069 = vld [vmem:[%s3 + $0x80] sm:$0xff]
  %v2070 = vld [vmem:[%s3 + $0x88] sm:$0xff]
  %v2071 = vld [vmem:[%s3 + $0x90] sm:$0xff]
  %v2072 = vld [vmem:[%s3 + $0x98] sm:$0xff]
  %v2073 = vld [vmem:[%s3 + $0xa0] sm:$0xff]
  %v2074 = vld [vmem:[%s3 + $0xa8] sm:$0xff]
  %v2075 = vld [vmem:[%s3 + $0xb0] sm:$0xff]
  %v2076 = vld [vmem:[%s3 + $0xb8] sm:$0xff]
  %v2077 = vld [vmem:[%s3 + $0xc0] sm:$0xff]
  %v2078 = vld [vmem:[%s3 + $0xc8] sm:$0xff]
  %v2079 = vld [vmem:[%s3 + $0xd0] sm:$0xff]
  %v2080 = vld [vmem:[%s3 + $0xd8] sm:$0xff]
  %v2081 = vld [vmem:[%s3 + $0xe0] sm:$0xff]
  %v2082 = vld [vmem:[%s3 + $0xe8] sm:$0xff]
  %v2083 = vld [vmem:[%s3 + $0xf0] sm:$0xff]
  %v2084 = vld [vmem:[%s3 + $0xf8] sm:$0xff]
  %v2085 = vld [vmem:[%s3 + $0x100] sm:$0xff]
  %v2086 = vld [vmem:[%s3 + $0x108] sm:$0xff]
  %v2087 = vld [vmem:[%s3 + $0x110] sm:$0xff]
  %v2088 = vld [vmem:[%s3 + $0x118] sm:$0xff]
  %v2089 = vld [vmem:[%s3 + $0x120] sm:$0xff]
  %v2090 = vld [vmem:[%s3 + $0x128] sm:$0xff]
  %v2091 = vld [vmem:[%s3 + $0x130] sm:$0xff]
  %v2092 = vld [vmem:[%s3 + $0x138] sm:$0xff]
  %v2093 = vld [vmem:[%s3 + $0x140] sm:$0xff]
  %v2094 = vld [vmem:[%s3 + $0x148] sm:$0xff]
  %v2095 = vld [vmem:[%s3 + $0x150] sm:$0xff]
  %v2096 = vld [vmem:[%s3 + $0x158] sm:$0xff]
  %v2097 = vld [vmem:[%s3 + $0x160] sm:$0xff]
  %v2098 = vld [vmem:[%s3 + $0x168] sm:$0xff]
  %v2099 = vld [vmem:[%s3 + $0x170] sm:$0xff]
  %v2100 = vld [vmem:[%s3 + $0x178] sm:$0xff]
  %v2101 = vld [vmem:[%s3 + $0x180] sm:$0xff]
  %v2102 = vld [vmem:[%s3 + $0x188] sm:$0xff]
  %v2103 = vld [vmem:[%s3 + $0x190] sm:$0xff]
  %v2104 = vld [vmem:[%s3 + $0x198] sm:$0xff]
  %v2105 = vld [vmem:[%s3 + $0x1a0] sm:$0xff]
  %v2106 = vld [vmem:[%s3 + $0x1a8] sm:$0xff]
  %v2107 = vld [vmem:[%s3 + $0x1b0] sm:$0xff]
  %v2108 = vld [vmem:[%s3 + $0x1b8] sm:$0xff]
  %v2109 = vld [vmem:[%s3 + $0x1c0] sm:$0xff]
  %v2110 = vld [vmem:[%s3 + $0x1c8] sm:$0xff]
  %v2111 = vld [vmem:[%s3 + $0x1d0] sm:$0xff]
  %v2112 = vld [vmem:[%s3 + $0x1d8] sm:$0xff]
  %v2113 = vld [vmem:[%s3 + $0x1e0] sm:$0xff]
  %v2114 = vld [vmem:[%s3 + $0x1e8] sm:$0xff]
  %v2115 = vld [vmem:[%s3 + $0x1f0] sm:$0xff]
  %v2116 = vld [vmem:[%s3 + $0x1f8] sm:$0xff]
  %v2117 = vld [vmem:[%s3 + $0x200] sm:$0xff]
  %v2118 = vld [vmem:[%s3 + $0x208] sm:$0xff]
  %v2119 = vld [vmem:[%s3 + $0x210] sm:$0xff]
  %v2120 = vld [vmem:[%s3 + $0x218] sm:$0xff]
  %v2121 = vld [vmem:[%s3 + $0x220] sm:$0xff]
  %v2122 = vld [vmem:[%s3 + $0x228] sm:$0xff]
  %v2123 = vld [vmem:[%s3 + $0x230] sm:$0xff]
  %v2124 = vld [vmem:[%s3 + $0x238] sm:$0xff]
  %v2125 = vld [vmem:[%s3 + $0x240] sm:$0xff]
  %v2126 = vld [vmem:[%s3 + $0x248] sm:$0xff]
  %v2127 = vld [vmem:[%s3 + $0x250] sm:$0xff]
  %v2128 = vld [vmem:[%s3 + $0x258] sm:$0xff]
  %v2129 = vld [vmem:[%s3 + $0x260] sm:$0xff]
  %v2130 = vld [vmem:[%s3 + $0x268] sm:$0xff]
  %v2131 = vld [vmem:[%s3 + $0x270] sm:$0xff]
  %v2132 = vld [vmem:[%s3 + $0x278] sm:$0xff]
  %v2213 = vunpack.c.l.b16 %v2053
  %v2214 = vunpack.c.h.b16 %v2053
  %v2215 = vunpack.c.l.b16 %v2054
  %v2216 = vunpack.c.h.b16 %v2054
  %v2217 = vunpack.c.l.b16 %v2055
  %v2218 = vunpack.c.h.b16 %v2055
  %v2219 = vunpack.c.l.b16 %v2056
  %v2220 = vunpack.c.h.b16 %v2056
  %v2221 = vunpack.c.l.b16 %v2057
  %v2222 = vunpack.c.h.b16 %v2057
  %v2223 = vunpack.c.l.b16 %v2058
  %v2224 = vunpack.c.h.b16 %v2058
  %v2225 = vunpack.c.l.b16 %v2059
  %v2226 = vunpack.c.h.b16 %v2059
  %v2227 = vunpack.c.l.b16 %v2060
  %v2228 = vunpack.c.h.b16 %v2060
  %v2229 = vunpack.c.l.b16 %v2061
  %v2230 = vunpack.c.h.b16 %v2061
  %v2231 = vunpack.c.l.b16 %v2062
  %v2232 = vunpack.c.h.b16 %v2062
  %v2233 = vunpack.c.l.b16 %v2063
  %v2234 = vunpack.c.h.b16 %v2063
  %v2235 = vunpack.c.l.b16 %v2064
  %v2236 = vunpack.c.h.b16 %v2064
  %v2237 = vunpack.c.l.b16 %v2065
  %v2238 = vunpack.c.h.b16 %v2065
  %v2239 = vunpack.c.l.b16 %v2066
  %v2240 = vunpack.c.h.b16 %v2066
  %v2241 = vunpack.c.l.b16 %v2067
  %v2242 = vunpack.c.h.b16 %v2067
  %v2243 = vunpack.c.l.b16 %v2068
  %v2244 = vunpack.c.h.b16 %v2068
  %v2245 = vunpack.c.l.b16 %v2069
  %v2246 = vunpack.c.h.b16 %v2069
  %v2247 = vunpack.c.l.b16 %v2070
  %v2248 = vunpack.c.h.b16 %v2070
  %v2249 = vunpack.c.l.b16 %v2071
  %v2250 = vunpack.c.h.b16 %v2071
  %v2251 = vunpack.c.l.b16 %v2072
  %v2252 = vunpack.c.h.b16 %v2072
  %v2253 = vunpack.c.l.b16 %v2073
  %v2254 = vunpack.c.h.b16 %v2073
  %v2255 = vunpack.c.l.b16 %v2074
  %v2256 = vunpack.c.h.b16 %v2074
  %v2257 = vunpack.c.l.b16 %v2075
  %v2258 = vunpack.c.h.b16 %v2075
  %v2259 = vunpack.c.l.b16 %v2076
  %v2260 = vunpack.c.h.b16 %v2076
  %v2261 = vunpack.c.l.b16 %v2077
  %v2262 = vunpack.c.h.b16 %v2077
  %v2263 = vunpack.c.l.b16 %v2078
  %v2264 = vunpack.c.h.b16 %v2078
  %v2265 = vunpack.c.l.b16 %v2079
  %v2266 = vunpack.c.h.b16 %v2079
  %v2267 = vunpack.c.l.b16 %v2080
  %v2268 = vunpack.c.h.b16 %v2080
  %v2269 = vunpack.c.l.b16 %v2081
  %v2270 = vunpack.c.h.b16 %v2081
  %v2271 = vunpack.c.l.b16 %v2082
  %v2272 = vunpack.c.h.b16 %v2082
  %v2273 = vunpack.c.l.b16 %v2083
  %v2274 = vunpack.c.h.b16 %v2083
  %v2275 = vunpack.c.l.b16 %v2084
  %v2276 = vunpack.c.h.b16 %v2084
  %v2277 = vunpack.c.l.b16 %v2085
  %v2278 = vunpack.c.h.b16 %v2085
  %v2279 = vunpack.c.l.b16 %v2086
  %v2280 = vunpack.c.h.b16 %v2086
  %v2281 = vunpack.c.l.b16 %v2087
  %v2282 = vunpack.c.h.b16 %v2087
  %v2283 = vunpack.c.l.b16 %v2088
  %v2284 = vunpack.c.h.b16 %v2088
  %v2285 = vunpack.c.l.b16 %v2089
  %v2286 = vunpack.c.h.b16 %v2089
  %v2287 = vunpack.c.l.b16 %v2090
  %v2288 = vunpack.c.h.b16 %v2090
  %v2289 = vunpack.c.l.b16 %v2091
  %v2290 = vunpack.c.h.b16 %v2091
  %v2291 = vunpack.c.l.b16 %v2092
  %v2292 = vunpack.c.h.b16 %v2092
  %v2293 = vunpack.c.l.b16 %v2093
  %v2294 = vunpack.c.h.b16 %v2093
  %v2295 = vunpack.c.l.b16 %v2094
  %v2296 = vunpack.c.h.b16 %v2094
  %v2297 = vunpack.c.l.b16 %v2095
  %v2298 = vunpack.c.h.b16 %v2095
  %v2299 = vunpack.c.l.b16 %v2096
  %v2300 = vunpack.c.h.b16 %v2096
  %v2301 = vunpack.c.l.b16 %v2097
  %v2302 = vunpack.c.h.b16 %v2097
  %v2303 = vunpack.c.l.b16 %v2098
  %v2304 = vunpack.c.h.b16 %v2098
  %v2305 = vunpack.c.l.b16 %v2099
  %v2306 = vunpack.c.h.b16 %v2099
  %v2307 = vunpack.c.l.b16 %v2100
  %v2308 = vunpack.c.h.b16 %v2100
  %v2309 = vunpack.c.l.b16 %v2101
  %v2310 = vunpack.c.h.b16 %v2101
  %v2311 = vunpack.c.l.b16 %v2102
  %v2312 = vunpack.c.h.b16 %v2102
  %v2313 = vunpack.c.l.b16 %v2103
  %v2314 = vunpack.c.h.b16 %v2103
  %v2315 = vunpack.c.l.b16 %v2104
  %v2316 = vunpack.c.h.b16 %v2104
  %v2317 = vunpack.c.l.b16 %v2105
  %v2318 = vunpack.c.h.b16 %v2105
  %v2319 = vunpack.c.l.b16 %v2106
  %v2320 = vunpack.c.h.b16 %v2106
  %v2321 = vunpack.c.l.b16 %v2107
  %v2322 = vunpack.c.h.b16 %v2107
  %v2323 = vunpack.c.l.b16 %v2108
  %v2324 = vunpack.c.h.b16 %v2108
  %v2325 = vunpack.c.l.b16 %v2109
  %v2326 = vunpack.c.h.b16 %v2109
  %v2327 = vunpack.c.l.b16 %v2110
  %v2328 = vunpack.c.h.b16 %v2110
  %v2329 = vunpack.c.l.b16 %v2111
  %v2330 = vunpack.c.h.b16 %v2111
  %v2331 = vunpack.c.l.b16 %v2112
  %v2332 = vunpack.c.h.b16 %v2112
  %v2333 = vunpack.c.l.b16 %v2113
  %v2334 = vunpack.c.h.b16 %v2113
  %v2335 = vunpack.c.l.b16 %v2114
  %v2336 = vunpack.c.h.b16 %v2114
  %v2337 = vunpack.c.l.b16 %v2115
  %v2338 = vunpack.c.h.b16 %v2115
  %v2339 = vunpack.c.l.b16 %v2116
  %v2340 = vunpack.c.h.b16 %v2116
  %v2341 = vunpack.c.l.b16 %v2117
  %v2342 = vunpack.c.h.b16 %v2117
  %v2343 = vunpack.c.l.b16 %v2118
  %v2344 = vunpack.c.h.b16 %v2118
  %v2345 = vunpack.c.l.b16 %v2119
  %v2346 = vunpack.c.h.b16 %v2119
  %v2347 = vunpack.c.l.b16 %v2120
  %v2348 = vunpack.c.h.b16 %v2120
  %v2349 = vunpack.c.l.b16 %v2121
  %v2350 = vunpack.c.h.b16 %v2121
  %v2351 = vunpack.c.l.b16 %v2122
  %v2352 = vunpack.c.h.b16 %v2122
  %v2353 = vunpack.c.l.b16 %v2123
  %v2354 = vunpack.c.h.b16 %v2123
  %v2355 = vunpack.c.l.b16 %v2124
  %v2356 = vunpack.c.h.b16 %v2124
  %v2357 = vunpack.c.l.b16 %v2125
  %v2358 = vunpack.c.h.b16 %v2125
  %v2359 = vunpack.c.l.b16 %v2126
  %v2360 = vunpack.c.h.b16 %v2126
  %v2361 = vunpack.c.l.b16 %v2127
  %v2362 = vunpack.c.h.b16 %v2127
  %v2363 = vunpack.c.l.b16 %v2128
  %v2364 = vunpack.c.h.b16 %v2128
  %v2365 = vunpack.c.l.b16 %v2129
  %v2366 = vunpack.c.h.b16 %v2129
  %v2367 = vunpack.c.l.b16 %v2130
  %v2368 = vunpack.c.h.b16 %v2130
  %v2369 = vunpack.c.l.b16 %v2131
  %v2370 = vunpack.c.h.b16 %v2131
  %v2371 = vunpack.c.l.b16 %v2132
  %v2372 = vunpack.c.h.b16 %v2132
  %v2373 = vpack.c.b16 %v2215, %v2213
  %v2374 = vpack.c.b16 %v2216, %v2214
  %v2375 = vpack.c.b16 %v2219, %v2217
  %v2376 = vpack.c.b16 %v2220, %v2218
  %v2377 = vpack.c.b16 %v2223, %v2221
  %v2378 = vpack.c.b16 %v2224, %v2222
  %v2379 = vpack.c.b16 %v2227, %v2225
  %v2380 = vpack.c.b16 %v2228, %v2226
  %v2381 = vpack.c.b16 %v2231, %v2229
  %v2382 = vpack.c.b16 %v2232, %v2230
  %v2383 = vpack.c.b16 %v2235, %v2233
  %v2384 = vpack.c.b16 %v2236, %v2234
  %v2385 = vpack.c.b16 %v2239, %v2237
  %v2386 = vpack.c.b16 %v2240, %v2238
  %v2387 = vpack.c.b16 %v2243, %v2241
  %v2388 = vpack.c.b16 %v2244, %v2242
  %v2389 = vpack.c.b16 %v2247, %v2245
  %v2390 = vpack.c.b16 %v2248, %v2246
  %v2391 = vpack.c.b16 %v2251, %v2249
  %v2392 = vpack.c.b16 %v2252, %v2250
  %v2393 = vpack.c.b16 %v2255, %v2253
  %v2394 = vpack.c.b16 %v2256, %v2254
  %v2395 = vpack.c.b16 %v2259, %v2257
  %v2396 = vpack.c.b16 %v2260, %v2258
  %v2397 = vpack.c.b16 %v2263, %v2261
  %v2398 = vpack.c.b16 %v2264, %v2262
  %v2399 = vpack.c.b16 %v2267, %v2265
  %v2400 = vpack.c.b16 %v2268, %v2266
  %v2401 = vpack.c.b16 %v2271, %v2269
  %v2402 = vpack.c.b16 %v2272, %v2270
  %v2403 = vpack.c.b16 %v2275, %v2273
  %v2404 = vpack.c.b16 %v2276, %v2274
  %v2405 = vpack.c.b16 %v2279, %v2277
  %v2406 = vpack.c.b16 %v2280, %v2278
  %v2407 = vpack.c.b16 %v2283, %v2281
  %v2408 = vpack.c.b16 %v2284, %v2282
  %v2409 = vpack.c.b16 %v2287, %v2285
  %v2410 = vpack.c.b16 %v2288, %v2286
  %v2411 = vpack.c.b16 %v2291, %v2289
  %v2412 = vpack.c.b16 %v2292, %v2290
  %v2413 = vpack.c.b16 %v2295, %v2293
  %v2414 = vpack.c.b16 %v2296, %v2294
  %v2415 = vpack.c.b16 %v2299, %v2297
  %v2416 = vpack.c.b16 %v2300, %v2298
  %v2417 = vpack.c.b16 %v2303, %v2301
  %v2418 = vpack.c.b16 %v2304, %v2302
  %v2419 = vpack.c.b16 %v2307, %v2305
  %v2420 = vpack.c.b16 %v2308, %v2306
  %v2421 = vpack.c.b16 %v2311, %v2309
  %v2422 = vpack.c.b16 %v2312, %v2310
  %v2423 = vpack.c.b16 %v2315, %v2313
  %v2424 = vpack.c.b16 %v2316, %v2314
  %v2425 = vpack.c.b16 %v2319, %v2317
  %v2426 = vpack.c.b16 %v2320, %v2318
  %v2427 = vpack.c.b16 %v2323, %v2321
  %v2428 = vpack.c.b16 %v2324, %v2322
  %v2429 = vpack.c.b16 %v2327, %v2325
  %v2430 = vpack.c.b16 %v2328, %v2326
  %v2431 = vpack.c.b16 %v2331, %v2329
  %v2432 = vpack.c.b16 %v2332, %v2330
  %v2433 = vpack.c.b16 %v2335, %v2333
  %v2434 = vpack.c.b16 %v2336, %v2334
  %v2435 = vpack.c.b16 %v2339, %v2337
  %v2436 = vpack.c.b16 %v2340, %v2338
  %v2437 = vpack.c.b16 %v2343, %v2341
  %v2438 = vpack.c.b16 %v2344, %v2342
  %v2439 = vpack.c.b16 %v2347, %v2345
  %v2440 = vpack.c.b16 %v2348, %v2346
  %v2441 = vpack.c.b16 %v2351, %v2349
  %v2442 = vpack.c.b16 %v2352, %v2350
  %v2443 = vpack.c.b16 %v2355, %v2353
  %v2444 = vpack.c.b16 %v2356, %v2354
  %v2445 = vpack.c.b16 %v2359, %v2357
  %v2446 = vpack.c.b16 %v2360, %v2358
  %v2447 = vpack.c.b16 %v2363, %v2361
  %v2448 = vpack.c.b16 %v2364, %v2362
  %v2449 = vpack.c.b16 %v2367, %v2365
  %v2450 = vpack.c.b16 %v2368, %v2366
  %v2451 = vpack.c.b16 %v2371, %v2369
  %v2452 = vpack.c.b16 %v2372, %v2370
  %2533 = vmatprep.subr.bf16.mxu0 %v2374
  %2534 = vmatpush1.bf16.msra.mxu0 %v2373
  %2535 = vmatprep.subr.bf16.mxu0 %v2376
  %2536 = vmatpush1.bf16.msra.mxu0 %v2375
  %2537 = vmatprep.subr.bf16.mxu0 %v2378
  %2538 = vmatpush1.bf16.msra.mxu0 %v2377
  %2539 = vmatprep.subr.bf16.mxu0 %v2380
  %2540 = vmatpush1.bf16.msra.mxu0 %v2379
  %2541 = vmatprep.subr.bf16.mxu0 %v2382
  %2542 = vmatpush1.bf16.msra.mxu0 %v2381
  %2543 = vmatprep.subr.bf16.mxu0 %v2384
  %2544 = vmatpush1.bf16.msra.mxu0 %v2383
  %2545 = vmatprep.subr.bf16.mxu0 %v2386
  %2546 = vmatpush1.bf16.msra.mxu0 %v2385
  %2547 = vmatprep.subr.bf16.mxu0 %v2388
  %2548 = vmatpush1.bf16.msra.mxu0 %v2387
  %2549 = vmatprep.subr.bf16.mxu0 %v2390
  %2550 = vmatpush1.bf16.msra.mxu0 %v2389
  %2551 = vmatprep.subr.bf16.mxu0 %v2392
  %2552 = vmatpush1.bf16.msra.mxu0 %v2391
  %2553 = vmatprep.subr.bf16.mxu0 %v2394
  %2554 = vmatpush1.bf16.msra.mxu0 %v2393
  %2555 = vmatprep.subr.bf16.mxu0 %v2396
  %2556 = vmatpush1.bf16.msra.mxu0 %v2395
  %2557 = vmatprep.subr.bf16.mxu0 %v2398
  %2558 = vmatpush1.bf16.msra.mxu0 %v2397
  %2559 = vmatprep.subr.bf16.mxu0 %v2400
  %2560 = vmatpush1.bf16.msra.mxu0 %v2399
  %2561 = vmatprep.subr.bf16.mxu0 %v2402
  %2562 = vmatpush1.bf16.msra.mxu0 %v2401
  %2563 = vmatprep.subr.bf16.mxu0 %v2404
  %2564 = vmatpush1.bf16.msra.mxu0 %v2403
  %2565 = vmatprep.mubr.bf16.mxu0 %v1855
  %2566 = vmatmul.mubr.bf16.gmra.mrb[0].mxu0 %v1821
  %v2567 = vpop.f32.mrb[0].mxu0
  %v2568 = vadd.f32 0.0, %v2567
  %v2569 = vpop.f32.mrb[0].mxu0
  %v2570 = vadd.f32 0.0, %v2569
  %v2571 = vpop.f32.mrb[0].mxu0
  %v2572 = vadd.f32 0.0, %v2571
  %v2573 = vpop.f32.mrb[0].mxu0
  %v2574 = vadd.f32 0.0, %v2573
  %2575 = vmatprep.mubr.bf16.mxu0 %v1857
  %2576 = vmatmul.mubr.bf16.gmra.mrb[0].mxu0 %v1822
  %v2577 = vpop.f32.mrb[0].mxu0
  %v2578 = vadd.f32 0.0, %v2577
  %v2579 = vpop.f32.mrb[0].mxu0
  %v2580 = vadd.f32 0.0, %v2579
  %v2581 = vpop.f32.mrb[0].mxu0
  %v2582 = vpop.f32.mrb[0].mxu0
  %2583 = vmatprep.mubr.bf16.mxu0 %v1859
  %2584 = vmatmul.mubr.bf16.gmra.mrb[0].mxu0 %v1823
  %v2585 = vpop.f32.mrb[0].mxu0
  %v2586 = vadd.f32 0.0, %v2585
  %v2587 = vpop.f32.mrb[0].mxu0
  %v2588 = vadd.f32 0.0, %v2587
  %v2589 = vpop.f32.mrb[0].mxu0
  %v2590 = vadd.f32 0.0, %v2589
  %v2591 = vpop.f32.mrb[0].mxu0
  %v2592 = vadd.f32 0.0, %v2591
  %2593 = vmatprep.mubr.bf16.mxu0 %v1861
  %2594 = vmatmul.mubr.bf16.gmra.mrb[0].mxu0 %v1824
  %v2595 = vpop.f32.mrb[0].mxu0
  %v2596 = vadd.f32 0.0, %v2595
  %v2597 = vpop.f32.mrb[0].mxu0
  %v2598 = vadd.f32 0.0, %v2597
  %v2599 = vpop.f32.mrb[0].mxu0
  %v2600 = vpop.f32.mrb[0].mxu0
  %2601 = vmatprep.mubr.bf16.mxu0 %v1863
  %2602 = vmatmul.mubr.bf16.gmra.mrb[0].mxu0 %v1825
  %v2603 = vpop.f32.mrb[0].mxu0
  %v2604 = vadd.f32 0.0, %v2603
  %v2605 = vpop.f32.mrb[0].mxu0
  %v2606 = vadd.f32 0.0, %v2605
  %v2607 = vpop.f32.mrb[0].mxu0
  %v2608 = vadd.f32 0.0, %v2607
  %v2609 = vpop.f32.mrb[0].mxu0
  %v2610 = vadd.f32 0.0, %v2609
  %2611 = vmatprep.mubr.bf16.mxu0 %v1865
  %2612 = vmatmul.mubr.bf16.gmra.mrb[0].mxu0 %v1826
  %v2613 = vpop.f32.mrb[0].mxu0
  %v2614 = vadd.f32 0.0, %v2613
  %v2615 = vpop.f32.mrb[0].mxu0
  %v2616 = vadd.f32 0.0, %v2615
  %v2617 = vpop.f32.mrb[0].mxu0
  %v2618 = vpop.f32.mrb[0].mxu0
  %2619 = vmatprep.mubr.bf16.mxu0 %v1867
  %2620 = vmatmul.mubr.bf16.gmra.mrb[0].mxu0 %v1827
  %v2621 = vpop.f32.mrb[0].mxu0
  %v2622 = vadd.f32 0.0, %v2621
  %v2623 = vpop.f32.mrb[0].mxu0
  %v2624 = vadd.f32 0.0, %v2623
  %v2625 = vpop.f32.mrb[0].mxu0
  %v2626 = vadd.f32 0.0, %v2625
  %v2627 = vpop.f32.mrb[0].mxu0
  %v2628 = vadd.f32 0.0, %v2627
  %2629 = vmatprep.mubr.bf16.mxu0 %v1869
  %2630 = vmatmul.mubr.bf16.gmra.mrb[0].mxu0 %v1828
  %v2631 = vpop.f32.mrb[0].mxu0
  %v2632 = vadd.f32 0.0, %v2631
  %v2633 = vpop.f32.mrb[0].mxu0
  %v2634 = vadd.f32 0.0, %v2633
  %v2635 = vpop.f32.mrb[0].mxu0
  %v2636 = vpop.f32.mrb[0].mxu0
  %2637 = vmatprep.mubr.bf16.mxu0 %v1871
  %2638 = vmatmul.mubr.bf16.gmra.mrb[0].mxu0 %v1829
  %v2639 = vpop.f32.mrb[0].mxu0
  %v2640 = vadd.f32 0.0, %v2639
  %v2641 = vpop.f32.mrb[0].mxu0
  %v2642 = vadd.f32 0.0, %v2641
  %v2643 = vpop.f32.mrb[0].mxu0
  %v2644 = vadd.f32 0.0, %v2643
  %v2645 = vpop.f32.mrb[0].mxu0
  %v2646 = vadd.f32 0.0, %v2645
  %2647 = vmatprep.mubr.bf16.mxu0 %v1873
  %2648 = vmatmul.mubr.bf16.gmra.mrb[0].mxu0 %v1830
  %v2649 = vpop.f32.mrb[0].mxu0
  %v2650 = vadd.f32 0.0, %v2649
  %v2651 = vpop.f32.mrb[0].mxu0
  %v2652 = vadd.f32 0.0, %v2651
  %v2653 = vpop.f32.mrb[0].mxu0
  %v2654 = vpop.f32.mrb[0].mxu0
  %2655 = vmatprep.mubr.bf16.mxu0 %v1875
  %2656 = vmatmul.mubr.bf16.gmra.mrb[0].mxu0 %v1831
  %v2657 = vpop.f32.mrb[0].mxu0
  %v2658 = vadd.f32 0.0, %v2657
  %v2659 = vpop.f32.mrb[0].mxu0
  %v2660 = vadd.f32 0.0, %v2659
  %v2661 = vpop.f32.mrb[0].mxu0
  %v2662 = vadd.f32 0.0, %v2661
  %v2663 = vpop.f32.mrb[0].mxu0
  %v2664 = vadd.f32 0.0, %v2663
  %2665 = vmatprep.mubr.bf16.mxu0 %v1877
  %2666 = vmatmul.mubr.bf16.gmra.mrb[0].mxu0 %v1832
  %v2667 = vpop.f32.mrb[0].mxu0
  %v2668 = vadd.f32 0.0, %v2667
  %v2669 = vpop.f32.mrb[0].mxu0
  %v2670 = vadd.f32 0.0, %v2669
  %v2671 = vpop.f32.mrb[0].mxu0
  %v2672 = vpop.f32.mrb[0].mxu0
  %2673 = vmatprep.mubr.bf16.mxu0 %v1879
  %2674 = vmatmul.mubr.bf16.gmra.mrb[0].mxu0 %v1833
  %v2675 = vpop.f32.mrb[0].mxu0
  %v2676 = vadd.f32 0.0, %v2675
  %v2677 = vpop.f32.mrb[0].mxu0
  %v2678 = vadd.f32 0.0, %v2677
  %v2679 = vpop.f32.mrb[0].mxu0
  %v2680 = vadd.f32 0.0, %v2679
  %v2681 = vpop.f32.mrb[0].mxu0
  %v2682 = vadd.f32 0.0, %v2681
  %2683 = vmatprep.mubr.bf16.mxu0 %v1881
  %2684 = vmatmul.mubr.bf16.gmra.mrb[0].mxu0 %v1834
  %v2685 = vpop.f32.mrb[0].mxu0
  %v2686 = vadd.f32 0.0, %v2685
  %v2687 = vpop.f32.mrb[0].mxu0
  %v2688 = vadd.f32 0.0, %v2687
  %v2689 = vpop.f32.mrb[0].mxu0
  %v2690 = vpop.f32.mrb[0].mxu0
  %2691 = vmatprep.mubr.bf16.mxu0 %v1883
  %2692 = vmatmul.mubr.bf16.gmra.mrb[0].mxu0 %v1835
  %v2693 = vpop.f32.mrb[0].mxu0
  %v2694 = vadd.f32 0.0, %v2693
  %v2695 = vpop.f32.mrb[0].mxu0
  %v2696 = vadd.f32 0.0, %v2695
  %v2697 = vpop.f32.mrb[0].mxu0
  %v2698 = vadd.f32 0.0, %v2697
  %v2699 = vpop.f32.mrb[0].mxu0
  %v2700 = vadd.f32 0.0, %v2699
  %2701 = vmatprep.mubr.bf16.mxu0 %v1900
  %2702 = vmatmul.mubr.bf16.gmra.mrb[0].mxu0 %v1836
  %v2703 = vpop.f32.mrb[0].mxu0
  %v2704 = vadd.f32 0.0, %v2703
  %v2705 = vpop.f32.mrb[0].mxu0
  %v2706 = vadd.f32 0.0, %v2705
  %v2707 = vpop.f32.mrb[0].mxu0
  %v2708 = vpop.f32.mrb[0].mxu0
  %2709 = vdwg.mxu0
  %2710 = vmatprep.subr.bf16.mxu0 %v2406
  %2711 = vmatpush1.bf16.msra.mxu0 %v2405
  %2712 = vmatprep.subr.bf16.mxu0 %v2408
  %2713 = vmatpush1.bf16.msra.mxu0 %v2407
  %2714 = vmatprep.subr.bf16.mxu0 %v2410
  %2715 = vmatpush1.bf16.msra.mxu0 %v2409
  %2716 = vmatprep.subr.bf16.mxu0 %v2412
  %2717 = vmatpush1.bf16.msra.mxu0 %v2411
  %2718 = vmatprep.subr.bf16.mxu0 %v2414
  %2719 = vmatpush1.bf16.msra.mxu0 %v2413
  %2720 = vmatprep.subr.bf16.mxu0 %v2416
  %2721 = vmatpush1.bf16.msra.mxu0 %v2415
  %2722 = vmatprep.subr.bf16.mxu0 %v2418
  %2723 = vmatpush1.bf16.msra.mxu0 %v2417
  %2724 = vmatprep.subr.bf16.mxu0 %v2420
  %2725 = vmatpush1.bf16.msra.mxu0 %v2419
  %2726 = vmatprep.subr.bf16.mxu0 %v2422
  %2727 = vmatpush1.bf16.msra.mxu0 %v2421
  %2728 = vmatprep.subr.bf16.mxu0 %v2424
  %2729 = vmatpush1.bf16.msra.mxu0 %v2423
  %2730 = vmatprep.subr.bf16.mxu0 %v2426
  %2731 = vmatpush1.bf16.msra.mxu0 %v2425
  %2732 = vmatprep.subr.bf16.mxu0 %v2428
  %2733 = vmatpush1.bf16.msra.mxu0 %v2427
  %2734 = vmatprep.subr.bf16.mxu0 %v2430
  %2735 = vmatpush1.bf16.msra.mxu0 %v2429
  %2736 = vmatprep.subr.bf16.mxu0 %v2432
  %2737 = vmatpush1.bf16.msra.mxu0 %v2431
  %2738 = vmatprep.subr.bf16.mxu0 %v2434
  %2739 = vmatpush1.bf16.msra.mxu0 %v2433
  %2740 = vmatprep.subr.bf16.mxu0 %v2436
  %2741 = vmatpush1.bf16.msra.mxu0 %v2435
  %2742 = vmatprep.mubr.bf16.mxu0 %v1954
  %2743 = vmatmul.mubr.bf16.gmra.mrb[0].mxu0 %v1904
  %v2744 = vpop.f32.mrb[0].mxu0
  %v2745 = vadd.f32 %v2568, %v2744
  %v2746 = vpop.f32.mrb[0].mxu0
  %v2747 = vadd.f32 %v2570, %v2746
  %v2748 = vpop.f32.mrb[0].mxu0
  %v2749 = vadd.f32 %v2572, %v2748
  %v2750 = vpop.f32.mrb[0].mxu0
  %v2751 = vadd.f32 %v2574, %v2750
  %2752 = vmatprep.mubr.bf16.mxu0 %v1956
  %2753 = vmatmul.mubr.bf16.gmra.mrb[0].mxu0 %v1906
  %v2754 = vpop.f32.mrb[0].mxu0
  %v2755 = vadd.f32 %v2578, %v2754
  %v2756 = vpop.f32.mrb[0].mxu0
  %v2757 = vadd.f32 %v2580, %v2756
  %v2758 = vpop.f32.mrb[0].mxu0
  %v2759 = vpop.f32.mrb[0].mxu0
  %2760 = vmatprep.mubr.bf16.mxu0 %v1958
  %2761 = vmatmul.mubr.bf16.gmra.mrb[0].mxu0 %v1908
  %v2762 = vpop.f32.mrb[0].mxu0
  %v2763 = vadd.f32 %v2586, %v2762
  %v2764 = vpop.f32.mrb[0].mxu0
  %v2765 = vadd.f32 %v2588, %v2764
  %v2766 = vpop.f32.mrb[0].mxu0
  %v2767 = vadd.f32 %v2590, %v2766
  %v2768 = vpop.f32.mrb[0].mxu0
  %v2769 = vadd.f32 %v2592, %v2768
  %2770 = vmatprep.mubr.bf16.mxu0 %v1960
  %2771 = vmatmul.mubr.bf16.gmra.mrb[0].mxu0 %v1910
  %v2772 = vpop.f32.mrb[0].mxu0
  %v2773 = vadd.f32 %v2596, %v2772
  %v2774 = vpop.f32.mrb[0].mxu0
  %v2775 = vadd.f32 %v2598, %v2774
  %v2776 = vpop.f32.mrb[0].mxu0
  %v2777 = vpop.f32.mrb[0].mxu0
  %2778 = vmatprep.mubr.bf16.mxu0 %v1962
  %2779 = vmatmul.mubr.bf16.gmra.mrb[0].mxu0 %v1912
  %v2780 = vpop.f32.mrb[0].mxu0
  %v2781 = vadd.f32 %v2604, %v2780
  %v2782 = vpop.f32.mrb[0].mxu0
  %v2783 = vadd.f32 %v2606, %v2782
  %v2784 = vpop.f32.mrb[0].mxu0
  %v2785 = vadd.f32 %v2608, %v2784
  %v2786 = vpop.f32.mrb[0].mxu0
  %v2787 = vadd.f32 %v2610, %v2786
  %2788 = vmatprep.mubr.bf16.mxu0 %v1964
  %2789 = vmatmul.mubr.bf16.gmra.mrb[0].mxu0 %v1914
  %v2790 = vpop.f32.mrb[0].mxu0
  %v2791 = vadd.f32 %v2614, %v2790
  %v2792 = vpop.f32.mrb[0].mxu0
  %v2793 = vadd.f32 %v2616, %v2792
  %v2794 = vpop.f32.mrb[0].mxu0
  %v2795 = vpop.f32.mrb[0].mxu0
  %2796 = vmatprep.mubr.bf16.mxu0 %v1966
  %2797 = vmatmul.mubr.bf16.gmra.mrb[0].mxu0 %v1916
  %v2798 = vpop.f32.mrb[0].mxu0
  %v2799 = vadd.f32 %v2622, %v2798
  %v2800 = vpop.f32.mrb[0].mxu0
  %v2801 = vadd.f32 %v2624, %v2800
  %v2802 = vpop.f32.mrb[0].mxu0
  %v2803 = vadd.f32 %v2626, %v2802
  %v2804 = vpop.f32.mrb[0].mxu0
  %v2805 = vadd.f32 %v2628, %v2804
  %2806 = vmatprep.mubr.bf16.mxu0 %v1968
  %2807 = vmatmul.mubr.bf16.gmra.mrb[0].mxu0 %v1918
  %v2808 = vpop.f32.mrb[0].mxu0
  %v2809 = vadd.f32 %v2632, %v2808
  %v2810 = vpop.f32.mrb[0].mxu0
  %v2811 = vadd.f32 %v2634, %v2810
  %v2812 = vpop.f32.mrb[0].mxu0
  %v2813 = vpop.f32.mrb[0].mxu0
  %2814 = vmatprep.mubr.bf16.mxu0 %v1970
  %2815 = vmatmul.mubr.bf16.gmra.mrb[0].mxu0 %v1920
  %v2816 = vpop.f32.mrb[0].mxu0
  %v2817 = vadd.f32 %v2640, %v2816
  %v2818 = vpop.f32.mrb[0].mxu0
  %v2819 = vadd.f32 %v2642, %v2818
  %v2820 = vpop.f32.mrb[0].mxu0
  %v2821 = vadd.f32 %v2644, %v2820
  %v2822 = vpop.f32.mrb[0].mxu0
  %v2823 = vadd.f32 %v2646, %v2822
  %2824 = vmatprep.mubr.bf16.mxu0 %v1972
  %2825 = vmatmul.mubr.bf16.gmra.mrb[0].mxu0 %v1922
  %v2826 = vpop.f32.mrb[0].mxu0
  %v2827 = vadd.f32 %v2650, %v2826
  %v2828 = vpop.f32.mrb[0].mxu0
  %v2829 = vadd.f32 %v2652, %v2828
  %v2830 = vpop.f32.mrb[0].mxu0
  %v2831 = vpop.f32.mrb[0].mxu0
  %2832 = vmatprep.mubr.bf16.mxu0 %v1974
  %2833 = vmatmul.mubr.bf16.gmra.mrb[0].mxu0 %v1924
  %v2834 = vpop.f32.mrb[0].mxu0
  %v2835 = vadd.f32 %v2658, %v2834
  %v2836 = vpop.f32.mrb[0].mxu0
  %v2837 = vadd.f32 %v2660, %v2836
  %v2838 = vpop.f32.mrb[0].mxu0
  %v2839 = vadd.f32 %v2662, %v2838
  %v2840 = vpop.f32.mrb[0].mxu0
  %v2841 = vadd.f32 %v2664, %v2840
  %2842 = vmatprep.mubr.bf16.mxu0 %v1976
  %2843 = vmatmul.mubr.bf16.gmra.mrb[0].mxu0 %v1926
  %v2844 = vpop.f32.mrb[0].mxu0
  %v2845 = vadd.f32 %v2668, %v2844
  %v2846 = vpop.f32.mrb[0].mxu0
  %v2847 = vadd.f32 %v2670, %v2846
  %v2848 = vpop.f32.mrb[0].mxu0
  %v2849 = vpop.f32.mrb[0].mxu0
  %2850 = vmatprep.mubr.bf16.mxu0 %v1978
  %2851 = vmatmul.mubr.bf16.gmra.mrb[0].mxu0 %v1928
  %v2852 = vpop.f32.mrb[0].mxu0
  %v2853 = vadd.f32 %v2676, %v2852
  %v2854 = vpop.f32.mrb[0].mxu0
  %v2855 = vadd.f32 %v2678, %v2854
  %v2856 = vpop.f32.mrb[0].mxu0
  %v2857 = vadd.f32 %v2680, %v2856
  %v2858 = vpop.f32.mrb[0].mxu0
  %v2859 = vadd.f32 %v2682, %v2858
  %2860 = vmatprep.mubr.bf16.mxu0 %v1980
  %2861 = vmatmul.mubr.bf16.gmra.mrb[0].mxu0 %v1930
  %v2862 = vpop.f32.mrb[0].mxu0
  %v2863 = vadd.f32 %v2686, %v2862
  %v2864 = vpop.f32.mrb[0].mxu0
  %v2865 = vadd.f32 %v2688, %v2864
  %v2866 = vpop.f32.mrb[0].mxu0
  %v2867 = vpop.f32.mrb[0].mxu0
  %2868 = vmatprep.mubr.bf16.mxu0 %v1982
  %2869 = vmatmul.mubr.bf16.gmra.mrb[0].mxu0 %v1932
  %v2870 = vpop.f32.mrb[0].mxu0
  %v2871 = vadd.f32 %v2694, %v2870
  %v2872 = vpop.f32.mrb[0].mxu0
  %v2873 = vadd.f32 %v2696, %v2872
  %v2874 = vpop.f32.mrb[0].mxu0
  %v2875 = vadd.f32 %v2698, %v2874
  %v2876 = vpop.f32.mrb[0].mxu0
  %v2877 = vadd.f32 %v2700, %v2876
  %2878 = vmatprep.mubr.bf16.mxu0 %v2000
  %2879 = vmatmul.mubr.bf16.gmra.mrb[0].mxu0 %v1949
  %v2880 = vpop.f32.mrb[0].mxu0
  %v2881 = vadd.f32 %v2704, %v2880
  %v2882 = vpop.f32.mrb[0].mxu0
  %v2883 = vadd.f32 %v2706, %v2882
  %v2884 = vpop.f32.mrb[0].mxu0
  %v2885 = vpop.f32.mrb[0].mxu0
  %2886 = vdwg.mxu0
  %2887 = vmatprep.subr.bf16.mxu0 %v2438
  %2888 = vmatpush1.bf16.msra.mxu0 %v2437
  %2889 = vmatprep.subr.bf16.mxu0 %v2440
  %2890 = vmatpush1.bf16.msra.mxu0 %v2439
  %2891 = vmatprep.subr.bf16.mxu0 %v2442
  %2892 = vmatpush1.bf16.msra.mxu0 %v2441
  %2893 = vmatprep.subr.bf16.mxu0 %v2444
  %2894 = vmatpush1.bf16.msra.mxu0 %v2443
  %2895 = vmatprep.subr.bf16.mxu0 %v2446
  %2896 = vmatpush1.bf16.msra.mxu0 %v2445
  %2897 = vmatprep.subr.bf16.mxu0 %v2448
  %2898 = vmatpush1.bf16.msra.mxu0 %v2447
  %2899 = vmatprep.subr.bf16.mxu0 %v2450
  %2900 = vmatpush1.bf16.msra.mxu0 %v2449
  %2901 = vmatprep.subr.bf16.mxu0 %v2452
  %2902 = vmatpush1.bf16.msra.mxu0 %v2451
  %2903 = vmatprep.subr.bf16.mxu0 0
  %2904 = vmatpush1.bf16.msra.mxu0 0
  %2905 = vmatprep.subr.bf16.mxu0 0
  %2906 = vmatpush1.bf16.msra.mxu0 0
  %2907 = vmatprep.subr.bf16.mxu0 0
  %2908 = vmatpush1.bf16.msra.mxu0 0
  %2909 = vmatprep.subr.bf16.mxu0 0
  %2910 = vmatpush1.bf16.msra.mxu0 0
  %2911 = vmatprep.subr.bf16.mxu0 0
  %2912 = vmatpush1.bf16.msra.mxu0 0
  %2913 = vmatprep.subr.bf16.mxu0 0
  %2914 = vmatpush1.bf16.msra.mxu0 0
  %2915 = vmatprep.subr.bf16.mxu0 0
  %2916 = vmatpush1.bf16.msra.mxu0 0
  %2917 = vmatprep.subr.bf16.mxu0 0
  %2918 = vmatpush1.bf16.msra.mxu0 0
  %2919 = vmatprep.mubr.bf16.mxu0 0
  %2920 = vmatmul.mubr.bf16.gmra.mrb[0].mxu0 %v2005
  %v2921 = vpop.f32.mrb[0].mxu0
  %v2922 = vadd.f32 %v2745, %v2921
  %v2923 = vpop.f32.mrb[0].mxu0
  %v2924 = vadd.f32 %v2747, %v2923
  %v2925 = vpop.f32.mrb[0].mxu0
  %v2926 = vadd.f32 %v2749, %v2925
  %v2927 = vpop.f32.mrb[0].mxu0
  %v2928 = vadd.f32 %v2751, %v2927
  %2929 = vmatprep.mubr.bf16.mxu0 0
  %2930 = vmatmul.mubr.bf16.gmra.mrb[0].mxu0 %v2007
  %v2931 = vpop.f32.mrb[0].mxu0
  %v2932 = vadd.f32 %v2755, %v2931
  %v2933 = vpop.f32.mrb[0].mxu0
  %v2934 = vadd.f32 %v2757, %v2933
  %v2935 = vpop.f32.mrb[0].mxu0
  %v2936 = vpop.f32.mrb[0].mxu0
  %2937 = vmatprep.mubr.bf16.mxu0 0
  %2938 = vmatmul.mubr.bf16.gmra.mrb[0].mxu0 %v2009
  %v2939 = vpop.f32.mrb[0].mxu0
  %v2940 = vadd.f32 %v2763, %v2939
  %v2941 = vpop.f32.mrb[0].mxu0
  %v2942 = vadd.f32 %v2765, %v2941
  %v2943 = vpop.f32.mrb[0].mxu0
  %v2944 = vadd.f32 %v2767, %v2943
  %v2945 = vpop.f32.mrb[0].mxu0
  %v2946 = vadd.f32 %v2769, %v2945
  %2947 = vmatprep.mubr.bf16.mxu0 0
  %2948 = vmatmul.mubr.bf16.gmra.mrb[0].mxu0 %v2011
  %v2949 = vpop.f32.mrb[0].mxu0
  %v2950 = vadd.f32 %v2773, %v2949
  %v2951 = vpop.f32.mrb[0].mxu0
  %v2952 = vadd.f32 %v2775, %v2951
  %v2953 = vpop.f32.mrb[0].mxu0
  %v2954 = vpop.f32.mrb[0].mxu0
  %2955 = vmatprep.mubr.bf16.mxu0 0
  %2956 = vmatmul.mubr.bf16.gmra.mrb[0].mxu0 %v2013
  %v2957 = vpop.f32.mrb[0].mxu0
  %v2958 = vadd.f32 %v2781, %v2957
  %v2959 = vpop.f32.mrb[0].mxu0
  %v2960 = vadd.f32 %v2783, %v2959
  %v2961 = vpop.f32.mrb[0].mxu0
  %v2962 = vadd.f32 %v2785, %v2961
  %v2963 = vpop.f32.mrb[0].mxu0
  %v2964 = vadd.f32 %v2787, %v2963
  %2965 = vmatprep.mubr.bf16.mxu0 0
  %2966 = vmatmul.mubr.bf16.gmra.mrb[0].mxu0 %v2015
  %v2967 = vpop.f32.mrb[0].mxu0
  %v2968 = vadd.f32 %v2791, %v2967
  %v2969 = vpop.f32.mrb[0].mxu0
  %v2970 = vadd.f32 %v2793, %v2969
  %v2971 = vpop.f32.mrb[0].mxu0
  %v2972 = vpop.f32.mrb[0].mxu0
  %2973 = vmatprep.mubr.bf16.mxu0 0
  %2974 = vmatmul.mubr.bf16.gmra.mrb[0].mxu0 %v2017
  %v2975 = vpop.f32.mrb[0].mxu0
  %v2976 = vadd.f32 %v2799, %v2975
  %v2977 = vpop.f32.mrb[0].mxu0
  %v2978 = vadd.f32 %v2801, %v2977
  %v2979 = vpop.f32.mrb[0].mxu0
  %v2980 = vadd.f32 %v2803, %v2979
  %v2981 = vpop.f32.mrb[0].mxu0
  %v2982 = vadd.f32 %v2805, %v2981
  %2983 = vmatprep.mubr.bf16.mxu0 0
  %2984 = vmatmul.mubr.bf16.gmra.mrb[0].mxu0 %v2019
  %v2985 = vpop.f32.mrb[0].mxu0
  %v2986 = vadd.f32 %v2809, %v2985
  %v2987 = vpop.f32.mrb[0].mxu0
  %v2988 = vadd.f32 %v2811, %v2987
  %v2989 = vpop.f32.mrb[0].mxu0
  %v2990 = vpop.f32.mrb[0].mxu0
  %2991 = vmatprep.mubr.bf16.mxu0 0
  %2992 = vmatmul.mubr.bf16.gmra.mrb[0].mxu0 %v2021
  %v2993 = vpop.f32.mrb[0].mxu0
  %v2994 = vadd.f32 %v2817, %v2993
  %v2995 = vpop.f32.mrb[0].mxu0
  %v2996 = vadd.f32 %v2819, %v2995
  %v2997 = vpop.f32.mrb[0].mxu0
  %v2998 = vadd.f32 %v2821, %v2997
  %v2999 = vpop.f32.mrb[0].mxu0
  %v3000 = vadd.f32 %v2823, %v2999
  %3001 = vmatprep.mubr.bf16.mxu0 0
  %3002 = vmatmul.mubr.bf16.gmra.mrb[0].mxu0 %v2023
  %v3003 = vpop.f32.mrb[0].mxu0
  %v3004 = vadd.f32 %v2827, %v3003
  %v3005 = vpop.f32.mrb[0].mxu0
  %v3006 = vadd.f32 %v2829, %v3005
  %v3007 = vpop.f32.mrb[0].mxu0
  %v3008 = vpop.f32.mrb[0].mxu0
  %3009 = vmatprep.mubr.bf16.mxu0 0
  %3010 = vmatmul.mubr.bf16.gmra.mrb[0].mxu0 %v2025
  %v3011 = vpop.f32.mrb[0].mxu0
  %v3012 = vadd.f32 %v2835, %v3011
  %v3013 = vpop.f32.mrb[0].mxu0
  %v3014 = vadd.f32 %v2837, %v3013
  %v3015 = vpop.f32.mrb[0].mxu0
  %v3016 = vadd.f32 %v2839, %v3015
  %v3017 = vpop.f32.mrb[0].mxu0
  %v3018 = vadd.f32 %v2841, %v3017
  %3019 = vmatprep.mubr.bf16.mxu0 0
  %3020 = vmatmul.mubr.bf16.gmra.mrb[0].mxu0 %v2027
  %v3021 = vpop.f32.mrb[0].mxu0
  %v3022 = vadd.f32 %v2845, %v3021
  %v3023 = vpop.f32.mrb[0].mxu0
  %v3024 = vadd.f32 %v2847, %v3023
  %v3025 = vpop.f32.mrb[0].mxu0
  %v3026 = vpop.f32.mrb[0].mxu0
  %3027 = vmatprep.mubr.bf16.mxu0 0
  %3028 = vmatmul.mubr.bf16.gmra.mrb[0].mxu0 %v2029
  %v3029 = vpop.f32.mrb[0].mxu0
  %v3030 = vadd.f32 %v2853, %v3029
  %v3031 = vpop.f32.mrb[0].mxu0
  %v3032 = vadd.f32 %v2855, %v3031
  %v3033 = vpop.f32.mrb[0].mxu0
  %v3034 = vadd.f32 %v2857, %v3033
  %v3035 = vpop.f32.mrb[0].mxu0
  %v3036 = vadd.f32 %v2859, %v3035
  %3037 = vmatprep.mubr.bf16.mxu0 0
  %3038 = vmatmul.mubr.bf16.gmra.mrb[0].mxu0 %v2031
  %v3039 = vpop.f32.mrb[0].mxu0
  %v3040 = vadd.f32 %v2863, %v3039
  %v3041 = vpop.f32.mrb[0].mxu0
  %v3042 = vadd.f32 %v2865, %v3041
  %v3043 = vpop.f32.mrb[0].mxu0
  %v3044 = vpop.f32.mrb[0].mxu0
  %3045 = vmatprep.mubr.bf16.mxu0 0
  %3046 = vmatmul.mubr.bf16.gmra.mrb[0].mxu0 %v2033
  %v3047 = vpop.f32.mrb[0].mxu0
  %v3048 = vadd.f32 %v2871, %v3047
  %v3049 = vpop.f32.mrb[0].mxu0
  %v3050 = vadd.f32 %v2873, %v3049
  %v3051 = vpop.f32.mrb[0].mxu0
  %v3052 = vadd.f32 %v2875, %v3051
  %v3053 = vpop.f32.mrb[0].mxu0
  %v3054 = vadd.f32 %v2877, %v3053
  %3055 = vmatprep.mubr.bf16.mxu0 0
  %3056 = vmatmul.mubr.bf16.gmra.mrb[0].mxu0 %v2051
  %v3057 = vpop.f32.mrb[0].mxu0
  %v3058 = vadd.f32 %v2881, %v3057
  %v3059 = vpop.f32.mrb[0].mxu0
  %v3060 = vadd.f32 %v2883, %v3059
  %v3061 = vpop.f32.mrb[0].mxu0
  %v3062 = vpop.f32.mrb[0].mxu0
  %3063 = vdwg.mxu0
  %v3064 = vmax.f32 %v2922, %v2924
  %v3065 = vmax.f32 %v2926, %v2928
  %v3066 = vmax.f32 %v2932, %v2934
  %v3067 = vmax.f32 %v2940, %v2942
  %v3068 = vmax.f32 %v2944, %v2946
  %v3069 = vmax.f32 %v2950, %v2952
  %v3070 = vmax.f32 %v2958, %v2960
  %v3071 = vmax.f32 %v2962, %v2964
  %v3072 = vmax.f32 %v2968, %v2970
  %v3073 = vmax.f32 %v2976, %v2978
  %v3074 = vmax.f32 %v2980, %v2982
  %v3075 = vmax.f32 %v2986, %v2988
  %v3076 = vmax.f32 %v2994, %v2996
  %v3077 = vmax.f32 %v2998, %v3000
  %v3078 = vmax.f32 %v3004, %v3006
  %v3079 = vmax.f32 %v3012, %v3014
  %v3080 = vmax.f32 %v3016, %v3018
  %v3081 = vmax.f32 %v3022, %v3024
  %v3082 = vmax.f32 %v3030, %v3032
  %v3083 = vmax.f32 %v3034, %v3036
  %v3084 = vmax.f32 %v3040, %v3042
  %v3085 = vmax.f32 %v3048, %v3050
  %v3086 = vmax.f32 %v3052, %v3054
  %v3087 = vmax.f32 %v3058, %v3060
  %v3112 = vrot.slane %v3064, 2
  %v3113 = vrot.slane %v3065, 2
  %v3114 = vsel %vm479, %v3112, %v3113
  %v3115 = vrot.slane %v3066, 2
  %v3116 = vsel %vm479, %v3113, %v3115
  %v3117 = vrot.slane %v3067, 2
  %v3118 = vrot.slane %v3068, 2
  %v3119 = vsel %vm479, %v3117, %v3118
  %v3120 = vrot.slane %v3069, 2
  %v3121 = vsel %vm479, %v3118, %v3120
  %v3122 = vrot.slane %v3070, 2
  %v3123 = vrot.slane %v3071, 2
  %v3124 = vsel %vm479, %v3122, %v3123
  %v3125 = vrot.slane %v3072, 2
  %v3126 = vsel %vm479, %v3123, %v3125
  %v3127 = vrot.slane %v3073, 2
  %v3128 = vrot.slane %v3074, 2
  %v3129 = vsel %vm479, %v3127, %v3128
  %v3130 = vrot.slane %v3075, 2
  %v3131 = vsel %vm479, %v3128, %v3130
  %v3132 = vrot.slane %v3076, 2
  %v3133 = vrot.slane %v3077, 2
  %v3134 = vsel %vm479, %v3132, %v3133
  %v3135 = vrot.slane %v3078, 2
  %v3136 = vsel %vm479, %v3133, %v3135
  %v3137 = vrot.slane %v3079, 2
  %v3138 = vrot.slane %v3080, 2
  %v3139 = vsel %vm479, %v3137, %v3138
  %v3140 = vrot.slane %v3081, 2
  %v3141 = vsel %vm479, %v3138, %v3140
  %v3142 = vrot.slane %v3082, 2
  %v3143 = vrot.slane %v3083, 2
  %v3144 = vsel %vm479, %v3142, %v3143
  %v3145 = vrot.slane %v3084, 2
  %v3146 = vsel %vm479, %v3143, %v3145
  %v3147 = vrot.slane %v3085, 2
  %v3148 = vrot.slane %v3086, 2
  %v3149 = vsel %vm479, %v3147, %v3148
  %v3150 = vrot.slane %v3087, 2
  %v3151 = vsel %vm479, %v3148, %v3150
  %v3168 = vmax.f32 %v3064, %v3114
  %v3169 = vmax.f32 %v3065, %v3116
  %v3170 = vmax.f32 %v3067, %v3119
  %v3171 = vmax.f32 %v3068, %v3121
  %v3172 = vmax.f32 %v3070, %v3124
  %v3173 = vmax.f32 %v3071, %v3126
  %v3174 = vmax.f32 %v3073, %v3129
  %v3175 = vmax.f32 %v3074, %v3131
  %v3176 = vmax.f32 %v3076, %v3134
  %v3177 = vmax.f32 %v3077, %v3136
  %v3178 = vmax.f32 %v3079, %v3139
  %v3179 = vmax.f32 %v3080, %v3141
  %v3180 = vmax.f32 %v3082, %v3144
  %v3181 = vmax.f32 %v3083, %v3146
  %v3182 = vmax.f32 %v3085, %v3149
  %v3183 = vmax.f32 %v3086, %v3151
  %v3184 = vld [vmem:[%s4] sm:$0x1]
  %v3186 = vlaneseq
  %v3187 = vshrl.u32 %v3186, 7
  %v3188 = vsub.s32 0, %v3187
  %v3189 = vrot.slane %v3184, %v3188
  %v3191 = vadd.f32 %v3168, %v3189
  %v3192 = vadd.f32 %v3169, %v3189
  %v3193 = vadd.f32 %v3170, %v3189
  %v3194 = vadd.f32 %v3171, %v3189
  %v3195 = vadd.f32 %v3172, %v3189
  %v3196 = vadd.f32 %v3173, %v3189
  %v3197 = vadd.f32 %v3174, %v3189
  %v3198 = vadd.f32 %v3175, %v3189
  %v3199 = vadd.f32 %v3176, %v3189
  %v3200 = vadd.f32 %v3177, %v3189
  %v3201 = vadd.f32 %v3178, %v3189
  %v3202 = vadd.f32 %v3179, %v3189
  %v3203 = vadd.f32 %v3180, %v3189
  %v3204 = vadd.f32 %v3181, %v3189
  %v3205 = vadd.f32 %v3182, %v3189
  %v3206 = vadd.f32 %v3183, %v3189
  %v3207 = vmax.f32 %v3191, 0.0
  %v3208 = vmax.f32 %v3192, 0.0
  %v3209 = vmax.f32 %v3193, 0.0
  %v3210 = vmax.f32 %v3194, 0.0
  %v3211 = vmax.f32 %v3195, 0.0
  %v3212 = vmax.f32 %v3196, 0.0
  %v3213 = vmax.f32 %v3197, 0.0
  %v3214 = vmax.f32 %v3198, 0.0
  %v3215 = vmax.f32 %v3199, 0.0
  %v3216 = vmax.f32 %v3200, 0.0
  %v3217 = vmax.f32 %v3201, 0.0
  %v3218 = vmax.f32 %v3202, 0.0
  %v3219 = vmax.f32 %v3203, 0.0
  %v3220 = vmax.f32 %v3204, 0.0
  %v3221 = vmax.f32 %v3205, 0.0
  %v3222 = vmax.f32 %v3206, 0.0
  %v3223 = vpack.c.bf16 %v3208, %v3207
  %v3224 = vpack.c.bf16 %v3210, %v3209
  %v3225 = vpack.c.bf16 %v3212, %v3211
  %v3226 = vpack.c.bf16 %v3214, %v3213
  %v3227 = vpack.c.bf16 %v3216, %v3215
  %v3228 = vpack.c.bf16 %v3218, %v3217
  %v3229 = vpack.c.bf16 %v3220, %v3219
  %v3230 = vpack.c.bf16 %v3222, %v3221
  %v3239 = vunpack.c.l.b16 %v3223
  %v3240 = vunpack.c.l.b16 %v3224
  %v3241 = vunpack.c.l.b16 %v3225
  %v3242 = vunpack.c.l.b16 %v3226
  %v3243 = vunpack.c.l.b16 %v3227
  %v3244 = vunpack.c.l.b16 %v3228
  %v3245 = vunpack.c.l.b16 %v3229
  %v3246 = vunpack.c.l.b16 %v3230
  %v3247 = vrot.slane %v3240, 7
  %vm3248 = vcmask 1041409
  %v3249 = vsel %vm3248, %v3247, %v3239
  %v3250 = vrot.slane %v3241, 6
  %vm3251 = vcmask 1042434
  %v3252 = vsel %vm3251, %v3250, %v3249
  %v3253 = vrot.slane %v3242, 5
  %vm3254 = vcmask 1043459
  %v3255 = vsel %vm3254, %v3253, %v3252
  %v3256 = vrot.slane %v3243, 4
  %vm3257 = vcmask 1044484
  %v3258 = vsel %vm3257, %v3256, %v3255
  %v3259 = vrot.slane %v3244, 3
  %vm3260 = vcmask 1045509
  %v3261 = vsel %vm3260, %v3259, %v3258
  %v3262 = vrot.slane %v3245, 2
  %vm3263 = vcmask 1046534
  %v3264 = vsel %vm3263, %v3262, %v3261
  %v3265 = vrot.slane %v3246, 1
  %vm3266 = vcmask 1047559
  %v3267 = vsel %vm3266, %v3265, %v3264
  %v3268 = vpack.c.b16 %v3267, %v3267
  %v3270 = vrot.slane %v3239, 4
  %v3271 = vrot.slane %v3240, 3
  %v3272 = vsel %vm3248, %v3271, %v3270
  %v3273 = vrot.slane %v3241, 2
  %v3274 = vsel %vm3251, %v3273, %v3272
  %v3275 = vrot.slane %v3242, 1
  %v3276 = vsel %vm3254, %v3275, %v3274
  %v3277 = vsel %vm3257, %v3243, %v3276
  %v3278 = vrot.slane %v3244, 7
  %v3279 = vsel %vm3260, %v3278, %v3277
  %v3280 = vrot.slane %v3245, 6
  %v3281 = vsel %vm3263, %v3280, %v3279
  %v3282 = vrot.slane %v3246, 5
  %v3283 = vsel %vm3266, %v3282, %v3281
  %v3284 = vpack.c.b16 %v3283, %v3283
  %v3286 = vunpack.c.h.b16 %v3223
  %v3287 = vunpack.c.h.b16 %v3224
  %v3288 = vunpack.c.h.b16 %v3225
  %v3289 = vunpack.c.h.b16 %v3226
  %v3290 = vunpack.c.h.b16 %v3227
  %v3291 = vunpack.c.h.b16 %v3228
  %v3292 = vunpack.c.h.b16 %v3229
  %v3293 = vunpack.c.h.b16 %v3230
  %v3294 = vrot.slane %v3287, 7
  %v3295 = vsel %vm3248, %v3294, %v3286
  %v3296 = vrot.slane %v3288, 6
  %v3297 = vsel %vm3251, %v3296, %v3295
  %v3298 = vrot.slane %v3289, 5
  %v3299 = vsel %vm3254, %v3298, %v3297
  %v3300 = vrot.slane %v3290, 4
  %v3301 = vsel %vm3257, %v3300, %v3299
  %v3302 = vrot.slane %v3291, 3
  %v3303 = vsel %vm3260, %v3302, %v3301
  %v3304 = vrot.slane %v3292, 2
  %v3305 = vsel %vm3263, %v3304, %v3303
  %v3306 = vrot.slane %v3293, 1
  %v3307 = vsel %vm3266, %v3306, %v3305
  %v3308 = vpack.c.b16 %v3307, %v3307
  %v3310 = vrot.slane %v3286, 4
  %v3311 = vrot.slane %v3287, 3
  %v3312 = vsel %vm3248, %v3311, %v3310
  %v3313 = vrot.slane %v3288, 2
  %v3314 = vsel %vm3251, %v3313, %v3312
  %v3315 = vrot.slane %v3289, 1
  %v3316 = vsel %vm3254, %v3315, %v3314
  %v3317 = vsel %vm3257, %v3290, %v3316
  %v3318 = vrot.slane %v3291, 7
  %v3319 = vsel %vm3260, %v3318, %v3317
  %v3320 = vrot.slane %v3292, 6
  %v3321 = vsel %vm3263, %v3320, %v3319
  %v3322 = vrot.slane %v3293, 5
  %v3323 = vsel %vm3266, %v3322, %v3321
  %v3324 = vpack.c.b16 %v3323, %v3323
  %v3326 = vld [vmem:[%s5] sm:$0xf]
  %v3327 = vld [vmem:[%s5 + $0x4] sm:$0xf]
  %v3328 = vld [vmem:[%s5 + $0x8] sm:$0xf]
  %v3329 = vld [vmem:[%s5 + $0xc] sm:$0xf]
  %v3330 = vld [vmem:[%s5 + $0x10] sm:$0xf]
  %v3331 = vld [vmem:[%s5 + $0x14] sm:$0xf]
  %v3332 = vld [vmem:[%s5 + $0x18] sm:$0xf]
  %v3333 = vld [vmem:[%s5 + $0x1c] sm:$0xf]
  %v3334 = vld [vmem:[%s5 + $0x20] sm:$0xf]
  %v3335 = vld [vmem:[%s5 + $0x24] sm:$0xf]
  %v3336 = vld [vmem:[%s5 + $0x28] sm:$0xf]
  %v3337 = vld [vmem:[%s5 + $0x2c] sm:$0xf]
  %v3338 = vld [vmem:[%s5 + $0x30] sm:$0xf]
  %v3339 = vld [vmem:[%s5 + $0x34] sm:$0xf]
  %v3340 = vld [vmem:[%s5 + $0x38] sm:$0xf]
  %v3341 = vld [vmem:[%s5 + $0x3c] sm:$0xf]
  %v3342 = vld [vmem:[%s5 + $0x40] sm:$0xf]
  %v3343 = vld [vmem:[%s5 + $0x44] sm:$0xf]
  %v3344 = vld [vmem:[%s5 + $0x48] sm:$0xf]
  %v3345 = vld [vmem:[%s5 + $0x4c] sm:$0xf]
  %v3346 = vld [vmem:[%s5 + $0x50] sm:$0xf]
  %v3347 = vld [vmem:[%s5 + $0x54] sm:$0xf]
  %v3348 = vld [vmem:[%s5 + $0x58] sm:$0xf]
  %v3349 = vld [vmem:[%s5 + $0x5c] sm:$0xf]
  %v3350 = vld [vmem:[%s5 + $0x60] sm:$0xf]
  %v3351 = vld [vmem:[%s5 + $0x64] sm:$0xf]
  %v3352 = vld [vmem:[%s5 + $0x68] sm:$0xf]
  %v3353 = vld [vmem:[%s5 + $0x6c] sm:$0xf]
  %v3354 = vld [vmem:[%s5 + $0x70] sm:$0xf]
  %v3355 = vld [vmem:[%s5 + $0x74] sm:$0xf]
  %v3356 = vld [vmem:[%s5 + $0x78] sm:$0xf]
  %v3357 = vld [vmem:[%s5 + $0x7c] sm:$0xf]
  %v3358 = vld [vmem:[%s5 + $0x80] sm:$0xf]
  %v3359 = vld [vmem:[%s5 + $0x84] sm:$0xf]
  %v3360 = vld [vmem:[%s5 + $0x88] sm:$0xf]
  %v3361 = vld [vmem:[%s5 + $0x8c] sm:$0xf]
  %v3362 = vld [vmem:[%s5 + $0x90] sm:$0xf]
  %v3363 = vld [vmem:[%s5 + $0x94] sm:$0xf]
  %v3364 = vld [vmem:[%s5 + $0x98] sm:$0xf]
  %v3365 = vld [vmem:[%s5 + $0x9c] sm:$0xf]
  %v3366 = vld [vmem:[%s5 + $0xa0] sm:$0xf]
  %v3367 = vld [vmem:[%s5 + $0xa4] sm:$0xf]
  %v3368 = vld [vmem:[%s5 + $0xa8] sm:$0xf]
  %v3369 = vld [vmem:[%s5 + $0xac] sm:$0xf]
  %v3370 = vld [vmem:[%s5 + $0xb0] sm:$0xf]
  %v3371 = vld [vmem:[%s5 + $0xb4] sm:$0xf]
  %v3372 = vld [vmem:[%s5 + $0xb8] sm:$0xf]
  %v3373 = vld [vmem:[%s5 + $0xbc] sm:$0xf]
  %v3374 = vld [vmem:[%s5 + $0xc0] sm:$0xf]
  %v3375 = vld [vmem:[%s5 + $0xc4] sm:$0xf]
  %v3376 = vld [vmem:[%s5 + $0xc8] sm:$0xf]
  %v3377 = vld [vmem:[%s5 + $0xcc] sm:$0xf]
  %v3378 = vld [vmem:[%s5 + $0xd0] sm:$0xf]
  %v3379 = vld [vmem:[%s5 + $0xd4] sm:$0xf]
  %v3380 = vld [vmem:[%s5 + $0xd8] sm:$0xf]
  %v3381 = vld [vmem:[%s5 + $0xdc] sm:$0xf]
  %v3382 = vld [vmem:[%s5 + $0xe0] sm:$0xf]
  %v3383 = vld [vmem:[%s5 + $0xe4] sm:$0xf]
  %v3384 = vld [vmem:[%s5 + $0xe8] sm:$0xf]
  %v3385 = vld [vmem:[%s5 + $0xec] sm:$0xf]
  %v3386 = vld [vmem:[%s5 + $0xf0] sm:$0xf]
  %v3387 = vld [vmem:[%s5 + $0xf4] sm:$0xf]
  %v3388 = vld [vmem:[%s5 + $0xf8] sm:$0xf]
  %v3389 = vld [vmem:[%s5 + $0xfc] sm:$0xf]
  %v3390 = vld [vmem:[%s6] sm:$0x1]
  %v3392 = vlaneseq
  %v3393 = vshrl.u32 %v3392, 7
  %v3394 = vsub.s32 0, %v3393
  %v3395 = vrot.slane %v3390, %v3394
  %v3461 = vunpack.c.l.b16 %v3326
  %v3462 = vunpack.c.l.b16 %v3327
  %v3463 = vunpack.c.l.b16 %v3328
  %v3464 = vunpack.c.l.b16 %v3329
  %v3465 = vunpack.c.l.b16 %v3330
  %v3466 = vunpack.c.l.b16 %v3331
  %v3467 = vunpack.c.l.b16 %v3332
  %v3468 = vunpack.c.l.b16 %v3333
  %v3469 = vunpack.c.l.b16 %v3334
  %v3470 = vunpack.c.l.b16 %v3335
  %v3471 = vunpack.c.l.b16 %v3336
  %v3472 = vunpack.c.l.b16 %v3337
  %v3473 = vunpack.c.l.b16 %v3338
  %v3474 = vunpack.c.l.b16 %v3339
  %v3475 = vunpack.c.l.b16 %v3340
  %v3476 = vunpack.c.l.b16 %v3341
  %v3477 = vunpack.c.l.b16 %v3342
  %v3478 = vunpack.c.l.b16 %v3343
  %v3479 = vunpack.c.l.b16 %v3344
  %v3480 = vunpack.c.l.b16 %v3345
  %v3481 = vunpack.c.l.b16 %v3346
  %v3482 = vunpack.c.l.b16 %v3347
  %v3483 = vunpack.c.l.b16 %v3348
  %v3484 = vunpack.c.l.b16 %v3349
  %v3485 = vunpack.c.l.b16 %v3350
  %v3486 = vunpack.c.l.b16 %v3351
  %v3487 = vunpack.c.l.b16 %v3352
  %v3488 = vunpack.c.l.b16 %v3353
  %v3489 = vunpack.c.l.b16 %v3354
  %v3490 = vunpack.c.l.b16 %v3355
  %v3491 = vunpack.c.l.b16 %v3356
  %v3492 = vunpack.c.l.b16 %v3357
  %v3493 = vunpack.c.l.b16 %v3358
  %v3494 = vunpack.c.l.b16 %v3359
  %v3495 = vunpack.c.l.b16 %v3360
  %v3496 = vunpack.c.l.b16 %v3361
  %v3497 = vunpack.c.l.b16 %v3362
  %v3498 = vunpack.c.l.b16 %v3363
  %v3499 = vunpack.c.l.b16 %v3364
  %v3500 = vunpack.c.l.b16 %v3365
  %v3501 = vunpack.c.l.b16 %v3366
  %v3502 = vunpack.c.l.b16 %v3367
  %v3503 = vunpack.c.l.b16 %v3368
  %v3504 = vunpack.c.l.b16 %v3369
  %v3505 = vunpack.c.l.b16 %v3370
  %v3506 = vunpack.c.l.b16 %v3371
  %v3507 = vunpack.c.l.b16 %v3372
  %v3508 = vunpack.c.l.b16 %v3373
  %v3509 = vunpack.c.l.b16 %v3374
  %v3510 = vunpack.c.l.b16 %v3375
  %v3511 = vunpack.c.l.b16 %v3376
  %v3512 = vunpack.c.l.b16 %v3377
  %v3513 = vunpack.c.l.b16 %v3378
  %v3514 = vunpack.c.l.b16 %v3379
  %v3515 = vunpack.c.l.b16 %v3380
  %v3516 = vunpack.c.l.b16 %v3381
  %v3517 = vunpack.c.l.b16 %v3382
  %v3518 = vunpack.c.l.b16 %v3383
  %v3519 = vunpack.c.l.b16 %v3384
  %v3520 = vunpack.c.l.b16 %v3385
  %v3521 = vunpack.c.l.b16 %v3386
  %v3522 = vunpack.c.l.b16 %v3387
  %v3523 = vunpack.c.l.b16 %v3388
  %v3524 = vunpack.c.l.b16 %v3389
  %v3525 = vpack.c.b16 %v3462, %v3461
  %v3526 = vpack.c.b16 %v3464, %v3463
  %v3527 = vpack.c.b16 %v3466, %v3465
  %v3528 = vpack.c.b16 %v3468, %v3467
  %v3529 = vpack.c.b16 %v3470, %v3469
  %v3530 = vpack.c.b16 %v3472, %v3471
  %v3531 = vpack.c.b16 %v3474, %v3473
  %v3532 = vpack.c.b16 %v3476, %v3475
  %v3533 = vpack.c.b16 %v3478, %v3477
  %v3534 = vpack.c.b16 %v3480, %v3479
  %v3535 = vpack.c.b16 %v3482, %v3481
  %v3536 = vpack.c.b16 %v3484, %v3483
  %v3537 = vpack.c.b16 %v3486, %v3485
  %v3538 = vpack.c.b16 %v3488, %v3487
  %v3539 = vpack.c.b16 %v3490, %v3489
  %v3540 = vpack.c.b16 %v3492, %v3491
  %v3541 = vpack.c.b16 %v3494, %v3493
  %v3542 = vpack.c.b16 %v3496, %v3495
  %v3543 = vpack.c.b16 %v3498, %v3497
  %v3544 = vpack.c.b16 %v3500, %v3499
  %v3545 = vpack.c.b16 %v3502, %v3501
  %v3546 = vpack.c.b16 %v3504, %v3503
  %v3547 = vpack.c.b16 %v3506, %v3505
  %v3548 = vpack.c.b16 %v3508, %v3507
  %v3549 = vpack.c.b16 %v3510, %v3509
  %v3550 = vpack.c.b16 %v3512, %v3511
  %v3551 = vpack.c.b16 %v3514, %v3513
  %v3552 = vpack.c.b16 %v3516, %v3515
  %v3553 = vpack.c.b16 %v3518, %v3517
  %v3554 = vpack.c.b16 %v3520, %v3519
  %v3555 = vpack.c.b16 %v3522, %v3521
  %v3556 = vpack.c.b16 %v3524, %v3523
  %3589 = vmatprep.subr.bf16.mxu0 0
  %3590 = vmatpush1.bf16.msra.mxu0 %v3525
  %3591 = vmatprep.subr.bf16.mxu0 0
  %3592 = vmatpush1.bf16.msra.mxu0 %v3526
  %3593 = vmatprep.subr.bf16.mxu0 0
  %3594 = vmatpush1.bf16.msra.mxu0 %v3527
  %3595 = vmatprep.subr.bf16.mxu0 0
  %3596 = vmatpush1.bf16.msra.mxu0 %v3528
  %3597 = vmatprep.subr.bf16.mxu0 0
  %3598 = vmatpush1.bf16.msra.mxu0 %v3529
  %3599 = vmatprep.subr.bf16.mxu0 0
  %3600 = vmatpush1.bf16.msra.mxu0 %v3530
  %3601 = vmatprep.subr.bf16.mxu0 0
  %3602 = vmatpush1.bf16.msra.mxu0 %v3531
  %3603 = vmatprep.subr.bf16.mxu0 0
  %3604 = vmatpush1.bf16.msra.mxu0 %v3532
  %3605 = vmatprep.subr.bf16.mxu0 0
  %3606 = vmatpush1.bf16.msra.mxu0 %v3533
  %3607 = vmatprep.subr.bf16.mxu0 0
  %3608 = vmatpush1.bf16.msra.mxu0 %v3534
  %3609 = vmatprep.subr.bf16.mxu0 0
  %3610 = vmatpush1.bf16.msra.mxu0 %v3535
  %3611 = vmatprep.subr.bf16.mxu0 0
  %3612 = vmatpush1.bf16.msra.mxu0 %v3536
  %3613 = vmatprep.subr.bf16.mxu0 0
  %3614 = vmatpush1.bf16.msra.mxu0 %v3537
  %3615 = vmatprep.subr.bf16.mxu0 0
  %3616 = vmatpush1.bf16.msra.mxu0 %v3538
  %3617 = vmatprep.subr.bf16.mxu0 0
  %3618 = vmatpush1.bf16.msra.mxu0 %v3539
  %3619 = vmatprep.subr.bf16.mxu0 0
  %3620 = vmatpush1.bf16.msra.mxu0 %v3540
  %3621 = vmatprep.mubr.bf16.mxu0 %v3284
  %3622 = vmatmul.mubr.bf16.gmra.mrb[0].mxu0 %v3268
  %v3623 = vpop.f32.mrb[0].mxu0
  %v3624 = vadd.f32 %v3395, %v3623
  %v3625 = vpop.f32.mrb[0].mxu0
  %v3626 = vpop.f32.mrb[0].mxu0
  %v3627 = vpop.f32.mrb[0].mxu0
  %3628 = vdwg.mxu0
  %3629 = vmatprep.subr.bf16.mxu0 0
  %3630 = vmatpush1.bf16.msra.mxu0 %v3541
  %3631 = vmatprep.subr.bf16.mxu0 0
  %3632 = vmatpush1.bf16.msra.mxu0 %v3542
  %3633 = vmatprep.subr.bf16.mxu0 0
  %3634 = vmatpush1.bf16.msra.mxu0 %v3543
  %3635 = vmatprep.subr.bf16.mxu0 0
  %3636 = vmatpush1.bf16.msra.mxu0 %v3544
  %3637 = vmatprep.subr.bf16.mxu0 0
  %3638 = vmatpush1.bf16.msra.mxu0 %v3545
  %3639 = vmatprep.subr.bf16.mxu0 0
  %3640 = vmatpush1.bf16.msra.mxu0 %v3546
  %3641 = vmatprep.subr.bf16.mxu0 0
  %3642 = vmatpush1.bf16.msra.mxu0 %v3547
  %3643 = vmatprep.subr.bf16.mxu0 0
  %3644 = vmatpush1.bf16.msra.mxu0 %v3548
  %3645 = vmatprep.subr.bf16.mxu0 0
  %3646 = vmatpush1.bf16.msra.mxu0 %v3549
  %3647 = vmatprep.subr.bf16.mxu0 0
  %3648 = vmatpush1.bf16.msra.mxu0 %v3550
  %3649 = vmatprep.subr.bf16.mxu0 0
  %3650 = vmatpush1.bf16.msra.mxu0 %v3551
  %3651 = vmatprep.subr.bf16.mxu0 0
  %3652 = vmatpush1.bf16.msra.mxu0 %v3552
  %3653 = vmatprep.subr.bf16.mxu0 0
  %3654 = vmatpush1.bf16.msra.mxu0 %v3553
  %3655 = vmatprep.subr.bf16.mxu0 0
  %3656 = vmatpush1.bf16.msra.mxu0 %v3554
  %3657 = vmatprep.subr.bf16.mxu0 0
  %3658 = vmatpush1.bf16.msra.mxu0 %v3555
  %3659 = vmatprep.subr.bf16.mxu0 0
  %3660 = vmatpush1.bf16.msra.mxu0 %v3556
  %3661 = vmatprep.mubr.bf16.mxu0 %v3324
  %3662 = vmatmul.mubr.bf16.gmra.mrb[0].mxu0 %v3308
  %v3663 = vpop.f32.mrb[0].mxu0
  %v3664 = vadd.f32 %v3624, %v3663
  %v3665 = vpop.f32.mrb[0].mxu0
  %v3666 = vpop.f32.mrb[0].mxu0
  %v3667 = vpop.f32.mrb[0].mxu0
  %3668 = vdwg.mxu0
  %v3669 = vmax.f32 %v3664, 0.0
  %v3670 = vpack.c.bf16 %v3669, %v3669
  %v3671 = vld [vmem:[%s7] sm:$0xf]
  %v3672 = vld [vmem:[%s7 + $0x4] sm:$0xf]
  %v3673 = vld [vmem:[%s7 + $0x8] sm:$0xf]
  %v3674 = vld [vmem:[%s7 + $0xc] sm:$0xf]
  %v3675 = vld [vmem:[%s7 + $0x10] sm:$0xf]
  %v3676 = vld [vmem:[%s7 + $0x14] sm:$0xf]
  %v3677 = vld [vmem:[%s7 + $0x18] sm:$0xf]
  %v3678 = vld [vmem:[%s7 + $0x1c] sm:$0xf]
  %v3679 = vld [vmem:[%s7 + $0x20] sm:$0xf]
  %v3680 = vld [vmem:[%s7 + $0x24] sm:$0xf]
  %v3681 = vld [vmem:[%s7 + $0x28] sm:$0xf]
  %v3682 = vld [vmem:[%s7 + $0x2c] sm:$0xf]
  %v3683 = vld [vmem:[%s7 + $0x30] sm:$0xf]
  %v3684 = vld [vmem:[%s7 + $0x34] sm:$0xf]
  %v3685 = vld [vmem:[%s7 + $0x38] sm:$0xf]
  %v3686 = vld [vmem:[%s7 + $0x3c] sm:$0xf]
  %v3687 = vld [vmem:[%s8] sm:$0x1]
  %v3689 = vlaneseq
  %v3690 = vshrl.u32 %v3689, 7
  %v3691 = vsub.s32 0, %v3690
  %v3692 = vrot.slane %v3687, %v3691
  %v3710 = vunpack.c.l.b16 %v3671
  %v3711 = vunpack.c.l.b16 %v3672
  %v3712 = vunpack.c.l.b16 %v3673
  %v3713 = vunpack.c.l.b16 %v3674
  %v3714 = vunpack.c.l.b16 %v3675
  %v3715 = vunpack.c.l.b16 %v3676
  %v3716 = vunpack.c.l.b16 %v3677
  %v3717 = vunpack.c.l.b16 %v3678
  %v3718 = vunpack.c.l.b16 %v3679
  %v3719 = vunpack.c.l.b16 %v3680
  %v3720 = vunpack.c.l.b16 %v3681
  %v3721 = vunpack.c.l.b16 %v3682
  %v3722 = vunpack.c.l.b16 %v3683
  %v3723 = vunpack.c.l.b16 %v3684
  %v3724 = vunpack.c.l.b16 %v3685
  %v3725 = vunpack.c.l.b16 %v3686
  %v3726 = vpack.c.b16 %v3711, %v3710
  %v3727 = vpack.c.b16 %v3713, %v3712
  %v3728 = vpack.c.b16 %v3715, %v3714
  %v3729 = vpack.c.b16 %v3717, %v3716
  %v3730 = vpack.c.b16 %v3719, %v3718
  %v3731 = vpack.c.b16 %v3721, %v3720
  %v3732 = vpack.c.b16 %v3723, %v3722
  %v3733 = vpack.c.b16 %v3725, %v3724
  %3742 = vmatprep.subr.bf16.mxu0 0
  %3743 = vmatpush1.bf16.msra.mxu0 %v3726
  %3744 = vmatprep.subr.bf16.mxu0 0
  %3745 = vmatpush1.bf16.msra.mxu0 %v3727
  %3746 = vmatprep.subr.bf16.mxu0 0
  %3747 = vmatpush1.bf16.msra.mxu0 %v3728
  %3748 = vmatprep.subr.bf16.mxu0 0
  %3749 = vmatpush1.bf16.msra.mxu0 %v3729
  %3750 = vmatprep.subr.bf16.mxu0 0
  %3751 = vmatpush1.bf16.msra.mxu0 %v3730
  %3752 = vmatprep.subr.bf16.mxu0 0
  %3753 = vmatpush1.bf16.msra.mxu0 %v3731
  %3754 = vmatprep.subr.bf16.mxu0 0
  %3755 = vmatpush1.bf16.msra.mxu0 %v3732
  %3756 = vmatprep.subr.bf16.mxu0 0
  %3757 = vmatpush1.bf16.msra.mxu0 %v3733
  %3758 = vmatprep.subr.bf16.mxu0 0
  %3759 = vmatpush1.bf16.msra.mxu0 0
  %3760 = vmatprep.subr.bf16.mxu0 0
  %3761 = vmatpush1.bf16.msra.mxu0 0
  %3762 = vmatprep.subr.bf16.mxu0 0
  %3763 = vmatpush1.bf16.msra.mxu0 0
  %3764 = vmatprep.subr.bf16.mxu0 0
  %3765 = vmatpush1.bf16.msra.mxu0 0
  %3766 = vmatprep.subr.bf16.mxu0 0
  %3767 = vmatpush1.bf16.msra.mxu0 0
  %3768 = vmatprep.subr.bf16.mxu0 0
  %3769 = vmatpush1.bf16.msra.mxu0 0
  %3770 = vmatprep.subr.bf16.mxu0 0
  %3771 = vmatpush1.bf16.msra.mxu0 0
  %3772 = vmatprep.subr.bf16.mxu0 0
  %3773 = vmatpush1.bf16.msra.mxu0 0
  %3774 = vmatprep.mubr.bf16.mxu0 0
  %3775 = vmatmul.mubr.bf16.gmra.mrb[0].mxu0 %v3670
  %v3776 = vpop.f32.mrb[0].mxu0
  %v3777 = vadd.f32 %v3692, %v3776
  %v3778 = vpop.f32.mrb[0].mxu0
  %v3779 = vpop.f32.mrb[0].mxu0
  %v3780 = vpop.f32.mrb[0].mxu0
  %3781 = vdwg.mxu0
  %v3782 = vmax.f32 %v3777, 0.0
  %v3783 = vpack.c.bf16 %v3782, %v3782
  %v3784 = vld [vmem:[%s9] sm:$0xf]
  %v3785 = vld [vmem:[%s9 + $0x4] sm:$0xf]
  %v3786 = vld [vmem:[%s9 + $0x8] sm:$0xf]
  %v3787 = vld [vmem:[%s9 + $0xc] sm:$0xf]
  %v3788 = vld [vmem:[%s9 + $0x10] sm:$0xf]
  %v3789 = vld [vmem:[%s9 + $0x14] sm:$0xf]
  %v3790 = vld [vmem:[%s9 + $0x18] sm:$0xf]
  %v3791 = vld [vmem:[%s9 + $0x1c] sm:$0xf]
  %v3792 = vld [vmem:[%s9 + $0x20] sm:$0xf]
  %v3793 = vld [vmem:[%s9 + $0x24] sm:$0xf]
  %v3794 = vld [vmem:[%s9 + $0x28] sm:$0xf]
  %v3795 = vld [vmem:[%s9 + $0x2c] sm:$0xf]
  %v3796 = vld [vmem:[%s9 + $0x30] sm:$0xf]
  %v3797 = vld [vmem:[%s9 + $0x34] sm:$0xf]
  %v3798 = vld [vmem:[%s9 + $0x38] sm:$0xf]
  %v3799 = vld [vmem:[%s9 + $0x3c] sm:$0xf]
  %v3800 = vld [vmem:[%s10] sm:$0x1]
  %v3802 = vlaneseq
  %v3803 = vshrl.u32 %v3802, 7
  %v3804 = vsub.s32 0, %v3803
  %v3805 = vrot.slane %v3800, %v3804
  %v3823 = vunpack.c.l.b16 %v3784
  %v3824 = vunpack.c.l.b16 %v3785
  %v3825 = vunpack.c.l.b16 %v3786
  %v3826 = vunpack.c.l.b16 %v3787
  %v3827 = vunpack.c.l.b16 %v3788
  %v3828 = vunpack.c.l.b16 %v3789
  %v3829 = vunpack.c.l.b16 %v3790
  %v3830 = vunpack.c.l.b16 %v3791
  %v3831 = vunpack.c.l.b16 %v3792
  %v3832 = vunpack.c.l.b16 %v3793
  %v3833 = vunpack.c.l.b16 %v3794
  %v3834 = vunpack.c.l.b16 %v3795
  %v3835 = vunpack.c.l.b16 %v3796
  %v3836 = vunpack.c.l.b16 %v3797
  %v3837 = vunpack.c.l.b16 %v3798
  %v3838 = vunpack.c.l.b16 %v3799
  %v3839 = vpack.c.b16 %v3824, %v3823
  %v3840 = vpack.c.b16 %v3826, %v3825
  %v3841 = vpack.c.b16 %v3828, %v3827
  %v3842 = vpack.c.b16 %v3830, %v3829
  %v3843 = vpack.c.b16 %v3832, %v3831
  %v3844 = vpack.c.b16 %v3834, %v3833
  %v3845 = vpack.c.b16 %v3836, %v3835
  %v3846 = vpack.c.b16 %v3838, %v3837
  %3855 = vmatprep.subr.bf16.mxu0 0
  %3856 = vmatpush1.bf16.msra.mxu0 %v3839
  %3857 = vmatprep.subr.bf16.mxu0 0
  %3858 = vmatpush1.bf16.msra.mxu0 %v3840
  %3859 = vmatprep.subr.bf16.mxu0 0
  %3860 = vmatpush1.bf16.msra.mxu0 %v3841
  %3861 = vmatprep.subr.bf16.mxu0 0
  %3862 = vmatpush1.bf16.msra.mxu0 %v3842
  %3863 = vmatprep.subr.bf16.mxu0 0
  %3864 = vmatpush1.bf16.msra.mxu0 %v3843
  %3865 = vmatprep.subr.bf16.mxu0 0
  %3866 = vmatpush1.bf16.msra.mxu0 %v3844
  %3867 = vmatprep.subr.bf16.mxu0 0
  %3868 = vmatpush1.bf16.msra.mxu0 %v3845
  %3869 = vmatprep.subr.bf16.mxu0 0
  %3870 = vmatpush1.bf16.msra.mxu0 %v3846
  %3871 = vmatprep.subr.bf16.mxu0 0
  %3872 = vmatpush1.bf16.msra.mxu0 0
  %3873 = vmatprep.subr.bf16.mxu0 0
  %3874 = vmatpush1.bf16.msra.mxu0 0
  %3875 = vmatprep.subr.bf16.mxu0 0
  %3876 = vmatpush1.bf16.msra.mxu0 0
  %3877 = vmatprep.subr.bf16.mxu0 0
  %3878 = vmatpush1.bf16.msra.mxu0 0
  %3879 = vmatprep.subr.bf16.mxu0 0
  %3880 = vmatpush1.bf16.msra.mxu0 0
  %3881 = vmatprep.subr.bf16.mxu0 0
  %3882 = vmatpush1.bf16.msra.mxu0 0
  %3883 = vmatprep.subr.bf16.mxu0 0
  %3884 = vmatpush1.bf16.msra.mxu0 0
  %3885 = vmatprep.subr.bf16.mxu0 0
  %3886 = vmatpush1.bf16.msra.mxu0 0
  %3887 = vmatprep.mubr.bf16.mxu0 0
  %3888 = vmatmul.mubr.bf16.gmra.mrb[0].mxu0 %v3783
  %v3889 = vpop.f32.mrb[0].mxu0
  %v3890 = vadd.f32 %v3805, %v3889
  %v3891 = vpop.f32.mrb[0].mxu0
  %v3892 = vpop.f32.mrb[0].mxu0
  %v3893 = vpop.f32.mrb[0].mxu0
  %3894 = vdwg.mxu0
  %v3895 = vlaneseq
  %v3896 = vand.u32 %v3895, 127
  %vm3897 = vcmp.lt.s32.totalorder %v3896, 10
  %v3898 = vsel %vm3897, %v3890, -1e+30
  %3899 = vmax.xlane.f32.xlu0 %v3898
  %v3900 = vpop.xlane.xlu0 %3899
  %v3901 = vsub.f32 %v3890, %v3900
  %v3902 = vmul.f32 %v3901, 1.442695
  %v3903 = vpow.pop %v3902
  %v3904 = vsel %vm3897, %v3903, 0.0
  %3905 = vadd.xlane.f32.xlu0 %v3904
  %v3906 = vpop.xlane.xlu0 %3905
  %v3907 = vlog2.pop %v3906
  %v3908 = vmul.f32 %v3907, 0.6931472
  %v3909 = vsub.f32 %v3901, %v3908
  %3910 = vst [vmem:[%s11] sm:$0xff] %v3909
  // Predicated region
  $region46: #{_lambda_.1} parent=0 // pred_check
    _
  $region47: #{_lambda_.1} parent=0 // pred_check_branch
    %3912 = sbr.rel (0) target = $region49
  $region48: #{_lambda_.1} parent=0 // pred_region
    _
  $region49: #{_lambda_.1} parent=0 // pred_fallthru
    _
  // Predicated region
  $region50: #{_lambda_.1} parent=0 // pred_check
    _
  $region51: #{_lambda_.1} parent=0 // pred_check_branch
    %3914 = sbr.rel (0) target = $region53
  $region52: #{_lambda_.1} parent=0 // pred_region
    _
  $region53: #{_lambda_.1} parent=0 // pred_fallthru
    _

</llo_original>
